<compile_context>
chip_gen: v5e
topology: v5e:2x2
jax: 0.10.0
libtpu: 0.0.40
codegen_flags: <defaults>
</compile_context>

<pallas_src>
import functools
import math

import jax
import jax.numpy as jnp
from jax import lax
from jax.experimental import pallas as pl
from jax.experimental.pallas import tpu as pltpu


def _layer_norm(x, gamma, beta, eps):
    # PyTorch LayerNorm: biased variance over the last dim (f32 math).
    mean = jnp.mean(x, axis=-1, keepdims=True)
    xc = x - mean
    var = jnp.mean(xc * xc, axis=-1, keepdims=True)
    inv = lax.rsqrt(var + eps)                       # EUP
    return xc * inv * gamma + beta


def _gelu_exact(x):
    # nn.GELU() default: exact erf-based GELU (f32 math).
    return 0.5 * x * (1.0 + lax.erf(x * (1.0 / math.sqrt(2.0))))


def bert_layer_kernel(
    hs_full_ref, hs_tile_ref, mask_ref,
    wq_ref, bq_ref, wk_ref, bk_ref, wv_ref, bv_ref,
    wo_ref, bo_ref, g1_ref, be1_ref,
    wi_ref, bi_ref, w2_ref, b2_ref, g2_ref, be2_ref,
    out_ref,
    k_scratch, v_scratch,
    *, hidden_size, eps,
):
    # --- K / V: computed once per batch row (q tile 0), cached in VMEM scratch ---
    @pl.when(pl.program_id(1) == 0)
    def _():
        x_full = hs_full_ref[0]                      # (S, H) bf16
        k = jnp.dot(x_full, wk_ref[...],
                    preferred_element_type=jnp.float32) + bk_ref[...]
        v = jnp.dot(x_full, wv_ref[...],
                    preferred_element_type=jnp.float32) + bv_ref[...]
        k_scratch[...] = k.astype(jnp.bfloat16)
        v_scratch[...] = v.astype(jnp.bfloat16)

    x_q = hs_tile_ref[0]                             # (TQ, H) f32 — queries + residual
    mask = mask_ref[0]                               # (1, S) or (TQ, S) — broadcasts
    x_q_bf = x_q.astype(jnp.bfloat16)

    # Query projection; fold 1/sqrt(H) into q ((TQ,H) pass, not (TQ,S)).
    q = (jnp.dot(x_q_bf, wq_ref[...], preferred_element_type=jnp.float32)
         + bq_ref[...]) * (1.0 / math.sqrt(hidden_size))

    # scores = q @ k.T without an explicit transpose (contract last dims).
    scores = lax.dot_general(
        q.astype(jnp.bfloat16), k_scratch[...],
        dimension_numbers=(((1,), (1,)), ((), ())),
        preferred_element_type=jnp.float32)
    scores = scores * mask                           # multiplicative mask, per reference

    # softmax (f32 elementwise; denominator reciprocal on the EUP)
    scores_max = jnp.max(scores, axis=-1, keepdims=True)
    p = jnp.exp(scores - scores_max)
    probs = p * pl.reciprocal(jnp.sum(p, axis=-1, keepdims=True), approx=True)
    # TODO(synk): attention-probs dropout omitted (inference / identity).

    ctx = jnp.dot(probs.astype(jnp.bfloat16), v_scratch[...],
                  preferred_element_type=jnp.float32)

    # --- BertSelfOutput: dense + residual(hidden_states) + LayerNorm ---
    so = jnp.dot(ctx.astype(jnp.bfloat16), wo_ref[...],
                 preferred_element_type=jnp.float32) + bo_ref[...]
    attn_out = _layer_norm(so + x_q, g1_ref[...], be1_ref[...], eps)

    # --- BertIntermediate: dense + exact GELU ---
    inter = jnp.dot(attn_out.astype(jnp.bfloat16), wi_ref[...],
                    preferred_element_type=jnp.float32) + bi_ref[...]
    inter = _gelu_exact(inter)

    # --- BertOutput: dense + residual(attention_output) + LayerNorm ---
    o = jnp.dot(inter.astype(jnp.bfloat16), w2_ref[...],
                preferred_element_type=jnp.float32) + b2_ref[...]
    out_ref[0] = _layer_norm(o + attn_out, g2_ref[...], be2_ref[...], eps)


def _vmem_bytes_estimate(S, H, I, TQ, mask_rows, single_buffer_weights):
    """Rough resident-VMEM estimate (bytes) used for TQ selection / vmem_limit."""
    bf, f32 = 2, 4
    weights = (4 * H * H + 2 * H * I) * bf + (9 * H + I) * f32
    weights *= 1 if single_buffer_weights else 2
    # double-buffered activation blocks: hs bf16 full, hs f32 tile, mask, out
    acts = 2 * (S * H * bf + TQ * H * f32 + mask_rows * S * f32 + TQ * H * f32)
    scratch = 2 * S * H * bf                         # cached K / V
    live = (2 * TQ * S + 2 * TQ * I + 6 * TQ * H + 2 * S * H) * f32
    return weights + acts + scratch + live + (2 << 20)


def bert_layer_forward(hidden_states, attention_mask, params, *, eps=1e-12, q_tile=None):
    B, S, H = hidden_states.shape
    I = params["wi"].shape[1]

    # Per-generation VMEM budget (v7x: 64 MiB/TC, v5e/v6e: 128 MiB).
    try:
        vmem_phys = int(pltpu.get_tpu_info().vmem_capacity_bytes)
    except Exception:
        vmem_phys = 64 * 2 ** 20                     # conservative (v7x)
    vmem_cap = (vmem_phys * 3) // 4                  # headroom for Mosaic scratch

    # Attention mask: prefer a [B, S] / [B, 1, S] key mask (broadcast in-kernel);
    # a full [B, S, S] mask is also accepted and tiled per query-row block.
    attention_mask = attention_mask.astype(jnp.float32)
    if attention_mask.ndim == 2:
        attention_mask = attention_mask[:, None, :]
    mask_rows = attention_mask.shape[1]              # 1 (key mask) or S (full mask)

    # Query tile: prefer TQ = S (single K/V pass, no grid overhead); shrink only
    # if the VMEM estimate exceeds the per-chip budget (e.g. long S on v7x).
    if q_tile is None:
        candidates = [S] + [t for t in (1024, 512, 256, 128) if t < S and S % t == 0]
        TQ = candidates[-1]
        for t in candidates:
            mr = mask_rows if mask_rows == 1 else t
            if _vmem_bytes_estimate(S, H, I, t, mr, True) <= vmem_cap:
                TQ = t
                break
    else:
        TQ = min(q_tile, S)
    assert S % TQ == 0, "sequence length must be divisible by the query tile"
    n_q = S // TQ

    # bf16 weights + bf16 full-sequence K/V source; residual path stays f32.
    hs_bf16 = hidden_states.astype(jnp.bfloat16)
    bfw = lambda w: w.astype(jnp.bfloat16)
    wq, wk, wv, wo, wi, w2 = (bfw(params["wq"]), bfw(params["wk"]), bfw(params["wv"]),
                              bfw(params["wo"]), bfw(params["wi"]), bfw(params["w2"]))

    kernel = functools.partial(bert_layer_kernel, hidden_size=H, eps=eps)

    # Advisory cost estimate (no K/V recompute any more).
    flops = int(2 * B * S * (4 * H * H + 2 * S * H + 2 * H * I))
    transcendentals = int(B * S * (S + I + 5))       # exp + erf + rsqrt/recip
    bytes_accessed = int(B * S * H * (2 + 4 + 4) + attention_mask.size * 4
                         + (4 * H * H + 2 * H * I) * 2 + (9 * H + I) * 4)

    operands = (
        hs_bf16, hidden_states, attention_mask,
        wq, params["bq"], wk, params["bk"], wv, params["bv"],
        wo, params["bo"], params["g1"], params["be1"],
        wi, params["bi"], w2, params["b2"], params["g2"], params["be2"],
    )

    def build(single_buffer_weights):
        # Weight / bias / LN-param blocks have a constant index_map, so
        # double-buffering them buys nothing: single-buffer to halve their VMEM.
        wmode = pl.Buffered(1) if single_buffer_weights else None

        def const2d(shape):
            return pl.BlockSpec(shape, lambda b, q: (0, 0), pipeline_mode=wmode)

        if mask_rows == 1:
            m_spec = pl.BlockSpec((1, 1, S), lambda b, q: (b, 0, 0))
        else:
            m_spec = pl.BlockSpec((1, TQ, S), lambda b, q: (b, q, 0))

        in_specs = [
            pl.BlockSpec((1, S, H), lambda b, q: (b, 0, 0)),    # bf16 full rows (K/V src)
            pl.BlockSpec((1, TQ, H), lambda b, q: (b, q, 0)),   # f32 query rows / residual
            m_spec,
            const2d((H, H)), const2d((1, H)),                   # Wq, bq
            const2d((H, H)), const2d((1, H)),                   # Wk, bk
            const2d((H, H)), const2d((1, H)),                   # Wv, bv
            const2d((H, H)), const2d((1, H)),                   # Wo, bo
            const2d((1, H)), const2d((1, H)),                   # LN1 gamma, beta
            const2d((H, I)), const2d((1, I)),                   # Wi, bi
            const2d((I, H)), const2d((1, H)),                   # W2, b2
            const2d((1, H)), const2d((1, H)),                   # LN2 gamma, beta
        ]

        mr = mask_rows if mask_rows == 1 else TQ
        vmem_needed = _vmem_bytes_estimate(S, H, I, TQ, mr, single_buffer_weights)
        vmem_limit = int(min(vmem_cap, max(vmem_needed, 16 * 2 ** 20)))

        return pl.pallas_call(
            kernel,
            out_shape=jax.ShapeDtypeStruct((B, S, H), jnp.float32),
            grid_spec=pltpu.PrefetchScalarGridSpec(
                num_scalar_prefetch=0,
                grid=(B, n_q),
                in_specs=in_specs,
                out_specs=pl.BlockSpec((1, TQ, H), lambda b, q: (b, q, 0)),
                scratch_shapes=[pltpu.VMEM((S, H), jnp.bfloat16),   # cached K
                                pltpu.VMEM((S, H), jnp.bfloat16)],  # cached V
            ),
            compiler_params=pltpu.CompilerParams(
                # q axis must be sequential ("arbitrary") so the q==0 step fills
                # the K/V scratch before later tiles of the same batch row.
                dimension_semantics=("parallel", "arbitrary"),
                vmem_limit_bytes=vmem_limit,
            ),
            cost_estimate=pl.CostEstimate(
                flops=flops,
                transcendentals=transcendentals,
                bytes_accessed=bytes_accessed),
        )

    try:
        return build(single_buffer_weights=True)(*operands)
    except Exception:
        # Fallback if this JAX build rejects pipeline_mode=pl.Buffered(1).
        return build(single_buffer_weights=False)(*operands)


def _reference_forward(hs, key_mask, p, eps=1e-12):
    # Pure-JAX f32 reference of the PyTorch forward (mask is multiplicative).
    def ln(x, g, b):
        m = jnp.mean(x, -1, keepdims=True)
        v = jnp.mean((x - m) ** 2, -1, keepdims=True)
        return (x - m) / jnp.sqrt(v + eps) * g + b

    H = hs.shape[-1]
    q = hs @ p["wq"] + p["bq"]
    k = hs @ p["wk"] + p["bk"]
    v = hs @ p["wv"] + p["bv"]
    s = (q @ jnp.swapaxes(k, -1, -2)) / math.sqrt(H)
    s = s * key_mask[:, None, :]
    a = jax.nn.softmax(s, axis=-1)
    ctx = a @ v
    attn = ln(ctx @ p["wo"] + p["bo"] + hs, p["g1"], p["be1"])
    inter = jax.nn.gelu(attn @ p["wi"] + p["bi"], approximate=False)
    return ln(inter @ p["w2"] + p["b2"] + attn, p["g2"], p["be2"])


if __name__ == "__main__":
    B, S, H = 2, 8, 32
    I = 4 * H

    key = jax.random.PRNGKey(0)
    keys = jax.random.split(key, 12)

    def w(k, shape):
        return jax.random.normal(k, shape, jnp.float32) * 0.02

    params = {
        # Linear weights stored as (in_features, out_features) == W.T of PyTorch.
        "wq": w(keys[0], (H, H)), "bq": jnp.zeros((1, H), jnp.float32),
        "wk": w(keys[1], (H, H)), "bk": jnp.zeros((1, H), jnp.float32),
        "wv": w(keys[2], (H, H)), "bv": jnp.zeros((1, H), jnp.float32),
        "wo": w(keys[3], (H, H)), "bo": jnp.zeros((1, H), jnp.float32),
        "g1": jnp.ones((1, H), jnp.float32), "be1": jnp.zeros((1, H), jnp.float32),
        "wi": w(keys[4], (H, I)), "bi": jnp.zeros((1, I), jnp.float32),
        "w2": w(keys[5], (I, H)), "b2": jnp.zeros((1, H), jnp.float32),
        "g2": jnp.ones((1, H), jnp.float32), "be2": jnp.zeros((1, H), jnp.float32),
    }

    hidden_states = jax.random.normal(keys[6], (B, S, H), jnp.float32)
    # Multiplicative key mask (broadcast over query rows): 1 = attend, 0 = drop.
    key_mask = (jax.random.uniform(keys[7], (B, S)) > 0.2).astype(jnp.float32)

    out = bert_layer_forward(hidden_states, key_mask, params)
    out = jax.block_until_ready(out)

    ref = _reference_forward(hidden_states, key_mask, params)
    assert out.shape == (B, S, H)
    # bf16 matmul inputs (f32 accumulation) + approximate softmax reciprocal:
    # compare against the f32 reference with a correspondingly relaxed tolerance.
    assert jnp.allclose(out, ref, rtol=5e-2, atol=5e-2), "mismatch vs JAX reference"

    print("KERNEL_OK")
</pallas_src>

<mosaic_0001>
module attributes {stable_mosaic.version = 11 : i64} {
  func.func @bert_layer_kernel(%arg0: i32, %arg1: i32, %arg2: memref<1x8x32xbf16, #tpu.memory_space<vmem>>, %arg3: memref<1x8x32xf32, #tpu.memory_space<vmem>>, %arg4: memref<1x1x8xf32, #tpu.memory_space<vmem>>, %arg5: memref<32x32xbf16, #tpu.memory_space<vmem>>, %arg6: memref<1x32xf32, #tpu.memory_space<vmem>>, %arg7: memref<32x32xbf16, #tpu.memory_space<vmem>>, %arg8: memref<1x32xf32, #tpu.memory_space<vmem>>, %arg9: memref<32x32xbf16, #tpu.memory_space<vmem>>, %arg10: memref<1x32xf32, #tpu.memory_space<vmem>>, %arg11: memref<32x32xbf16, #tpu.memory_space<vmem>>, %arg12: memref<1x32xf32, #tpu.memory_space<vmem>>, %arg13: memref<1x32xf32, #tpu.memory_space<vmem>>, %arg14: memref<1x32xf32, #tpu.memory_space<vmem>>, %arg15: memref<32x128xbf16, #tpu.memory_space<vmem>>, %arg16: memref<1x128xf32, #tpu.memory_space<vmem>>, %arg17: memref<128x32xbf16, #tpu.memory_space<vmem>>, %arg18: memref<1x32xf32, #tpu.memory_space<vmem>>, %arg19: memref<1x32xf32, #tpu.memory_space<vmem>>, %arg20: memref<1x32xf32, #tpu.memory_space<vmem>>, %arg21: memref<1x8x32xf32, #tpu.memory_space<vmem>>, %arg22: memref<8x32xbf16, #tpu.memory_space<vmem>>, %arg23: memref<8x32xbf16, #tpu.memory_space<vmem>>) attributes {dimension_semantics = [#tpu.dimension_semantics<parallel>, #tpu.dimension_semantics<arbitrary>], iteration_bounds = array<i64: 2, 1>, scalar_prefetch = 0 : i64, scratch_operands = 2 : i64, tpu.core_type = #tpu.core_type<tc>, window_params = [{transform_indices = @transform_0, window_bounds = array<i64: 1, 8, 32>}, {transform_indices = @transform_1, window_bounds = array<i64: 1, 8, 32>}, {transform_indices = @transform_2, window_bounds = array<i64: 1, 1, 8>}, {pipeline_mode = #tpu.pipeline_mode<synchronous>, transform_indices = @transform_3, window_bounds = array<i64: 32, 32>}, {pipeline_mode = #tpu.pipeline_mode<synchronous>, transform_indices = @transform_4, window_bounds = array<i64: 1, 32>}, {pipeline_mode = #tpu.pipeline_mode<synchronous>, transform_indices = @transform_5, window_bounds = array<i64: 32, 32>}, {pipeline_mode = #tpu.pipeline_mode<synchronous>, transform_indices = @transform_6, window_bounds = array<i64: 1, 32>}, {pipeline_mode = #tpu.pipeline_mode<synchronous>, transform_indices = @transform_7, window_bounds = array<i64: 32, 32>}, {pipeline_mode = #tpu.pipeline_mode<synchronous>, transform_indices = @transform_8, window_bounds = array<i64: 1, 32>}, {pipeline_mode = #tpu.pipeline_mode<synchronous>, transform_indices = @transform_9, window_bounds = array<i64: 32, 32>}, {pipeline_mode = #tpu.pipeline_mode<synchronous>, transform_indices = @transform_10, window_bounds = array<i64: 1, 32>}, {pipeline_mode = #tpu.pipeline_mode<synchronous>, transform_indices = @transform_11, window_bounds = array<i64: 1, 32>}, {pipeline_mode = #tpu.pipeline_mode<synchronous>, transform_indices = @transform_12, window_bounds = array<i64: 1, 32>}, {pipeline_mode = #tpu.pipeline_mode<synchronous>, transform_indices = @transform_13, window_bounds = array<i64: 32, 128>}, {pipeline_mode = #tpu.pipeline_mode<synchronous>, transform_indices = @transform_14, window_bounds = array<i64: 1, 128>}, {pipeline_mode = #tpu.pipeline_mode<synchronous>, transform_indices = @transform_15, window_bounds = array<i64: 128, 32>}, {pipeline_mode = #tpu.pipeline_mode<synchronous>, transform_indices = @transform_16, window_bounds = array<i64: 1, 32>}, {pipeline_mode = #tpu.pipeline_mode<synchronous>, transform_indices = @transform_17, window_bounds = array<i64: 1, 32>}, {pipeline_mode = #tpu.pipeline_mode<synchronous>, transform_indices = @transform_18, window_bounds = array<i64: 1, 32>}, {transform_indices = @transform_19, window_bounds = array<i64: 1, 8, 32>}]} {
    %c0_i32 = arith.constant 0 : i32
    %0 = arith.cmpi eq, %arg1, %c0_i32 : i32
    %1 = arith.extui %0 : i1 to i32
    %c0_i32_0 = arith.constant 0 : i32
    %2 = arith.cmpi ne, %1, %c0_i32_0 : i32
    scf.if %2 {
      %c0_58 = arith.constant 0 : index
      %c0_59 = arith.constant 0 : index
      %c0_60 = arith.constant 0 : index
      %108 = vector.load %arg2[%c0_58, %c0_59, %c0_60] : memref<1x8x32xbf16, #tpu.memory_space<vmem>>, vector<1x8x32xbf16>
      %109 = vector.shape_cast %108 : vector<1x8x32xbf16> to vector<8x32xbf16>
      %c0_61 = arith.constant 0 : index
      %c0_62 = arith.constant 0 : index
      %110 = vector.load %arg7[%c0_61, %c0_62] : memref<32x32xbf16, #tpu.memory_space<vmem>>, vector<32x32xbf16>
      %cst_63 = arith.constant dense<0.000000e+00> : vector<8x32xf32>
      %111 = tpu.matmul %109, %110, %cst_63 {dimension_numbers = #tpu.dot_dimension_numbers<[1], [0], [0], [1], [0, 0, 1, 1], [], []>} : vector<8x32xbf16>, vector<32x32xbf16>, vector<8x32xf32> -> vector<8x32xf32>
      %c0_64 = arith.constant 0 : index
      %c0_65 = arith.constant 0 : index
      %112 = vector.load %arg8[%c0_64, %c0_65] : memref<1x32xf32, #tpu.memory_space<vmem>>, vector<1x32xf32>
      %113 = vector.broadcast %112 : vector<1x32xf32> to vector<8x32xf32>
      %114 = arith.addf %111, %113 : vector<8x32xf32>
      %c0_66 = arith.constant 0 : index
      %c0_67 = arith.constant 0 : index
      %115 = vector.load %arg9[%c0_66, %c0_67] : memref<32x32xbf16, #tpu.memory_space<vmem>>, vector<32x32xbf16>
      %cst_68 = arith.constant dense<0.000000e+00> : vector<8x32xf32>
      %116 = tpu.matmul %109, %115, %cst_68 {dimension_numbers = #tpu.dot_dimension_numbers<[1], [0], [0], [1], [0, 0, 1, 1], [], []>} : vector<8x32xbf16>, vector<32x32xbf16>, vector<8x32xf32> -> vector<8x32xf32>
      %c0_69 = arith.constant 0 : index
      %c0_70 = arith.constant 0 : index
      %117 = vector.load %arg10[%c0_69, %c0_70] : memref<1x32xf32, #tpu.memory_space<vmem>>, vector<1x32xf32>
      %118 = vector.broadcast %117 : vector<1x32xf32> to vector<8x32xf32>
      %119 = arith.addf %116, %118 : vector<8x32xf32>
      %120 = arith.truncf %114 : vector<8x32xf32> to vector<8x32xbf16>
      %c0_71 = arith.constant 0 : index
      %c0_72 = arith.constant 0 : index
      %121 = vector.load %arg22[%c0_71, %c0_72] : memref<8x32xbf16, #tpu.memory_space<vmem>>, vector<8x32xbf16>
      tpu.vector_store %arg22[%c0_71, %c0_72], %120 {strides = array<i32>} : memref<8x32xbf16, #tpu.memory_space<vmem>>, vector<8x32xbf16>,
      %122 = arith.truncf %119 : vector<8x32xf32> to vector<8x32xbf16>
      %c0_73 = arith.constant 0 : index
      %c0_74 = arith.constant 0 : index
      %123 = vector.load %arg23[%c0_73, %c0_74] : memref<8x32xbf16, #tpu.memory_space<vmem>>, vector<8x32xbf16>
      tpu.vector_store %arg23[%c0_73, %c0_74], %122 {strides = array<i32>} : memref<8x32xbf16, #tpu.memory_space<vmem>>, vector<8x32xbf16>,
    } else {
    }
    %c0 = arith.constant 0 : index
    %c0_1 = arith.constant 0 : index
    %c0_2 = arith.constant 0 : index
    %3 = vector.load %arg3[%c0, %c0_1, %c0_2] : memref<1x8x32xf32, #tpu.memory_space<vmem>>, vector<1x8x32xf32>
    %4 = vector.shape_cast %3 : vector<1x8x32xf32> to vector<8x32xf32>
    %c0_3 = arith.constant 0 : index
    %c0_4 = arith.constant 0 : index
    %c0_5 = arith.constant 0 : index
    %5 = vector.load %arg4[%c0_3, %c0_4, %c0_5] : memref<1x1x8xf32, #tpu.memory_space<vmem>>, vector<1x1x8xf32>
    %6 = vector.shape_cast %5 : vector<1x1x8xf32> to vector<1x8xf32>
    %7 = arith.truncf %4 : vector<8x32xf32> to vector<8x32xbf16>
    %c0_6 = arith.constant 0 : index
    %c0_7 = arith.constant 0 : index
    %8 = vector.load %arg5[%c0_6, %c0_7] : memref<32x32xbf16, #tpu.memory_space<vmem>>, vector<32x32xbf16>
    %cst = arith.constant dense<0.000000e+00> : vector<8x32xf32>
    %9 = tpu.matmul %7, %8, %cst {dimension_numbers = #tpu.dot_dimension_numbers<[1], [0], [0], [1], [0, 0, 1, 1], [], []>} : vector<8x32xbf16>, vector<32x32xbf16>, vector<8x32xf32> -> vector<8x32xf32>
    %c0_8 = arith.constant 0 : index
    %c0_9 = arith.constant 0 : index
    %10 = vector.load %arg6[%c0_8, %c0_9] : memref<1x32xf32, #tpu.memory_space<vmem>>, vector<1x32xf32>
    %11 = vector.broadcast %10 : vector<1x32xf32> to vector<8x32xf32>
    %12 = arith.addf %9, %11 : vector<8x32xf32>
    %cst_10 = arith.constant 0.176776692 : f32
    %13 = vector.broadcast %cst_10 : f32 to vector<8x32xf32>
    %14 = arith.mulf %12, %13 : vector<8x32xf32>
    %15 = arith.truncf %14 : vector<8x32xf32> to vector<8x32xbf16>
    %c0_11 = arith.constant 0 : index
    %c0_12 = arith.constant 0 : index
    %16 = vector.load %arg22[%c0_11, %c0_12] : memref<8x32xbf16, #tpu.memory_space<vmem>>, vector<8x32xbf16>
    %cst_13 = arith.constant dense<0.000000e+00> : vector<8x8xf32>
    %17 = tpu.matmul %15, %16, %cst_13 {dimension_numbers = #tpu.dot_dimension_numbers<[1], [1], [0], [0], [0, 0, 1, 0], [], []>} : vector<8x32xbf16>, vector<8x32xbf16>, vector<8x8xf32> -> vector<8x8xf32>
    %18 = vector.broadcast %6 : vector<1x8xf32> to vector<8x8xf32>
    %19 = arith.mulf %17, %18 : vector<8x8xf32>
    %cst_14 = arith.constant dense<0xFF800000> : vector<8xf32>
    %20 = vector.multi_reduction <maximumf>, %19, %cst_14 [1] : vector<8x8xf32> to vector<8xf32>
    %21 = vector.shape_cast %20 : vector<8xf32> to vector<8x1xf32>
    %22 = vector.broadcast %21 : vector<8x1xf32> to vector<8x8xf32>
    %23 = arith.subf %19, %22 : vector<8x8xf32>
    %24 = math.exp %23 : vector<8x8xf32>
    %cst_15 = arith.constant dense<0.000000e+00> : vector<8xf32>
    %25 = vector.multi_reduction <add>, %24, %cst_15 [1] : vector<8x8xf32> to vector<8xf32>
    %26 = vector.shape_cast %25 : vector<8xf32> to vector<8x1xf32>
    %27 = tpu.reciprocal %26 {approx = true} : vector<8x1xf32> -> vector<8x1xf32>
    %28 = vector.broadcast %27 : vector<8x1xf32> to vector<8x8xf32>
    %29 = arith.mulf %24, %28 : vector<8x8xf32>
    %30 = arith.truncf %29 : vector<8x8xf32> to vector<8x8xbf16>
    %c0_16 = arith.constant 0 : index
    %c0_17 = arith.constant 0 : index
    %31 = vector.load %arg23[%c0_16, %c0_17] : memref<8x32xbf16, #tpu.memory_space<vmem>>, vector<8x32xbf16>
    %cst_18 = arith.constant dense<0.000000e+00> : vector<8x32xf32>
    %32 = tpu.matmul %30, %31, %cst_18 {dimension_numbers = #tpu.dot_dimension_numbers<[1], [0], [0], [1], [0, 0, 1, 1], [], []>} : vector<8x8xbf16>, vector<8x32xbf16>, vector<8x32xf32> -> vector<8x32xf32>
    %33 = arith.truncf %32 : vector<8x32xf32> to vector<8x32xbf16>
    %c0_19 = arith.constant 0 : index
    %c0_20 = arith.constant 0 : index
    %34 = vector.load %arg11[%c0_19, %c0_20] : memref<32x32xbf16, #tpu.memory_space<vmem>>, vector<32x32xbf16>
    %cst_21 = arith.constant dense<0.000000e+00> : vector<8x32xf32>
    %35 = tpu.matmul %33, %34, %cst_21 {dimension_numbers = #tpu.dot_dimension_numbers<[1], [0], [0], [1], [0, 0, 1, 1], [], []>} : vector<8x32xbf16>, vector<32x32xbf16>, vector<8x32xf32> -> vector<8x32xf32>
    %c0_22 = arith.constant 0 : index
    %c0_23 = arith.constant 0 : index
    %36 = vector.load %arg12[%c0_22, %c0_23] : memref<1x32xf32, #tpu.memory_space<vmem>>, vector<1x32xf32>
    %37 = vector.broadcast %36 : vector<1x32xf32> to vector<8x32xf32>
    %38 = arith.addf %35, %37 : vector<8x32xf32>
    %39 = arith.addf %38, %4 : vector<8x32xf32>
    %c0_24 = arith.constant 0 : index
    %c0_25 = arith.constant 0 : index
    %40 = vector.load %arg13[%c0_24, %c0_25] : memref<1x32xf32, #tpu.memory_space<vmem>>, vector<1x32xf32>
    %c0_26 = arith.constant 0 : index
    %c0_27 = arith.constant 0 : index
    %41 = vector.load %arg14[%c0_26, %c0_27] : memref<1x32xf32, #tpu.memory_space<vmem>>, vector<1x32xf32>
    %cst_28 = arith.constant dense<0.000000e+00> : vector<8xf32>
    %42 = vector.multi_reduction <add>, %39, %cst_28 [1] : vector<8x32xf32> to vector<8xf32>
    %43 = vector.shape_cast %42 : vector<8xf32> to vector<8x1xf32>
    %cst_29 = arith.constant 3.200000e+01 : f32
    %44 = vector.broadcast %cst_29 : f32 to vector<8x1xf32>
    %45 = arith.divf %43, %44 : vector<8x1xf32>
    %46 = vector.broadcast %45 : vector<8x1xf32> to vector<8x32xf32>
    %47 = arith.subf %39, %46 : vector<8x32xf32>
    %48 = arith.mulf %47, %47 : vector<8x32xf32>
    %cst_30 = arith.constant dense<0.000000e+00> : vector<8xf32>
    %49 = vector.multi_reduction <add>, %48, %cst_30 [1] : vector<8x32xf32> to vector<8xf32>
    %50 = vector.shape_cast %49 : vector<8xf32> to vector<8x1xf32>
    %cst_31 = arith.constant 3.200000e+01 : f32
    %51 = vector.broadcast %cst_31 : f32 to vector<8x1xf32>
    %52 = arith.divf %50, %51 : vector<8x1xf32>
    %cst_32 = arith.constant 9.99999996E-13 : f32
    %53 = vector.broadcast %cst_32 : f32 to vector<8x1xf32>
    %54 = arith.addf %52, %53 : vector<8x1xf32>
    %55 = math.rsqrt %54 : vector<8x1xf32>
    %56 = vector.broadcast %55 : vector<8x1xf32> to vector<8x32xf32>
    %57 = arith.mulf %47, %56 : vector<8x32xf32>
    %58 = vector.broadcast %40 : vector<1x32xf32> to vector<8x32xf32>
    %59 = arith.mulf %57, %58 : vector<8x32xf32>
    %60 = vector.broadcast %41 : vector<1x32xf32> to vector<8x32xf32>
    %61 = arith.addf %59, %60 : vector<8x32xf32>
    %62 = arith.truncf %61 : vector<8x32xf32> to vector<8x32xbf16>
    %c0_33 = arith.constant 0 : index
    %c0_34 = arith.constant 0 : index
    %63 = vector.load %arg15[%c0_33, %c0_34] : memref<32x128xbf16, #tpu.memory_space<vmem>>, vector<32x128xbf16>
    %cst_35 = arith.constant dense<0.000000e+00> : vector<8x128xf32>
    %64 = tpu.matmul %62, %63, %cst_35 {dimension_numbers = #tpu.dot_dimension_numbers<[1], [0], [0], [1], [0, 0, 1, 1], [], []>} : vector<8x32xbf16>, vector<32x128xbf16>, vector<8x128xf32> -> vector<8x128xf32>
    %c0_36 = arith.constant 0 : index
    %c0_37 = arith.constant 0 : index
    %65 = vector.load %arg16[%c0_36, %c0_37] : memref<1x128xf32, #tpu.memory_space<vmem>>, vector<1x128xf32>
    %66 = vector.broadcast %65 : vector<1x128xf32> to vector<8x128xf32>
    %67 = arith.addf %64, %66 : vector<8x128xf32>
    %cst_38 = arith.constant 5.000000e-01 : f32
    %68 = vector.broadcast %cst_38 : f32 to vector<8x128xf32>
    %69 = arith.mulf %68, %67 : vector<8x128xf32>
    %cst_39 = arith.constant 0.707106769 : f32
    %70 = vector.broadcast %cst_39 : f32 to vector<8x128xf32>
    %71 = arith.mulf %67, %70 : vector<8x128xf32>
    %72 = math.erf %71 : vector<8x128xf32>
    %cst_40 = arith.constant 1.000000e+00 : f32
    %73 = vector.broadcast %cst_40 : f32 to vector<8x128xf32>
    %74 = arith.addf %73, %72 : vector<8x128xf32>
    %75 = arith.mulf %69, %74 : vector<8x128xf32>
    %76 = arith.truncf %75 : vector<8x128xf32> to vector<8x128xbf16>
    %c0_41 = arith.constant 0 : index
    %c0_42 = arith.constant 0 : index
    %77 = vector.load %arg17[%c0_41, %c0_42] : memref<128x32xbf16, #tpu.memory_space<vmem>>, vector<128x32xbf16>
    %cst_43 = arith.constant dense<0.000000e+00> : vector<8x32xf32>
    %78 = tpu.matmul %76, %77, %cst_43 {dimension_numbers = #tpu.dot_dimension_numbers<[1], [0], [0], [1], [0, 0, 1, 1], [], []>} : vector<8x128xbf16>, vector<128x32xbf16>, vector<8x32xf32> -> vector<8x32xf32>
    %c0_44 = arith.constant 0 : index
    %c0_45 = arith.constant 0 : index
    %79 = vector.load %arg18[%c0_44, %c0_45] : memref<1x32xf32, #tpu.memory_space<vmem>>, vector<1x32xf32>
    %80 = vector.broadcast %79 : vector<1x32xf32> to vector<8x32xf32>
    %81 = arith.addf %78, %80 : vector<8x32xf32>
    %82 = arith.addf %81, %61 : vector<8x32xf32>
    %c0_46 = arith.constant 0 : index
    %c0_47 = arith.constant 0 : index
    %83 = vector.load %arg19[%c0_46, %c0_47] : memref<1x32xf32, #tpu.memory_space<vmem>>, vector<1x32xf32>
    %c0_48 = arith.constant 0 : index
    %c0_49 = arith.constant 0 : index
    %84 = vector.load %arg20[%c0_48, %c0_49] : memref<1x32xf32, #tpu.memory_space<vmem>>, vector<1x32xf32>
    %cst_50 = arith.constant dense<0.000000e+00> : vector<8xf32>
    %85 = vector.multi_reduction <add>, %82, %cst_50 [1] : vector<8x32xf32> to vector<8xf32>
    %86 = vector.shape_cast %85 : vector<8xf32> to vector<8x1xf32>
    %cst_51 = arith.constant 3.200000e+01 : f32
    %87 = vector.broadcast %cst_51 : f32 to vector<8x1xf32>
    %88 = arith.divf %86, %87 : vector<8x1xf32>
    %89 = vector.broadcast %88 : vector<8x1xf32> to vector<8x32xf32>
    %90 = arith.subf %82, %89 : vector<8x32xf32>
    %91 = arith.mulf %90, %90 : vector<8x32xf32>
    %cst_52 = arith.constant dense<0.000000e+00> : vector<8xf32>
    %92 = vector.multi_reduction <add>, %91, %cst_52 [1] : vector<8x32xf32> to vector<8xf32>
    %93 = vector.shape_cast %92 : vector<8xf32> to vector<8x1xf32>
    %cst_53 = arith.constant 3.200000e+01 : f32
    %94 = vector.broadcast %cst_53 : f32 to vector<8x1xf32>
    %95 = arith.divf %93, %94 : vector<8x1xf32>
    %cst_54 = arith.constant 9.99999996E-13 : f32
    %96 = vector.broadcast %cst_54 : f32 to vector<8x1xf32>
    %97 = arith.addf %95, %96 : vector<8x1xf32>
    %98 = math.rsqrt %97 : vector<8x1xf32>
    %99 = vector.broadcast %98 : vector<8x1xf32> to vector<8x32xf32>
    %100 = arith.mulf %90, %99 : vector<8x32xf32>
    %101 = vector.broadcast %83 : vector<1x32xf32> to vector<8x32xf32>
    %102 = arith.mulf %100, %101 : vector<8x32xf32>
    %103 = vector.broadcast %84 : vector<1x32xf32> to vector<8x32xf32>
    %104 = arith.addf %102, %103 : vector<8x32xf32>
    %c0_55 = arith.constant 0 : index
    %c0_56 = arith.constant 0 : index
    %c0_57 = arith.constant 0 : index
    %105 = vector.load %arg21[%c0_55, %c0_56, %c0_57] : memref<1x8x32xf32, #tpu.memory_space<vmem>>, vector<1x8x32xf32>
    %106 = vector.shape_cast %105 : vector<1x8x32xf32> to vector<8x32xf32>
    %107 = vector.shape_cast %104 : vector<8x32xf32> to vector<1x8x32xf32>
    tpu.vector_store %arg21[%c0_55, %c0_56, %c0_57], %107 {strides = array<i32>} : memref<1x8x32xf32, #tpu.memory_space<vmem>>, vector<1x8x32xf32>,
    return
  }
  func.func @transform_0(%arg0: i32, %arg1: i32) -> (i32, i32, i32) {
    %c0_i32 = arith.constant 0 : i32
    %c0_i32_0 = arith.constant 0 : i32
    %c0_i32_1 = arith.constant 0 : i32
    return %arg0, %c0_i32, %c0_i32_0 : i32, i32, i32
  }
  func.func @transform_1(%arg0: i32, %arg1: i32) -> (i32, i32, i32) {
    %c0_i32 = arith.constant 0 : i32
    %c0_i32_0 = arith.constant 0 : i32
    return %arg0, %arg1, %c0_i32 : i32, i32, i32
  }
  func.func @transform_2(%arg0: i32, %arg1: i32) -> (i32, i32, i32) {
    %c0_i32 = arith.constant 0 : i32
    %c0_i32_0 = arith.constant 0 : i32
    %c0_i32_1 = arith.constant 0 : i32
    return %arg0, %c0_i32, %c0_i32_0 : i32, i32, i32
  }
  func.func @transform_3(%arg0: i32, %arg1: i32) -> (i32, i32) {
    %c0_i32 = arith.constant 0 : i32
    %c0_i32_0 = arith.constant 0 : i32
    %c0_i32_1 = arith.constant 0 : i32
    return %c0_i32, %c0_i32_0 : i32, i32
  }
  func.func @transform_4(%arg0: i32, %arg1: i32) -> (i32, i32) {
    %c0_i32 = arith.constant 0 : i32
    %c0_i32_0 = arith.constant 0 : i32
    %c0_i32_1 = arith.constant 0 : i32
    return %c0_i32, %c0_i32_0 : i32, i32
  }
  func.func @transform_5(%arg0: i32, %arg1: i32) -> (i32, i32) {
    %c0_i32 = arith.constant 0 : i32
    %c0_i32_0 = arith.constant 0 : i32
    %c0_i32_1 = arith.constant 0 : i32
    return %c0_i32, %c0_i32_0 : i32, i32
  }
  func.func @transform_6(%arg0: i32, %arg1: i32) -> (i32, i32) {
    %c0_i32 = arith.constant 0 : i32
    %c0_i32_0 = arith.constant 0 : i32
    %c0_i32_1 = arith.constant 0 : i32
    return %c0_i32, %c0_i32_0 : i32, i32
  }
  func.func @transform_7(%arg0: i32, %arg1: i32) -> (i32, i32) {
    %c0_i32 = arith.constant 0 : i32
    %c0_i32_0 = arith.constant 0 : i32
    %c0_i32_1 = arith.constant 0 : i32
    return %c0_i32, %c0_i32_0 : i32, i32
  }
  func.func @transform_8(%arg0: i32, %arg1: i32) -> (i32, i32) {
    %c0_i32 = arith.constant 0 : i32
    %c0_i32_0 = arith.constant 0 : i32
    %c0_i32_1 = arith.constant 0 : i32
    return %c0_i32, %c0_i32_0 : i32, i32
  }
  func.func @transform_9(%arg0: i32, %arg1: i32) -> (i32, i32) {
    %c0_i32 = arith.constant 0 : i32
    %c0_i32_0 = arith.constant 0 : i32
    %c0_i32_1 = arith.constant 0 : i32
    return %c0_i32, %c0_i32_0 : i32, i32
  }
  func.func @transform_10(%arg0: i32, %arg1: i32) -> (i32, i32) {
    %c0_i32 = arith.constant 0 : i32
    %c0_i32_0 = arith.constant 0 : i32
    %c0_i32_1 = arith.constant 0 : i32
    return %c0_i32, %c0_i32_0 : i32, i32
  }
  func.func @transform_11(%arg0: i32, %arg1: i32) -> (i32, i32) {
    %c0_i32 = arith.constant 0 : i32
    %c0_i32_0 = arith.constant 0 : i32
    %c0_i32_1 = arith.constant 0 : i32
    return %c0_i32, %c0_i32_0 : i32, i32
  }
  func.func @transform_12(%arg0: i32, %arg1: i32) -> (i32, i32) {
    %c0_i32 = arith.constant 0 : i32
    %c0_i32_0 = arith.constant 0 : i32
    %c0_i32_1 = arith.constant 0 : i32
    return %c0_i32, %c0_i32_0 : i32, i32
  }
  func.func @transform_13(%arg0: i32, %arg1: i32) -> (i32, i32) {
    %c0_i32 = arith.constant 0 : i32
    %c0_i32_0 = arith.constant 0 : i32
    %c0_i32_1 = arith.constant 0 : i32
    return %c0_i32, %c0_i32_0 : i32, i32
  }
  func.func @transform_14(%arg0: i32, %arg1: i32) -> (i32, i32) {
    %c0_i32 = arith.constant 0 : i32
    %c0_i32_0 = arith.constant 0 : i32
    %c0_i32_1 = arith.constant 0 : i32
    return %c0_i32, %c0_i32_0 : i32, i32
  }
  func.func @transform_15(%arg0: i32, %arg1: i32) -> (i32, i32) {
    %c0_i32 = arith.constant 0 : i32
    %c0_i32_0 = arith.constant 0 : i32
    %c0_i32_1 = arith.constant 0 : i32
    return %c0_i32, %c0_i32_0 : i32, i32
  }
  func.func @transform_16(%arg0: i32, %arg1: i32) -> (i32, i32) {
    %c0_i32 = arith.constant 0 : i32
    %c0_i32_0 = arith.constant 0 : i32
    %c0_i32_1 = arith.constant 0 : i32
    return %c0_i32, %c0_i32_0 : i32, i32
  }
  func.func @transform_17(%arg0: i32, %arg1: i32) -> (i32, i32) {
    %c0_i32 = arith.constant 0 : i32
    %c0_i32_0 = arith.constant 0 : i32
    %c0_i32_1 = arith.constant 0 : i32
    return %c0_i32, %c0_i32_0 : i32, i32
  }
  func.func @transform_18(%arg0: i32, %arg1: i32) -> (i32, i32) {
    %c0_i32 = arith.constant 0 : i32
    %c0_i32_0 = arith.constant 0 : i32
    %c0_i32_1 = arith.constant 0 : i32
    return %c0_i32, %c0_i32_0 : i32, i32
  }
  func.func @transform_19(%arg0: i32, %arg1: i32) -> (i32, i32, i32) {
    %c0_i32 = arith.constant 0 : i32
    %c0_i32_0 = arith.constant 0 : i32
    return %arg0, %arg1, %c0_i32 : i32, i32, i32
  }
}

module attributes {stable_mosaic.version = 11 : i64} {
  func.func @bert_layer_kernel(%arg0: i32, %arg1: i32, %arg2: memref<1x8x32xbf16, #tpu.memory_space<vmem>>, %arg3: memref<1x8x32xf32, #tpu.memory_space<vmem>>, %arg4: memref<1x1x8xf32, #tpu.memory_space<vmem>>, %arg5: memref<32x32xbf16, #tpu.memory_space<vmem>>, %arg6: memref<1x32xf32, #tpu.memory_space<vmem>>, %arg7: memref<32x32xbf16, #tpu.memory_space<vmem>>, %arg8: memref<1x32xf32, #tpu.memory_space<vmem>>, %arg9: memref<32x32xbf16, #tpu.memory_space<vmem>>, %arg10: memref<1x32xf32, #tpu.memory_space<vmem>>, %arg11: memref<32x32xbf16, #tpu.memory_space<vmem>>, %arg12: memref<1x32xf32, #tpu.memory_space<vmem>>, %arg13: memref<1x32xf32, #tpu.memory_space<vmem>>, %arg14: memref<1x32xf32, #tpu.memory_space<vmem>>, %arg15: memref<32x128xbf16, #tpu.memory_space<vmem>>, %arg16: memref<1x128xf32, #tpu.memory_space<vmem>>, %arg17: memref<128x32xbf16, #tpu.memory_space<vmem>>, %arg18: memref<1x32xf32, #tpu.memory_space<vmem>>, %arg19: memref<1x32xf32, #tpu.memory_space<vmem>>, %arg20: memref<1x32xf32, #tpu.memory_space<vmem>>, %arg21: memref<1x8x32xf32, #tpu.memory_space<vmem>>, %arg22: memref<8x32xbf16, #tpu.memory_space<vmem>>, %arg23: memref<8x32xbf16, #tpu.memory_space<vmem>>) attributes {dimension_semantics = [#tpu.dimension_semantics<parallel>, #tpu.dimension_semantics<arbitrary>], iteration_bounds = array<i64: 2, 1>, scalar_prefetch = 0 : i64, scratch_operands = 2 : i64, tpu.core_type = #tpu.core_type<tc>, window_params = [{transform_indices = @transform_0, window_bounds = array<i64: 1, 8, 32>}, {transform_indices = @transform_1, window_bounds = array<i64: 1, 8, 32>}, {transform_indices = @transform_2, window_bounds = array<i64: 1, 1, 8>}, {pipeline_mode = #tpu.pipeline_mode<synchronous>, transform_indices = @transform_3, window_bounds = array<i64: 32, 32>}, {pipeline_mode = #tpu.pipeline_mode<synchronous>, transform_indices = @transform_4, window_bounds = array<i64: 1, 32>}, {pipeline_mode = #tpu.pipeline_mode<synchronous>, transform_indices = @transform_5, window_bounds = array<i64: 32, 32>}, {pipeline_mode = #tpu.pipeline_mode<synchronous>, transform_indices = @transform_6, window_bounds = array<i64: 1, 32>}, {pipeline_mode = #tpu.pipeline_mode<synchronous>, transform_indices = @transform_7, window_bounds = array<i64: 32, 32>}, {pipeline_mode = #tpu.pipeline_mode<synchronous>, transform_indices = @transform_8, window_bounds = array<i64: 1, 32>}, {pipeline_mode = #tpu.pipeline_mode<synchronous>, transform_indices = @transform_9, window_bounds = array<i64: 32, 32>}, {pipeline_mode = #tpu.pipeline_mode<synchronous>, transform_indices = @transform_10, window_bounds = array<i64: 1, 32>}, {pipeline_mode = #tpu.pipeline_mode<synchronous>, transform_indices = @transform_11, window_bounds = array<i64: 1, 32>}, {pipeline_mode = #tpu.pipeline_mode<synchronous>, transform_indices = @transform_12, window_bounds = array<i64: 1, 32>}, {pipeline_mode = #tpu.pipeline_mode<synchronous>, transform_indices = @transform_13, window_bounds = array<i64: 32, 128>}, {pipeline_mode = #tpu.pipeline_mode<synchronous>, transform_indices = @transform_14, window_bounds = array<i64: 1, 128>}, {pipeline_mode = #tpu.pipeline_mode<synchronous>, transform_indices = @transform_15, window_bounds = array<i64: 128, 32>}, {pipeline_mode = #tpu.pipeline_mode<synchronous>, transform_indices = @transform_16, window_bounds = array<i64: 1, 32>}, {pipeline_mode = #tpu.pipeline_mode<synchronous>, transform_indices = @transform_17, window_bounds = array<i64: 1, 32>}, {pipeline_mode = #tpu.pipeline_mode<synchronous>, transform_indices = @transform_18, window_bounds = array<i64: 1, 32>}, {transform_indices = @transform_19, window_bounds = array<i64: 1, 8, 32>}]} {
    %c0_i32 = arith.constant 0 : i32
    %0 = arith.cmpi eq, %arg1, %c0_i32 : i32
    %1 = arith.extui %0 : i1 to i32
    %c0_i32_0 = arith.constant 0 : i32
    %2 = arith.cmpi ne, %1, %c0_i32_0 : i32
    scf.if %2 {
      %c0_58 = arith.constant 0 : index
      %c0_59 = arith.constant 0 : index
      %c0_60 = arith.constant 0 : index
      %108 = vector.load %arg2[%c0_58, %c0_59, %c0_60] : memref<1x8x32xbf16, #tpu.memory_space<vmem>>, vector<1x8x32xbf16>
      %109 = vector.shape_cast %108 : vector<1x8x32xbf16> to vector<8x32xbf16>
      %c0_61 = arith.constant 0 : index
      %c0_62 = arith.constant 0 : index
      %110 = vector.load %arg7[%c0_61, %c0_62] : memref<32x32xbf16, #tpu.memory_space<vmem>>, vector<32x32xbf16>
      %cst_63 = arith.constant dense<0.000000e+00> : vector<8x32xf32>
      %111 = tpu.matmul %109, %110, %cst_63 {dimension_numbers = #tpu.dot_dimension_numbers<[1], [0], [0], [1], [0, 0, 1, 1], [], []>} : vector<8x32xbf16>, vector<32x32xbf16>, vector<8x32xf32> -> vector<8x32xf32>
      %c0_64 = arith.constant 0 : index
      %c0_65 = arith.constant 0 : index
      %112 = vector.load %arg8[%c0_64, %c0_65] : memref<1x32xf32, #tpu.memory_space<vmem>>, vector<1x32xf32>
      %113 = vector.broadcast %112 : vector<1x32xf32> to vector<8x32xf32>
      %114 = arith.addf %111, %113 : vector<8x32xf32>
      %c0_66 = arith.constant 0 : index
      %c0_67 = arith.constant 0 : index
      %115 = vector.load %arg9[%c0_66, %c0_67] : memref<32x32xbf16, #tpu.memory_space<vmem>>, vector<32x32xbf16>
      %cst_68 = arith.constant dense<0.000000e+00> : vector<8x32xf32>
      %116 = tpu.matmul %109, %115, %cst_68 {dimension_numbers = #tpu.dot_dimension_numbers<[1], [0], [0], [1], [0, 0, 1, 1], [], []>} : vector<8x32xbf16>, vector<32x32xbf16>, vector<8x32xf32> -> vector<8x32xf32>
      %c0_69 = arith.constant 0 : index
      %c0_70 = arith.constant 0 : index
      %117 = vector.load %arg10[%c0_69, %c0_70] : memref<1x32xf32, #tpu.memory_space<vmem>>, vector<1x32xf32>
      %118 = vector.broadcast %117 : vector<1x32xf32> to vector<8x32xf32>
      %119 = arith.addf %116, %118 : vector<8x32xf32>
      %120 = arith.truncf %114 : vector<8x32xf32> to vector<8x32xbf16>
      %c0_71 = arith.constant 0 : index
      %c0_72 = arith.constant 0 : index
      %121 = vector.load %arg22[%c0_71, %c0_72] : memref<8x32xbf16, #tpu.memory_space<vmem>>, vector<8x32xbf16>
      tpu.vector_store %arg22[%c0_71, %c0_72], %120 {strides = array<i32>} : memref<8x32xbf16, #tpu.memory_space<vmem>>, vector<8x32xbf16>,
      %122 = arith.truncf %119 : vector<8x32xf32> to vector<8x32xbf16>
      %c0_73 = arith.constant 0 : index
      %c0_74 = arith.constant 0 : index
      %123 = vector.load %arg23[%c0_73, %c0_74] : memref<8x32xbf16, #tpu.memory_space<vmem>>, vector<8x32xbf16>
      tpu.vector_store %arg23[%c0_73, %c0_74], %122 {strides = array<i32>} : memref<8x32xbf16, #tpu.memory_space<vmem>>, vector<8x32xbf16>,
    } else {
    }
    %c0 = arith.constant 0 : index
    %c0_1 = arith.constant 0 : index
    %c0_2 = arith.constant 0 : index
    %3 = vector.load %arg3[%c0, %c0_1, %c0_2] : memref<1x8x32xf32, #tpu.memory_space<vmem>>, vector<1x8x32xf32>
    %4 = vector.shape_cast %3 : vector<1x8x32xf32> to vector<8x32xf32>
    %c0_3 = arith.constant 0 : index
    %c0_4 = arith.constant 0 : index
    %c0_5 = arith.constant 0 : index
    %5 = vector.load %arg4[%c0_3, %c0_4, %c0_5] : memref<1x1x8xf32, #tpu.memory_space<vmem>>, vector<1x1x8xf32>
    %6 = vector.shape_cast %5 : vector<1x1x8xf32> to vector<1x8xf32>
    %7 = arith.truncf %4 : vector<8x32xf32> to vector<8x32xbf16>
    %c0_6 = arith.constant 0 : index
    %c0_7 = arith.constant 0 : index
    %8 = vector.load %arg5[%c0_6, %c0_7] : memref<32x32xbf16, #tpu.memory_space<vmem>>, vector<32x32xbf16>
    %cst = arith.constant dense<0.000000e+00> : vector<8x32xf32>
    %9 = tpu.matmul %7, %8, %cst {dimension_numbers = #tpu.dot_dimension_numbers<[1], [0], [0], [1], [0, 0, 1, 1], [], []>} : vector<8x32xbf16>, vector<32x32xbf16>, vector<8x32xf32> -> vector<8x32xf32>
    %c0_8 = arith.constant 0 : index
    %c0_9 = arith.constant 0 : index
    %10 = vector.load %arg6[%c0_8, %c0_9] : memref<1x32xf32, #tpu.memory_space<vmem>>, vector<1x32xf32>
    %11 = vector.broadcast %10 : vector<1x32xf32> to vector<8x32xf32>
    %12 = arith.addf %9, %11 : vector<8x32xf32>
    %cst_10 = arith.constant 0.176776692 : f32
    %13 = vector.broadcast %cst_10 : f32 to vector<8x32xf32>
    %14 = arith.mulf %12, %13 : vector<8x32xf32>
    %15 = arith.truncf %14 : vector<8x32xf32> to vector<8x32xbf16>
    %c0_11 = arith.constant 0 : index
    %c0_12 = arith.constant 0 : index
    %16 = vector.load %arg22[%c0_11, %c0_12] : memref<8x32xbf16, #tpu.memory_space<vmem>>, vector<8x32xbf16>
    %cst_13 = arith.constant dense<0.000000e+00> : vector<8x8xf32>
    %17 = tpu.matmul %15, %16, %cst_13 {dimension_numbers = #tpu.dot_dimension_numbers<[1], [1], [0], [0], [0, 0, 1, 0], [], []>} : vector<8x32xbf16>, vector<8x32xbf16>, vector<8x8xf32> -> vector<8x8xf32>
    %18 = vector.broadcast %6 : vector<1x8xf32> to vector<8x8xf32>
    %19 = arith.mulf %17, %18 : vector<8x8xf32>
    %cst_14 = arith.constant dense<0xFF800000> : vector<8xf32>
    %20 = vector.multi_reduction <maximumf>, %19, %cst_14 [1] : vector<8x8xf32> to vector<8xf32>
    %21 = vector.shape_cast %20 : vector<8xf32> to vector<8x1xf32>
    %22 = vector.broadcast %21 : vector<8x1xf32> to vector<8x8xf32>
    %23 = arith.subf %19, %22 : vector<8x8xf32>
    %24 = math.exp %23 : vector<8x8xf32>
    %cst_15 = arith.constant dense<0.000000e+00> : vector<8xf32>
    %25 = vector.multi_reduction <add>, %24, %cst_15 [1] : vector<8x8xf32> to vector<8xf32>
    %26 = vector.shape_cast %25 : vector<8xf32> to vector<8x1xf32>
    %27 = tpu.reciprocal %26 {approx = true} : vector<8x1xf32> -> vector<8x1xf32>
    %28 = vector.broadcast %27 : vector<8x1xf32> to vector<8x8xf32>
    %29 = arith.mulf %24, %28 : vector<8x8xf32>
    %30 = arith.truncf %29 : vector<8x8xf32> to vector<8x8xbf16>
    %c0_16 = arith.constant 0 : index
    %c0_17 = arith.constant 0 : index
    %31 = vector.load %arg23[%c0_16, %c0_17] : memref<8x32xbf16, #tpu.memory_space<vmem>>, vector<8x32xbf16>
    %cst_18 = arith.constant dense<0.000000e+00> : vector<8x32xf32>
    %32 = tpu.matmul %30, %31, %cst_18 {dimension_numbers = #tpu.dot_dimension_numbers<[1], [0], [0], [1], [0, 0, 1, 1], [], []>} : vector<8x8xbf16>, vector<8x32xbf16>, vector<8x32xf32> -> vector<8x32xf32>
    %33 = arith.truncf %32 : vector<8x32xf32> to vector<8x32xbf16>
    %c0_19 = arith.constant 0 : index
    %c0_20 = arith.constant 0 : index
    %34 = vector.load %arg11[%c0_19, %c0_20] : memref<32x32xbf16, #tpu.memory_space<vmem>>, vector<32x32xbf16>
    %cst_21 = arith.constant dense<0.000000e+00> : vector<8x32xf32>
    %35 = tpu.matmul %33, %34, %cst_21 {dimension_numbers = #tpu.dot_dimension_numbers<[1], [0], [0], [1], [0, 0, 1, 1], [], []>} : vector<8x32xbf16>, vector<32x32xbf16>, vector<8x32xf32> -> vector<8x32xf32>
    %c0_22 = arith.constant 0 : index
    %c0_23 = arith.constant 0 : index
    %36 = vector.load %arg12[%c0_22, %c0_23] : memref<1x32xf32, #tpu.memory_space<vmem>>, vector<1x32xf32>
    %37 = vector.broadcast %36 : vector<1x32xf32> to vector<8x32xf32>
    %38 = arith.addf %35, %37 : vector<8x32xf32>
    %39 = arith.addf %38, %4 : vector<8x32xf32>
    %c0_24 = arith.constant 0 : index
    %c0_25 = arith.constant 0 : index
    %40 = vector.load %arg13[%c0_24, %c0_25] : memref<1x32xf32, #tpu.memory_space<vmem>>, vector<1x32xf32>
    %c0_26 = arith.constant 0 : index
    %c0_27 = arith.constant 0 : index
    %41 = vector.load %arg14[%c0_26, %c0_27] : memref<1x32xf32, #tpu.memory_space<vmem>>, vector<1x32xf32>
    %cst_28 = arith.constant dense<0.000000e+00> : vector<8xf32>
    %42 = vector.multi_reduction <add>, %39, %cst_28 [1] : vector<8x32xf32> to vector<8xf32>
    %43 = vector.shape_cast %42 : vector<8xf32> to vector<8x1xf32>
    %cst_29 = arith.constant 3.200000e+01 : f32
    %44 = vector.broadcast %cst_29 : f32 to vector<8x1xf32>
    %45 = arith.divf %43, %44 : vector<8x1xf32>
    %46 = vector.broadcast %45 : vector<8x1xf32> to vector<8x32xf32>
    %47 = arith.subf %39, %46 : vector<8x32xf32>
    %48 = arith.mulf %47, %47 : vector<8x32xf32>
    %cst_30 = arith.constant dense<0.000000e+00> : vector<8xf32>
    %49 = vector.multi_reduction <add>, %48, %cst_30 [1] : vector<8x32xf32> to vector<8xf32>
    %50 = vector.shape_cast %49 : vector<8xf32> to vector<8x1xf32>
    %cst_31 = arith.constant 3.200000e+01 : f32
    %51 = vector.broadcast %cst_31 : f32 to vector<8x1xf32>
    %52 = arith.divf %50, %51 : vector<8x1xf32>
    %cst_32 = arith.constant 9.99999996E-13 : f32
    %53 = vector.broadcast %cst_32 : f32 to vector<8x1xf32>
    %54 = arith.addf %52, %53 : vector<8x1xf32>
    %55 = math.rsqrt %54 : vector<8x1xf32>
    %56 = vector.broadcast %55 : vector<8x1xf32> to vector<8x32xf32>
    %57 = arith.mulf %47, %56 : vector<8x32xf32>
    %58 = vector.broadcast %40 : vector<1x32xf32> to vector<8x32xf32>
    %59 = arith.mulf %57, %58 : vector<8x32xf32>
    %60 = vector.broadcast %41 : vector<1x32xf32> to vector<8x32xf32>
    %61 = arith.addf %59, %60 : vector<8x32xf32>
    %62 = arith.truncf %61 : vector<8x32xf32> to vector<8x32xbf16>
    %c0_33 = arith.constant 0 : index
    %c0_34 = arith.constant 0 : index
    %63 = vector.load %arg15[%c0_33, %c0_34] : memref<32x128xbf16, #tpu.memory_space<vmem>>, vector<32x128xbf16>
    %cst_35 = arith.constant dense<0.000000e+00> : vector<8x128xf32>
    %64 = tpu.matmul %62, %63, %cst_35 {dimension_numbers = #tpu.dot_dimension_numbers<[1], [0], [0], [1], [0, 0, 1, 1], [], []>} : vector<8x32xbf16>, vector<32x128xbf16>, vector<8x128xf32> -> vector<8x128xf32>
    %c0_36 = arith.constant 0 : index
    %c0_37 = arith.constant 0 : index
    %65 = vector.load %arg16[%c0_36, %c0_37] : memref<1x128xf32, #tpu.memory_space<vmem>>, vector<1x128xf32>
    %66 = vector.broadcast %65 : vector<1x128xf32> to vector<8x128xf32>
    %67 = arith.addf %64, %66 : vector<8x128xf32>
    %cst_38 = arith.constant 5.000000e-01 : f32
    %68 = vector.broadcast %cst_38 : f32 to vector<8x128xf32>
    %69 = arith.mulf %68, %67 : vector<8x128xf32>
    %cst_39 = arith.constant 0.707106769 : f32
    %70 = vector.broadcast %cst_39 : f32 to vector<8x128xf32>
    %71 = arith.mulf %67, %70 : vector<8x128xf32>
    %72 = math.erf %71 : vector<8x128xf32>
    %cst_40 = arith.constant 1.000000e+00 : f32
    %73 = vector.broadcast %cst_40 : f32 to vector<8x128xf32>
    %74 = arith.addf %73, %72 : vector<8x128xf32>
    %75 = arith.mulf %69, %74 : vector<8x128xf32>
    %76 = arith.truncf %75 : vector<8x128xf32> to vector<8x128xbf16>
    %c0_41 = arith.constant 0 : index
    %c0_42 = arith.constant 0 : index
    %77 = vector.load %arg17[%c0_41, %c0_42] : memref<128x32xbf16, #tpu.memory_space<vmem>>, vector<128x32xbf16>
    %cst_43 = arith.constant dense<0.000000e+00> : vector<8x32xf32>
    %78 = tpu.matmul %76, %77, %cst_43 {dimension_numbers = #tpu.dot_dimension_numbers<[1], [0], [0], [1], [0, 0, 1, 1], [], []>} : vector<8x128xbf16>, vector<128x32xbf16>, vector<8x32xf32> -> vector<8x32xf32>
    %c0_44 = arith.constant 0 : index
    %c0_45 = arith.constant 0 : index
    %79 = vector.load %arg18[%c0_44, %c0_45] : memref<1x32xf32, #tpu.memory_space<vmem>>, vector<1x32xf32>
    %80 = vector.broadcast %79 : vector<1x32xf32> to vector<8x32xf32>
    %81 = arith.addf %78, %80 : vector<8x32xf32>
    %82 = arith.addf %81, %61 : vector<8x32xf32>
    %c0_46 = arith.constant 0 : index
    %c0_47 = arith.constant 0 : index
    %83 = vector.load %arg19[%c0_46, %c0_47] : memref<1x32xf32, #tpu.memory_space<vmem>>, vector<1x32xf32>
    %c0_48 = arith.constant 0 : index
    %c0_49 = arith.constant 0 : index
    %84 = vector.load %arg20[%c0_48, %c0_49] : memref<1x32xf32, #tpu.memory_space<vmem>>, vector<1x32xf32>
    %cst_50 = arith.constant dense<0.000000e+00> : vector<8xf32>
    %85 = vector.multi_reduction <add>, %82, %cst_50 [1] : vector<8x32xf32> to vector<8xf32>
    %86 = vector.shape_cast %85 : vector<8xf32> to vector<8x1xf32>
    %cst_51 = arith.constant 3.200000e+01 : f32
    %87 = vector.broadcast %cst_51 : f32 to vector<8x1xf32>
    %88 = arith.divf %86, %87 : vector<8x1xf32>
    %89 = vector.broadcast %88 : vector<8x1xf32> to vector<8x32xf32>
    %90 = arith.subf %82, %89 : vector<8x32xf32>
    %91 = arith.mulf %90, %90 : vector<8x32xf32>
    %cst_52 = arith.constant dense<0.000000e+00> : vector<8xf32>
    %92 = vector.multi_reduction <add>, %91, %cst_52 [1] : vector<8x32xf32> to vector<8xf32>
    %93 = vector.shape_cast %92 : vector<8xf32> to vector<8x1xf32>
    %cst_53 = arith.constant 3.200000e+01 : f32
    %94 = vector.broadcast %cst_53 : f32 to vector<8x1xf32>
    %95 = arith.divf %93, %94 : vector<8x1xf32>
    %cst_54 = arith.constant 9.99999996E-13 : f32
    %96 = vector.broadcast %cst_54 : f32 to vector<8x1xf32>
    %97 = arith.addf %95, %96 : vector<8x1xf32>
    %98 = math.rsqrt %97 : vector<8x1xf32>
    %99 = vector.broadcast %98 : vector<8x1xf32> to vector<8x32xf32>
    %100 = arith.mulf %90, %99 : vector<8x32xf32>
    %101 = vector.broadcast %83 : vector<1x32xf32> to vector<8x32xf32>
    %102 = arith.mulf %100, %101 : vector<8x32xf32>
    %103 = vector.broadcast %84 : vector<1x32xf32> to vector<8x32xf32>
    %104 = arith.addf %102, %103 : vector<8x32xf32>
    %c0_55 = arith.constant 0 : index
    %c0_56 = arith.constant 0 : index
    %c0_57 = arith.constant 0 : index
    %105 = vector.load %arg21[%c0_55, %c0_56, %c0_57] : memref<1x8x32xf32, #tpu.memory_space<vmem>>, vector<1x8x32xf32>
    %106 = vector.shape_cast %105 : vector<1x8x32xf32> to vector<8x32xf32>
    %107 = vector.shape_cast %104 : vector<8x32xf32> to vector<1x8x32xf32>
    tpu.vector_store %arg21[%c0_55, %c0_56, %c0_57], %107 {strides = array<i32>} : memref<1x8x32xf32, #tpu.memory_space<vmem>>, vector<1x8x32xf32>,
    return
  }
  func.func @transform_0(%arg0: i32, %arg1: i32) -> (i32, i32, i32) {
    %c0_i32 = arith.constant 0 : i32
    %c0_i32_0 = arith.constant 0 : i32
    %c0_i32_1 = arith.constant 0 : i32
    return %arg0, %c0_i32, %c0_i32_0 : i32, i32, i32
  }
  func.func @transform_1(%arg0: i32, %arg1: i32) -> (i32, i32, i32) {
    %c0_i32 = arith.constant 0 : i32
    %c0_i32_0 = arith.constant 0 : i32
    return %arg0, %arg1, %c0_i32 : i32, i32, i32
  }
  func.func @transform_2(%arg0: i32, %arg1: i32) -> (i32, i32, i32) {
    %c0_i32 = arith.constant 0 : i32
    %c0_i32_0 = arith.constant 0 : i32
    %c0_i32_1 = arith.constant 0 : i32
    return %arg0, %c0_i32, %c0_i32_0 : i32, i32, i32
  }
  func.func @transform_3(%arg0: i32, %arg1: i32) -> (i32, i32) {
    %c0_i32 = arith.constant 0 : i32
    %c0_i32_0 = arith.constant 0 : i32
    %c0_i32_1 = arith.constant 0 : i32
    return %c0_i32, %c0_i32_0 : i32, i32
  }
  func.func @transform_4(%arg0: i32, %arg1: i32) -> (i32, i32) {
    %c0_i32 = arith.constant 0 : i32
    %c0_i32_0 = arith.constant 0 : i32
    %c0_i32_1 = arith.constant 0 : i32
    return %c0_i32, %c0_i32_0 : i32, i32
  }
  func.func @transform_5(%arg0: i32, %arg1: i32) -> (i32, i32) {
    %c0_i32 = arith.constant 0 : i32
    %c0_i32_0 = arith.constant 0 : i32
    %c0_i32_1 = arith.constant 0 : i32
    return %c0_i32, %c0_i32_0 : i32, i32
  }
  func.func @transform_6(%arg0: i32, %arg1: i32) -> (i32, i32) {
    %c0_i32 = arith.constant 0 : i32
    %c0_i32_0 = arith.constant 0 : i32
    %c0_i32_1 = arith.constant 0 : i32
    return %c0_i32, %c0_i32_0 : i32, i32
  }
  func.func @transform_7(%arg0: i32, %arg1: i32) -> (i32, i32) {
    %c0_i32 = arith.constant 0 : i32
    %c0_i32_0 = arith.constant 0 : i32
    %c0_i32_1 = arith.constant 0 : i32
    return %c0_i32, %c0_i32_0 : i32, i32
  }
  func.func @transform_8(%arg0: i32, %arg1: i32) -> (i32, i32) {
    %c0_i32 = arith.constant 0 : i32
    %c0_i32_0 = arith.constant 0 : i32
    %c0_i32_1 = arith.constant 0 : i32
    return %c0_i32, %c0_i32_0 : i32, i32
  }
  func.func @transform_9(%arg0: i32, %arg1: i32) -> (i32, i32) {
    %c0_i32 = arith.constant 0 : i32
    %c0_i32_0 = arith.constant 0 : i32
    %c0_i32_1 = arith.constant 0 : i32
    return %c0_i32, %c0_i32_0 : i32, i32
  }
  func.func @transform_10(%arg0: i32, %arg1: i32) -> (i32, i32) {
    %c0_i32 = arith.constant 0 : i32
    %c0_i32_0 = arith.constant 0 : i32
    %c0_i32_1 = arith.constant 0 : i32
    return %c0_i32, %c0_i32_0 : i32, i32
  }
  func.func @transform_11(%arg0: i32, %arg1: i32) -> (i32, i32) {
    %c0_i32 = arith.constant 0 : i32
    %c0_i32_0 = arith.constant 0 : i32
    %c0_i32_1 = arith.constant 0 : i32
    return %c0_i32, %c0_i32_0 : i32, i32
  }
  func.func @transform_12(%arg0: i32, %arg1: i32) -> (i32, i32) {
    %c0_i32 = arith.constant 0 : i32
    %c0_i32_0 = arith.constant 0 : i32
    %c0_i32_1 = arith.constant 0 : i32
    return %c0_i32, %c0_i32_0 : i32, i32
  }
  func.func @transform_13(%arg0: i32, %arg1: i32) -> (i32, i32) {
    %c0_i32 = arith.constant 0 : i32
    %c0_i32_0 = arith.constant 0 : i32
    %c0_i32_1 = arith.constant 0 : i32
    return %c0_i32, %c0_i32_0 : i32, i32
  }
  func.func @transform_14(%arg0: i32, %arg1: i32) -> (i32, i32) {
    %c0_i32 = arith.constant 0 : i32
    %c0_i32_0 = arith.constant 0 : i32
    %c0_i32_1 = arith.constant 0 : i32
    return %c0_i32, %c0_i32_0 : i32, i32
  }
  func.func @transform_15(%arg0: i32, %arg1: i32) -> (i32, i32) {
    %c0_i32 = arith.constant 0 : i32
    %c0_i32_0 = arith.constant 0 : i32
    %c0_i32_1 = arith.constant 0 : i32
    return %c0_i32, %c0_i32_0 : i32, i32
  }
  func.func @transform_16(%arg0: i32, %arg1: i32) -> (i32, i32) {
    %c0_i32 = arith.constant 0 : i32
    %c0_i32_0 = arith.constant 0 : i32
    %c0_i32_1 = arith.constant 0 : i32
    return %c0_i32, %c0_i32_0 : i32, i32
  }
  func.func @transform_17(%arg0: i32, %arg1: i32) -> (i32, i32) {
    %c0_i32 = arith.constant 0 : i32
    %c0_i32_0 = arith.constant 0 : i32
    %c0_i32_1 = arith.constant 0 : i32
    return %c0_i32, %c0_i32_0 : i32, i32
  }
  func.func @transform_18(%arg0: i32, %arg1: i32) -> (i32, i32) {
    %c0_i32 = arith.constant 0 : i32
    %c0_i32_0 = arith.constant 0 : i32
    %c0_i32_1 = arith.constant 0 : i32
    return %c0_i32, %c0_i32_0 : i32, i32
  }
  func.func @transform_19(%arg0: i32, %arg1: i32) -> (i32, i32, i32) {
    %c0_i32 = arith.constant 0 : i32
    %c0_i32_0 = arith.constant 0 : i32
    return %arg0, %arg1, %c0_i32 : i32, i32, i32
  }
}

</mosaic_0001>

<llo_original>
// kernel: tpu_custom_call.1
$region0: #{tpu_custom_call.1}
  #allocation0 [shape = 'u32[]', space=smem, size = 0x4, offset = 0x4, fixed_abs, tag = 'smem constant byte address 0x4 - core index']
  #allocation1 [shape = 'u32[72,128]{1,0:T(1,128)}', space=vmem, size = 0x9000, scoped, tag = 'internal scratch']
  #allocation2 [shape = 'bf16[8,32]{1,0:T(8,128)(2,1)}', space=vmem, size = 0x800, scoped, tag = 'scratch operand']
  #allocation3 [shape = 'bf16[8,32]{1,0:T(8,128)(2,1)}', space=vmem, size = 0x800, scoped, tag = 'scratch operand']
  %s0 = inlined_call_operand.hbm [shape: bf16[2,8,32], index: 0, kind: input, shape index: {}]
  %s1 = inlined_call_operand.vmem [shape: f32[2,8,32], index: 1, kind: input, shape index: {}]
  %s2 = inlined_call_operand.hbm [shape: f32[2,1,8], index: 2, kind: input, shape index: {}]
  %s3 = inlined_call_operand.vmem [shape: bf16[32,32], index: 3, kind: input, shape index: {}]
  %s4 = inlined_call_operand.vmem [shape: f32[1,32], index: 4, kind: input, shape index: {}]
  %s5 = inlined_call_operand.vmem [shape: bf16[32,32], index: 5, kind: input, shape index: {}]
  %s6 = inlined_call_operand.vmem [shape: f32[1,32], index: 6, kind: input, shape index: {}]
  %s7 = inlined_call_operand.vmem [shape: bf16[32,32], index: 7, kind: input, shape index: {}]
  %s8 = inlined_call_operand.vmem [shape: f32[1,32], index: 8, kind: input, shape index: {}]
  %s9 = inlined_call_operand.vmem [shape: bf16[32,32], index: 9, kind: input, shape index: {}]
  %s10 = inlined_call_operand.vmem [shape: f32[1,32], index: 10, kind: input, shape index: {}]
  %s11 = inlined_call_operand.vmem [shape: f32[1,32], index: 11, kind: input, shape index: {}]
  %s12 = inlined_call_operand.vmem [shape: f32[1,32], index: 12, kind: input, shape index: {}]
  %s13 = inlined_call_operand.hbm [shape: bf16[32,128], index: 13, kind: input, shape index: {}]
  %s14 = inlined_call_operand.vmem [shape: f32[1,128], index: 14, kind: input, shape index: {}]
  %s15 = inlined_call_operand.vmem [shape: bf16[128,32], index: 15, kind: input, shape index: {}]
  %s16 = inlined_call_operand.vmem [shape: f32[1,32], index: 16, kind: input, shape index: {}]
  %s17 = inlined_call_operand.vmem [shape: f32[1,32], index: 17, kind: input, shape index: {}]
  %s18 = inlined_call_operand.vmem [shape: f32[1,32], index: 18, kind: input, shape index: {}]
  %s19 = inlined_call_operand.hbm [shape: f32[2,8,32], index: 19, kind: output, shape index: {}]
  %s20 = sld [smem:[#allocation0]]
  $region125: #{tpu_custom_call.1} parent=0
    _
  %s22 = ssub.s32 1, %s20
  %s23 = scalar_select 0, %s22, %s20
  $region1: #{tpu_custom_call.1} parent=0
    #allocation4 [shape = 'u8[4096]{0}', space=vmem, size = 0x1000, scoped, tag = 'input window, operand 0']
    #allocation5 [shape = 's32[2]{0}', space=sflag, size = 0x8, scoped, tag = 'scoped memory for tpu_custom_call.1']
    #allocation6 [shape = 's32[2]{0}', space=sflag, size = 0x8, scoped, tag = 'scoped memory for tpu_custom_call.1']
    #allocation7 [shape = 'u8[1024]{0}', space=vmem, size = 0x400, scoped, tag = 'input window, operand 2']
    #allocation8 [shape = 's32[2]{0}', space=sflag, size = 0x8, scoped, tag = 'scoped memory for tpu_custom_call.1']
    #allocation9 [shape = 'u8[8192]{0}', space=vmem, size = 0x2000, scoped, tag = 'input window, operand 13, single buffered']
    #allocation10 [shape = 'u8[8192]{0}', space=vmem, size = 0x2000, scoped, tag = 'output window, operand 0']
    %24 = vsyncpa [#allocation5], 0
    %s25 = scalar_lea.sflag [#allocation5], 1
    %26 = vsyncpa %s25, 0
    %27 = vsyncpa [#allocation8], 0
    %s28 = scalar_lea.sflag [#allocation8], 1
    %29 = vsyncpa %s28, 0
    %30 = vsyncpa [#allocation6], 0
    %s31 = scalar_lea.sflag [#allocation6], 1
    %32 = vsyncpa %s31, 0
    loop: start=0, step=1, limit=4
    $region2: #{tpu_custom_call.1} parent=1 // loop_pre_header
      _
    $region3: #{tpu_custom_call.1} parent=1 // loop_header
      %s34 = sphi 0, %s38
      %p35 = scmp.ge.s32.totalorder %s34, 4
      %s41 = sphi 0, %s53
      %s42 = sphi 0, %s49
      %s43 = sphi 0, %s41
      %s44 = sphi 0, %s42
      %s45 = sphi 0, %s43
      %s46 = sphi 0, %s44
      %s56 = sphi 0, %s58
      %s59 = sphi 0, %s56
      %s60 = sphi 0, %s59
      %s76 = sphi 0, %s60
      %s84 = sphi 0, %s86
      %s87 = sphi 0, %s84
      %s88 = sphi 0, %s87
      %s104 = sphi 0, %s88
      %s110 = sphi 0, %s112
      %s113 = sphi 0, %s110
      %s114 = sphi 0, %s113
      %s130 = sphi 0, %s114
      %s134 = sphi 0, %s134
      %s136 = sphi 0, %s134
      %s137 = sphi 0, %s136
      %s151 = sphi 0, %s137
      %s155 = sphi 0, %s155
      %s157 = sphi 0, %s155
      %s158 = sphi 0, %s157
      %s172 = sphi 0, %s158
      %s176 = sphi 0, %s176
      %s178 = sphi 0, %s176
      %s179 = sphi 0, %s178
      %s193 = sphi 0, %s179
      %s197 = sphi 0, %s197
      %s199 = sphi 0, %s197
      %s200 = sphi 0, %s199
      %s214 = sphi 0, %s200
      %s218 = sphi 0, %s218
      %s220 = sphi 0, %s218
      %s221 = sphi 0, %s220
      %s235 = sphi 0, %s221
      %s239 = sphi 0, %s239
      %s241 = sphi 0, %s239
      %s242 = sphi 0, %s241
      %s256 = sphi 0, %s242
      %s260 = sphi 0, %s260
      %s262 = sphi 0, %s260
      %s263 = sphi 0, %s262
      %s277 = sphi 0, %s263
      %s281 = sphi 0, %s281
      %s283 = sphi 0, %s281
      %s284 = sphi 0, %s283
      %s298 = sphi 0, %s284
      %s302 = sphi 0, %s302
      %s304 = sphi 0, %s302
      %s305 = sphi 0, %s304
      %s319 = sphi 0, %s305
      %s323 = sphi 0, %s323
      %s325 = sphi 0, %s323
      %s326 = sphi 0, %s325
      %s340 = sphi 0, %s326
      %s344 = sphi 0, %s344
      %s346 = sphi 0, %s344
      %s347 = sphi 0, %s346
      %s361 = sphi 0, %s347
      %s365 = sphi 0, %s365
      %s367 = sphi 0, %s365
      %s368 = sphi 0, %s367
      %s382 = sphi 0, %s368
      %s386 = sphi 0, %s386
      %s388 = sphi 0, %s386
      %s389 = sphi 0, %s388
      %s403 = sphi 0, %s389
      %s407 = sphi 0, %s407
      %s409 = sphi 0, %s407
      %s410 = sphi 0, %s409
      %s424 = sphi 0, %s410
      %s428 = sphi 0, %s428
      %s430 = sphi 0, %s428
      %s431 = sphi 0, %s430
      %s445 = sphi 0, %s431
      %s449 = sphi 0, %s449
      %s451 = sphi 0, %s449
      %s452 = sphi 0, %s451
      %s466 = sphi 0, %s452
      %s474 = sphi 0, %s476
      %s477 = sphi 0, %s474
      %s478 = sphi 0, %s477
      %s494 = sphi 0, %s478
    $region4: #{tpu_custom_call.1} parent=1 // loop_header_branch
      %37 = sbr.rel (%p35) target = $region8
    $region5: #{tpu_custom_call.1} parent=1 // loop_body
      %s39 = ssub.s32 %s34, 1
      %s40 = ssub.s32 %s34, 2
      %s47 = sadd.s32 1, %s42
      %p48 = scmp.ge.s32.totalorder %s47, 1
      %s49 = scalar_select %p48, 0, %s47
      %s50 = sadd.s32 1, %s41
      %s51 = scalar_select %p48, %s50, %s41
      %p52 = scmp.ge.s32.totalorder %s51, 2
      %s53 = scalar_select %p52, 0, %s51
      %s54 = ssub.s32 %s41, %s53
      %p55 = scmp.eq.s32.totalorder %s54, 0
      %s57 = sadd.s32 %s56, 1
      %s58 = scalar_select %p55, %s56, %s57
      %p61 = pneg %p55
      %p62 = scmp.eq.s32.totalorder %s34, 1
      %p63 = por %p61, %p62
      %p64 = scmp.ne.s32.totalorder %s56, %s59
      %p65 = scmp.eq.s32.totalorder %s34, 0
      %p66 = por %p64, %p65
      %p67 = scmp.ne.s32.totalorder %s56, %s59
      %p68 = scmp.eq.s32.totalorder %s39, 1
      %p69 = por %p67, %p68
      %p70 = scmp.ne.s32.totalorder %s59, %s60
      %p71 = scmp.eq.s32.totalorder %s39, 0
      %p72 = por %p70, %p71
      %p73 = scmp.ne.s32.totalorder %s59, %s60
      %p74 = scmp.eq.s32.totalorder %s40, 1
      %p75 = por %p73, %p74
      %p77 = scmp.ne.s32.totalorder %s60, %s76
      %p78 = scmp.eq.s32.totalorder %s40, 0
      %p79 = por %p77, %p78
      %s80 = ssub.s32 %s41, %s53
      %s81 = ssub.s32 %s42, %s49
      %s82 = sor.u32 %s80, %s81
      %p83 = scmp.eq.s32.totalorder %s82, 0
      %s85 = sadd.s32 %s84, 1
      %s86 = scalar_select %p83, %s84, %s85
      %p89 = pneg %p83
      %p90 = scmp.eq.s32.totalorder %s34, 1
      %p91 = por %p89, %p90
      %p92 = scmp.ne.s32.totalorder %s84, %s87
      %p93 = scmp.eq.s32.totalorder %s34, 0
      %p94 = por %p92, %p93
      %p95 = scmp.ne.s32.totalorder %s84, %s87
      %p96 = scmp.eq.s32.totalorder %s39, 1
      %p97 = por %p95, %p96
      %p98 = scmp.ne.s32.totalorder %s87, %s88
      %p99 = scmp.eq.s32.totalorder %s39, 0
      %p100 = por %p98, %p99
      %p101 = scmp.ne.s32.totalorder %s87, %s88
      %p102 = scmp.eq.s32.totalorder %s40, 1
      %p103 = por %p101, %p102
      %p105 = scmp.ne.s32.totalorder %s88, %s104
      %p106 = scmp.eq.s32.totalorder %s40, 0
      %p107 = por %p105, %p106
      %s108 = ssub.s32 %s41, %s53
      %p109 = scmp.eq.s32.totalorder %s108, 0
      %s111 = sadd.s32 %s110, 1
      %s112 = scalar_select %p109, %s110, %s111
      %p115 = pneg %p109
      %p116 = scmp.eq.s32.totalorder %s34, 1
      %p117 = por %p115, %p116
      %p118 = scmp.ne.s32.totalorder %s110, %s113
      %p119 = scmp.eq.s32.totalorder %s34, 0
      %p120 = por %p118, %p119
      %p121 = scmp.ne.s32.totalorder %s110, %s113
      %p122 = scmp.eq.s32.totalorder %s39, 1
      %p123 = por %p121, %p122
      %p124 = scmp.ne.s32.totalorder %s113, %s114
      %p125 = scmp.eq.s32.totalorder %s39, 0
      %p126 = por %p124, %p125
      %p127 = scmp.ne.s32.totalorder %s113, %s114
      %p128 = scmp.eq.s32.totalorder %s40, 1
      %p129 = por %p127, %p128
      %p131 = scmp.ne.s32.totalorder %s114, %s130
      %p132 = scmp.eq.s32.totalorder %s40, 0
      %p133 = por %p131, %p132
      %s135 = sadd.s32 %s134, 1
      %p138 = scmp.eq.s32.totalorder %s34, 1
      %p139 = scmp.ne.s32.totalorder %s134, %s136
      %p140 = scmp.eq.s32.totalorder %s34, 0
      %p141 = por %p139, %p140
      %p142 = scmp.ne.s32.totalorder %s134, %s136
      %p143 = scmp.eq.s32.totalorder %s39, 1
      %p144 = por %p142, %p143
      %p145 = scmp.ne.s32.totalorder %s136, %s137
      %p146 = scmp.eq.s32.totalorder %s39, 0
      %p147 = por %p145, %p146
      %p148 = scmp.ne.s32.totalorder %s136, %s137
      %p149 = scmp.eq.s32.totalorder %s40, 1
      %p150 = por %p148, %p149
      %p152 = scmp.ne.s32.totalorder %s137, %s151
      %p153 = scmp.eq.s32.totalorder %s40, 0
      %p154 = por %p152, %p153
      %s156 = sadd.s32 %s155, 1
      %p159 = scmp.eq.s32.totalorder %s34, 1
      %p160 = scmp.ne.s32.totalorder %s155, %s157
      %p161 = scmp.eq.s32.totalorder %s34, 0
      %p162 = por %p160, %p161
      %p163 = scmp.ne.s32.totalorder %s155, %s157
      %p164 = scmp.eq.s32.totalorder %s39, 1
      %p165 = por %p163, %p164
      %p166 = scmp.ne.s32.totalorder %s157, %s158
      %p167 = scmp.eq.s32.totalorder %s39, 0
      %p168 = por %p166, %p167
      %p169 = scmp.ne.s32.totalorder %s157, %s158
      %p170 = scmp.eq.s32.totalorder %s40, 1
      %p171 = por %p169, %p170
      %p173 = scmp.ne.s32.totalorder %s158, %s172
      %p174 = scmp.eq.s32.totalorder %s40, 0
      %p175 = por %p173, %p174
      %s177 = sadd.s32 %s176, 1
      %p180 = scmp.eq.s32.totalorder %s34, 1
      %p181 = scmp.ne.s32.totalorder %s176, %s178
      %p182 = scmp.eq.s32.totalorder %s34, 0
      %p183 = por %p181, %p182
      %p184 = scmp.ne.s32.totalorder %s176, %s178
      %p185 = scmp.eq.s32.totalorder %s39, 1
      %p186 = por %p184, %p185
      %p187 = scmp.ne.s32.totalorder %s178, %s179
      %p188 = scmp.eq.s32.totalorder %s39, 0
      %p189 = por %p187, %p188
      %p190 = scmp.ne.s32.totalorder %s178, %s179
      %p191 = scmp.eq.s32.totalorder %s40, 1
      %p192 = por %p190, %p191
      %p194 = scmp.ne.s32.totalorder %s179, %s193
      %p195 = scmp.eq.s32.totalorder %s40, 0
      %p196 = por %p194, %p195
      %s198 = sadd.s32 %s197, 1
      %p201 = scmp.eq.s32.totalorder %s34, 1
      %p202 = scmp.ne.s32.totalorder %s197, %s199
      %p203 = scmp.eq.s32.totalorder %s34, 0
      %p204 = por %p202, %p203
      %p205 = scmp.ne.s32.totalorder %s197, %s199
      %p206 = scmp.eq.s32.totalorder %s39, 1
      %p207 = por %p205, %p206
      %p208 = scmp.ne.s32.totalorder %s199, %s200
      %p209 = scmp.eq.s32.totalorder %s39, 0
      %p210 = por %p208, %p209
      %p211 = scmp.ne.s32.totalorder %s199, %s200
      %p212 = scmp.eq.s32.totalorder %s40, 1
      %p213 = por %p211, %p212
      %p215 = scmp.ne.s32.totalorder %s200, %s214
      %p216 = scmp.eq.s32.totalorder %s40, 0
      %p217 = por %p215, %p216
      %s219 = sadd.s32 %s218, 1
      %p222 = scmp.eq.s32.totalorder %s34, 1
      %p223 = scmp.ne.s32.totalorder %s218, %s220
      %p224 = scmp.eq.s32.totalorder %s34, 0
      %p225 = por %p223, %p224
      %p226 = scmp.ne.s32.totalorder %s218, %s220
      %p227 = scmp.eq.s32.totalorder %s39, 1
      %p228 = por %p226, %p227
      %p229 = scmp.ne.s32.totalorder %s220, %s221
      %p230 = scmp.eq.s32.totalorder %s39, 0
      %p231 = por %p229, %p230
      %p232 = scmp.ne.s32.totalorder %s220, %s221
      %p233 = scmp.eq.s32.totalorder %s40, 1
      %p234 = por %p232, %p233
      %p236 = scmp.ne.s32.totalorder %s221, %s235
      %p237 = scmp.eq.s32.totalorder %s40, 0
      %p238 = por %p236, %p237
      %s240 = sadd.s32 %s239, 1
      %p243 = scmp.eq.s32.totalorder %s34, 1
      %p244 = scmp.ne.s32.totalorder %s239, %s241
      %p245 = scmp.eq.s32.totalorder %s34, 0
      %p246 = por %p244, %p245
      %p247 = scmp.ne.s32.totalorder %s239, %s241
      %p248 = scmp.eq.s32.totalorder %s39, 1
      %p249 = por %p247, %p248
      %p250 = scmp.ne.s32.totalorder %s241, %s242
      %p251 = scmp.eq.s32.totalorder %s39, 0
      %p252 = por %p250, %p251
      %p253 = scmp.ne.s32.totalorder %s241, %s242
      %p254 = scmp.eq.s32.totalorder %s40, 1
      %p255 = por %p253, %p254
      %p257 = scmp.ne.s32.totalorder %s242, %s256
      %p258 = scmp.eq.s32.totalorder %s40, 0
      %p259 = por %p257, %p258
      %s261 = sadd.s32 %s260, 1
      %p264 = scmp.eq.s32.totalorder %s34, 1
      %p265 = scmp.ne.s32.totalorder %s260, %s262
      %p266 = scmp.eq.s32.totalorder %s34, 0
      %p267 = por %p265, %p266
      %p268 = scmp.ne.s32.totalorder %s260, %s262
      %p269 = scmp.eq.s32.totalorder %s39, 1
      %p270 = por %p268, %p269
      %p271 = scmp.ne.s32.totalorder %s262, %s263
      %p272 = scmp.eq.s32.totalorder %s39, 0
      %p273 = por %p271, %p272
      %p274 = scmp.ne.s32.totalorder %s262, %s263
      %p275 = scmp.eq.s32.totalorder %s40, 1
      %p276 = por %p274, %p275
      %p278 = scmp.ne.s32.totalorder %s263, %s277
      %p279 = scmp.eq.s32.totalorder %s40, 0
      %p280 = por %p278, %p279
      %s282 = sadd.s32 %s281, 1
      %p285 = scmp.eq.s32.totalorder %s34, 1
      %p286 = scmp.ne.s32.totalorder %s281, %s283
      %p287 = scmp.eq.s32.totalorder %s34, 0
      %p288 = por %p286, %p287
      %p289 = scmp.ne.s32.totalorder %s281, %s283
      %p290 = scmp.eq.s32.totalorder %s39, 1
      %p291 = por %p289, %p290
      %p292 = scmp.ne.s32.totalorder %s283, %s284
      %p293 = scmp.eq.s32.totalorder %s39, 0
      %p294 = por %p292, %p293
      %p295 = scmp.ne.s32.totalorder %s283, %s284
      %p296 = scmp.eq.s32.totalorder %s40, 1
      %p297 = por %p295, %p296
      %p299 = scmp.ne.s32.totalorder %s284, %s298
      %p300 = scmp.eq.s32.totalorder %s40, 0
      %p301 = por %p299, %p300
      %s303 = sadd.s32 %s302, 1
      %p306 = scmp.eq.s32.totalorder %s34, 1
      %p307 = scmp.ne.s32.totalorder %s302, %s304
      %p308 = scmp.eq.s32.totalorder %s34, 0
      %p309 = por %p307, %p308
      %p310 = scmp.ne.s32.totalorder %s302, %s304
      %p311 = scmp.eq.s32.totalorder %s39, 1
      %p312 = por %p310, %p311
      %p313 = scmp.ne.s32.totalorder %s304, %s305
      %p314 = scmp.eq.s32.totalorder %s39, 0
      %p315 = por %p313, %p314
      %p316 = scmp.ne.s32.totalorder %s304, %s305
      %p317 = scmp.eq.s32.totalorder %s40, 1
      %p318 = por %p316, %p317
      %p320 = scmp.ne.s32.totalorder %s305, %s319
      %p321 = scmp.eq.s32.totalorder %s40, 0
      %p322 = por %p320, %p321
      %s324 = sadd.s32 %s323, 1
      %p327 = scmp.eq.s32.totalorder %s34, 1
      %p328 = scmp.ne.s32.totalorder %s323, %s325
      %p329 = scmp.eq.s32.totalorder %s34, 0
      %p330 = por %p328, %p329
      %p331 = scmp.ne.s32.totalorder %s323, %s325
      %p332 = scmp.eq.s32.totalorder %s39, 1
      %p333 = por %p331, %p332
      %p334 = scmp.ne.s32.totalorder %s325, %s326
      %p335 = scmp.eq.s32.totalorder %s39, 0
      %p336 = por %p334, %p335
      %p337 = scmp.ne.s32.totalorder %s325, %s326
      %p338 = scmp.eq.s32.totalorder %s40, 1
      %p339 = por %p337, %p338
      %p341 = scmp.ne.s32.totalorder %s326, %s340
      %p342 = scmp.eq.s32.totalorder %s40, 0
      %p343 = por %p341, %p342
      %s345 = sadd.s32 %s344, 1
      %p348 = scmp.eq.s32.totalorder %s34, 1
      %p349 = scmp.ne.s32.totalorder %s344, %s346
      %p350 = scmp.eq.s32.totalorder %s34, 0
      %p351 = por %p349, %p350
      %p352 = scmp.ne.s32.totalorder %s344, %s346
      %p353 = scmp.eq.s32.totalorder %s39, 1
      %p354 = por %p352, %p353
      %p355 = scmp.ne.s32.totalorder %s346, %s347
      %p356 = scmp.eq.s32.totalorder %s39, 0
      %p357 = por %p355, %p356
      %p358 = scmp.ne.s32.totalorder %s346, %s347
      %p359 = scmp.eq.s32.totalorder %s40, 1
      %p360 = por %p358, %p359
      %p362 = scmp.ne.s32.totalorder %s347, %s361
      %p363 = scmp.eq.s32.totalorder %s40, 0
      %p364 = por %p362, %p363
      %s366 = sadd.s32 %s365, 1
      %p369 = scmp.eq.s32.totalorder %s34, 1
      %p370 = scmp.ne.s32.totalorder %s365, %s367
      %p371 = scmp.eq.s32.totalorder %s34, 0
      %p372 = por %p370, %p371
      %p373 = scmp.ne.s32.totalorder %s365, %s367
      %p374 = scmp.eq.s32.totalorder %s39, 1
      %p375 = por %p373, %p374
      %p376 = scmp.ne.s32.totalorder %s367, %s368
      %p377 = scmp.eq.s32.totalorder %s39, 0
      %p378 = por %p376, %p377
      %p379 = scmp.ne.s32.totalorder %s367, %s368
      %p380 = scmp.eq.s32.totalorder %s40, 1
      %p381 = por %p379, %p380
      %p383 = scmp.ne.s32.totalorder %s368, %s382
      %p384 = scmp.eq.s32.totalorder %s40, 0
      %p385 = por %p383, %p384
      %s387 = sadd.s32 %s386, 1
      %p390 = scmp.eq.s32.totalorder %s34, 1
      %p391 = scmp.ne.s32.totalorder %s386, %s388
      %p392 = scmp.eq.s32.totalorder %s34, 0
      %p393 = por %p391, %p392
      %p394 = scmp.ne.s32.totalorder %s386, %s388
      %p395 = scmp.eq.s32.totalorder %s39, 1
      %p396 = por %p394, %p395
      %p397 = scmp.ne.s32.totalorder %s388, %s389
      %p398 = scmp.eq.s32.totalorder %s39, 0
      %p399 = por %p397, %p398
      %p400 = scmp.ne.s32.totalorder %s388, %s389
      %p401 = scmp.eq.s32.totalorder %s40, 1
      %p402 = por %p400, %p401
      %p404 = scmp.ne.s32.totalorder %s389, %s403
      %p405 = scmp.eq.s32.totalorder %s40, 0
      %p406 = por %p404, %p405
      %s408 = sadd.s32 %s407, 1
      %p411 = scmp.eq.s32.totalorder %s34, 1
      %p412 = scmp.ne.s32.totalorder %s407, %s409
      %p413 = scmp.eq.s32.totalorder %s34, 0
      %p414 = por %p412, %p413
      %p415 = scmp.ne.s32.totalorder %s407, %s409
      %p416 = scmp.eq.s32.totalorder %s39, 1
      %p417 = por %p415, %p416
      %p418 = scmp.ne.s32.totalorder %s409, %s410
      %p419 = scmp.eq.s32.totalorder %s39, 0
      %p420 = por %p418, %p419
      %p421 = scmp.ne.s32.totalorder %s409, %s410
      %p422 = scmp.eq.s32.totalorder %s40, 1
      %p423 = por %p421, %p422
      %p425 = scmp.ne.s32.totalorder %s410, %s424
      %p426 = scmp.eq.s32.totalorder %s40, 0
      %p427 = por %p425, %p426
      %s429 = sadd.s32 %s428, 1
      %p432 = scmp.eq.s32.totalorder %s34, 1
      %p433 = scmp.ne.s32.totalorder %s428, %s430
      %p434 = scmp.eq.s32.totalorder %s34, 0
      %p435 = por %p433, %p434
      %p436 = scmp.ne.s32.totalorder %s428, %s430
      %p437 = scmp.eq.s32.totalorder %s39, 1
      %p438 = por %p436, %p437
      %p439 = scmp.ne.s32.totalorder %s430, %s431
      %p440 = scmp.eq.s32.totalorder %s39, 0
      %p441 = por %p439, %p440
      %p442 = scmp.ne.s32.totalorder %s430, %s431
      %p443 = scmp.eq.s32.totalorder %s40, 1
      %p444 = por %p442, %p443
      %p446 = scmp.ne.s32.totalorder %s431, %s445
      %p447 = scmp.eq.s32.totalorder %s40, 0
      %p448 = por %p446, %p447
      %s450 = sadd.s32 %s449, 1
      %p453 = scmp.eq.s32.totalorder %s34, 1
      %p454 = scmp.ne.s32.totalorder %s449, %s451
      %p455 = scmp.eq.s32.totalorder %s34, 0
      %p456 = por %p454, %p455
      %p457 = scmp.ne.s32.totalorder %s449, %s451
      %p458 = scmp.eq.s32.totalorder %s39, 1
      %p459 = por %p457, %p458
      %p460 = scmp.ne.s32.totalorder %s451, %s452
      %p461 = scmp.eq.s32.totalorder %s39, 0
      %p462 = por %p460, %p461
      %p463 = scmp.ne.s32.totalorder %s451, %s452
      %p464 = scmp.eq.s32.totalorder %s40, 1
      %p465 = por %p463, %p464
      %p467 = scmp.ne.s32.totalorder %s452, %s466
      %p468 = scmp.eq.s32.totalorder %s40, 0
      %p469 = por %p467, %p468
      %s470 = ssub.s32 %s41, %s53
      %s471 = ssub.s32 %s42, %s49
      %s472 = sor.u32 %s470, %s471
      %p473 = scmp.eq.s32.totalorder %s472, 0
      %s475 = sadd.s32 %s474, 1
      %s476 = scalar_select %p473, %s474, %s475
      %p479 = pneg %p473
      %p480 = scmp.eq.s32.totalorder %s34, 1
      %p481 = por %p479, %p480
      %p482 = scmp.ne.s32.totalorder %s474, %s477
      %p483 = scmp.eq.s32.totalorder %s34, 0
      %p484 = por %p482, %p483
      %p485 = scmp.ne.s32.totalorder %s474, %s477
      %p486 = scmp.eq.s32.totalorder %s39, 1
      %p487 = por %p485, %p486
      %p488 = scmp.ne.s32.totalorder %s477, %s478
      %p489 = scmp.eq.s32.totalorder %s39, 0
      %p490 = por %p488, %p489
      %p491 = scmp.ne.s32.totalorder %s477, %s478
      %p492 = scmp.eq.s32.totalorder %s40, 1
      %p493 = por %p491, %p492
      %p495 = scmp.ne.s32.totalorder %s478, %s494
      %p496 = scmp.eq.s32.totalorder %s40, 0
      %p497 = por %p495, %p496
      %p498 = scmp.le.s32.totalorder 1, %s34
      %p499 = scmp.lt.s32.totalorder %s34, 3
      %p500 = pnand %p498, %p499
      %p501 = pneg %p500
      // Predicated region
      $region9: #{tpu_custom_call.1} parent=5 // pred_check
        _
      $region10: #{tpu_custom_call.1} parent=5 // pred_check_branch
        %503 = sbr.rel (%p500) target = $region12
      $region11: #{tpu_custom_call.1} parent=5 // pred_region
        %s504 = ssub.s32 %s34, 1
        // Predicated region
        $region13: #{tpu_custom_call.1} parent=11 // pred_check
          %p505 = pneg %p147
        $region14: #{tpu_custom_call.1} parent=11 // pred_check_branch
          %507 = sbr.rel (%p505) target = $region16
        $region15: #{tpu_custom_call.1} parent=11 // pred_region
          _
        $region16: #{tpu_custom_call.1} parent=11 // pred_fallthru
          _
        // Predicated region
        $region17: #{tpu_custom_call.1} parent=11 // pred_check
          %p508 = pneg %p168
        $region18: #{tpu_custom_call.1} parent=11 // pred_check_branch
          %510 = sbr.rel (%p508) target = $region20
        $region19: #{tpu_custom_call.1} parent=11 // pred_region
          _
        $region20: #{tpu_custom_call.1} parent=11 // pred_fallthru
          _
        // Predicated region
        $region21: #{tpu_custom_call.1} parent=11 // pred_check
          %p511 = pneg %p189
        $region22: #{tpu_custom_call.1} parent=11 // pred_check_branch
          %513 = sbr.rel (%p511) target = $region24
        $region23: #{tpu_custom_call.1} parent=11 // pred_region
          _
        $region24: #{tpu_custom_call.1} parent=11 // pred_fallthru
          _
        // Predicated region
        $region25: #{tpu_custom_call.1} parent=11 // pred_check
          %p514 = pneg %p210
        $region26: #{tpu_custom_call.1} parent=11 // pred_check_branch
          %516 = sbr.rel (%p514) target = $region28
        $region27: #{tpu_custom_call.1} parent=11 // pred_region
          _
        $region28: #{tpu_custom_call.1} parent=11 // pred_fallthru
          _
        // Predicated region
        $region29: #{tpu_custom_call.1} parent=11 // pred_check
          %p517 = pneg %p231
        $region30: #{tpu_custom_call.1} parent=11 // pred_check_branch
          %519 = sbr.rel (%p517) target = $region32
        $region31: #{tpu_custom_call.1} parent=11 // pred_region
          _
        $region32: #{tpu_custom_call.1} parent=11 // pred_fallthru
          _
        // Predicated region
        $region33: #{tpu_custom_call.1} parent=11 // pred_check
          %p520 = pneg %p252
        $region34: #{tpu_custom_call.1} parent=11 // pred_check_branch
          %522 = sbr.rel (%p520) target = $region36
        $region35: #{tpu_custom_call.1} parent=11 // pred_region
          _
        $region36: #{tpu_custom_call.1} parent=11 // pred_fallthru
          _
        // Predicated region
        $region37: #{tpu_custom_call.1} parent=11 // pred_check
          %p523 = pneg %p273
        $region38: #{tpu_custom_call.1} parent=11 // pred_check_branch
          %525 = sbr.rel (%p523) target = $region40
        $region39: #{tpu_custom_call.1} parent=11 // pred_region
          _
        $region40: #{tpu_custom_call.1} parent=11 // pred_fallthru
          _
        // Predicated region
        $region41: #{tpu_custom_call.1} parent=11 // pred_check
          %p526 = pneg %p294
        $region42: #{tpu_custom_call.1} parent=11 // pred_check_branch
          %528 = sbr.rel (%p526) target = $region44
        $region43: #{tpu_custom_call.1} parent=11 // pred_region
          _
        $region44: #{tpu_custom_call.1} parent=11 // pred_fallthru
          _
        // Predicated region
        $region45: #{tpu_custom_call.1} parent=11 // pred_check
          %p529 = pneg %p315
        $region46: #{tpu_custom_call.1} parent=11 // pred_check_branch
          %531 = sbr.rel (%p529) target = $region48
        $region47: #{tpu_custom_call.1} parent=11 // pred_region
          _
        $region48: #{tpu_custom_call.1} parent=11 // pred_fallthru
          _
        // Predicated region
        $region49: #{tpu_custom_call.1} parent=11 // pred_check
          %p532 = pneg %p336
        $region50: #{tpu_custom_call.1} parent=11 // pred_check_branch
          %534 = sbr.rel (%p532) target = $region52
        $region51: #{tpu_custom_call.1} parent=11 // pred_region
          _
        $region52: #{tpu_custom_call.1} parent=11 // pred_fallthru
          _
        // Predicated region
        $region53: #{tpu_custom_call.1} parent=11 // pred_check
          %p535 = pneg %p357
        $region54: #{tpu_custom_call.1} parent=11 // pred_check_branch
          %537 = sbr.rel (%p535) target = $region56
        $region55: #{tpu_custom_call.1} parent=11 // pred_region
          %539 = vsyncadd [#allocation8], 0
          %s540 = sshll.u32 %s13, 4
          %s541 = int_to_ptr.hbm [resolvable:$true] %s540
          %s542 = sshll.u32 [#allocation9], 4
          %s543 = int_to_ptr.vmem [resolvable:$true] %s542
          %548 = dma.hbm_to_vmem [thread:$0]  %s541, 256, %s543, [#allocation8], 64, 64, 4
        $region56: #{tpu_custom_call.1} parent=11 // pred_fallthru
          _
        // Predicated region
        $region57: #{tpu_custom_call.1} parent=11 // pred_check
          %p549 = pneg %p378
        $region58: #{tpu_custom_call.1} parent=11 // pred_check_branch
          %551 = sbr.rel (%p549) target = $region60
        $region59: #{tpu_custom_call.1} parent=11 // pred_region
          _
        $region60: #{tpu_custom_call.1} parent=11 // pred_fallthru
          _
        // Predicated region
        $region61: #{tpu_custom_call.1} parent=11 // pred_check
          %p552 = pneg %p399
        $region62: #{tpu_custom_call.1} parent=11 // pred_check_branch
          %554 = sbr.rel (%p552) target = $region64
        $region63: #{tpu_custom_call.1} parent=11 // pred_region
          _
        $region64: #{tpu_custom_call.1} parent=11 // pred_fallthru
          _
        // Predicated region
        $region65: #{tpu_custom_call.1} parent=11 // pred_check
          %p555 = pneg %p420
        $region66: #{tpu_custom_call.1} parent=11 // pred_check_branch
          %557 = sbr.rel (%p555) target = $region68
        $region67: #{tpu_custom_call.1} parent=11 // pred_region
          _
        $region68: #{tpu_custom_call.1} parent=11 // pred_fallthru
          _
        // Predicated region
        $region69: #{tpu_custom_call.1} parent=11 // pred_check
          %p558 = pneg %p441
        $region70: #{tpu_custom_call.1} parent=11 // pred_check_branch
          %560 = sbr.rel (%p558) target = $region72
        $region71: #{tpu_custom_call.1} parent=11 // pred_region
          _
        $region72: #{tpu_custom_call.1} parent=11 // pred_fallthru
          _
        // Predicated region
        $region73: #{tpu_custom_call.1} parent=11 // pred_check
          %p561 = pneg %p462
        $region74: #{tpu_custom_call.1} parent=11 // pred_check_branch
          %563 = sbr.rel (%p561) target = $region76
        $region75: #{tpu_custom_call.1} parent=11 // pred_region
          _
        $region76: #{tpu_custom_call.1} parent=11 // pred_fallthru
          _
      $region12: #{tpu_custom_call.1} parent=5 // pred_fallthru
        _
      %p564 = scmp.lt.s32.totalorder %s34, 2
      // Predicated region
      $region77: #{tpu_custom_call.1} parent=5 // pred_check
        %p565 = pneg %p564
      $region78: #{tpu_custom_call.1} parent=5 // pred_check_branch
        %567 = sbr.rel (%p565) target = $region80
      $region79: #{tpu_custom_call.1} parent=5 // pred_region
        // Predicated region
        $region81: #{tpu_custom_call.1} parent=79 // pred_check
          %p568 = pneg %p66
        $region82: #{tpu_custom_call.1} parent=79 // pred_check_branch
          %570 = sbr.rel (%p568) target = $region84
        $region83: #{tpu_custom_call.1} parent=79 // pred_region
          %s571 = sand.u32 %s56, 1
          %s572 = scalar_lea.sflag [#allocation5], %s571
          %s573 = sand.u32 %s56, 1
          %s574 = smul.addr %s573, 4
          %s575 = scalar_lea.vmem [#allocation4], %s574
          %577 = vsyncadd %s572, 0
          %s578 = smul.addr %s41, 4
          %s579 = scalar_lea.hbm %s0, %s578
          %s581 = sshll.u32 %s579, 4
          %s582 = int_to_ptr.hbm [resolvable:$true] %s581
          %s583 = sshll.u32 %s575, 4
          %s584 = int_to_ptr.vmem [resolvable:$true] %s583
          %586 = dma.hbm_to_vmem [thread:$0]  %s582, 64, %s584, %s572
        $region84: #{tpu_custom_call.1} parent=79 // pred_fallthru
          _
        // Predicated region
        $region85: #{tpu_custom_call.1} parent=79 // pred_check
          %p587 = pneg %p94
        $region86: #{tpu_custom_call.1} parent=79 // pred_check_branch
          %589 = sbr.rel (%p587) target = $region88
        $region87: #{tpu_custom_call.1} parent=79 // pred_region
          %p590 = scmp.lt.s32.totalorder %s41, 1
          %s591 = scalar_select %p590, %s41, 1
          %p592 = scmp.lt.s32.totalorder %s42, 0
          %s593 = scalar_select %p592, %s42, 0
          %s594 = sadd.s32 %s593, %s591
          %s595 = smul.addr %s594, 8
          %s596 = scalar_lea.vmem %s1, %s595
        $region88: #{tpu_custom_call.1} parent=79 // pred_fallthru
          _
        // Predicated region
        $region89: #{tpu_custom_call.1} parent=79 // pred_check
          %p597 = pneg %p120
        $region90: #{tpu_custom_call.1} parent=79 // pred_check_branch
          %599 = sbr.rel (%p597) target = $region92
        $region91: #{tpu_custom_call.1} parent=79 // pred_region
          %s600 = sand.u32 %s34, 1
          %s601 = scalar_lea.sflag [#allocation8], %s600
          %s602 = sand.u32 %s110, 1
          %s603 = scalar_lea.vmem [#allocation7], %s602
          %605 = vsyncadd %s601, 0
          %s606 = scalar_lea.hbm %s2, %s41
          %s608 = sshll.u32 %s606, 4
          %s609 = int_to_ptr.hbm [resolvable:$true] %s608
          %s610 = sshll.u32 %s603, 4
          %s611 = int_to_ptr.vmem [resolvable:$true] %s610
          %613 = dma.hbm_to_vmem [thread:$0]  %s609, 16, %s611, %s601
        $region92: #{tpu_custom_call.1} parent=79 // pred_fallthru
          _
      $region80: #{tpu_custom_call.1} parent=5 // pred_fallthru
        _
      %p614 = scmp.le.s32.totalorder 1, %s34
      %p615 = scmp.lt.s32.totalorder %s34, 3
      %p616 = pnand %p614, %p615
      %p617 = pneg %p616
      // Predicated region
      $region93: #{tpu_custom_call.1} parent=5 // pred_check
        _
      $region94: #{tpu_custom_call.1} parent=5 // pred_check_branch
        %619 = sbr.rel (%p616) target = $region96
      $region95: #{tpu_custom_call.1} parent=5 // pred_region
        %s620 = ssub.s32 %s34, 1
        %s621 = sand.u32 %s59, 1
        %s622 = scalar_lea.sflag [#allocation5], %s621
        %s623 = sand.u32 %s59, 1
        %s624 = smul.addr %s623, 4
        %s625 = scalar_lea.vmem [#allocation4], %s624
        // Predicated region
        $region97: #{tpu_custom_call.1} parent=95 // pred_check
          %p626 = pneg %p72
        $region98: #{tpu_custom_call.1} parent=95 // pred_check_branch
          %628 = sbr.rel (%p626) target = $region100
        $region99: #{tpu_custom_call.1} parent=95 // pred_region
          %630 = dma.done %s622, 64
        $region100: #{tpu_custom_call.1} parent=95 // pred_fallthru
          _
        %s631 = sand.u32 %s39, 1
        %s632 = scalar_lea.sflag [#allocation8], %s631
        %s633 = sand.u32 %s113, 1
        %s634 = scalar_lea.vmem [#allocation7], %s633
        // Predicated region
        $region101: #{tpu_custom_call.1} parent=95 // pred_check
          %p635 = pneg %p126
        $region102: #{tpu_custom_call.1} parent=95 // pred_check_branch
          %637 = sbr.rel (%p635) target = $region104
        $region103: #{tpu_custom_call.1} parent=95 // pred_region
          %639 = dma.done %s632, 16
        $region104: #{tpu_custom_call.1} parent=95 // pred_fallthru
          _
        // Predicated region
        $region105: #{tpu_custom_call.1} parent=95 // pred_check
          %p640 = pneg %p357
        $region106: #{tpu_custom_call.1} parent=95 // pred_check_branch
          %642 = sbr.rel (%p640) target = $region108
        $region107: #{tpu_custom_call.1} parent=95 // pred_region
          %644 = dma.done [#allocation8], 256
        $region108: #{tpu_custom_call.1} parent=95 // pred_fallthru
          _
        %s645 = sand.u32 %s59, 1
        %s646 = scalar_lea.sflag [#allocation5], %s645
        %s647 = sand.u32 %s59, 1
        %s648 = smul.addr %s647, 4
        %s649 = scalar_lea.vmem [#allocation4], %s648
        %p650 = pneg %p72
        %p651 = pneg %p69
        %p652 = scmp.lt.s32.totalorder %s43, 1
        %s653 = scalar_select %p652, %s43, 1
        %p654 = scmp.lt.s32.totalorder %s44, 0
        %s655 = scalar_select %p654, %s44, 0
        %s656 = sadd.s32 %s655, %s653
        %s657 = smul.addr %s656, 8
        %s658 = scalar_lea.vmem %s1, %s657
        %p659 = pneg %p100
        %p660 = pneg %p97
        %s661 = sand.u32 %s39, 1
        %s662 = scalar_lea.sflag [#allocation8], %s661
        %s663 = sand.u32 %s113, 1
        %s664 = scalar_lea.vmem [#allocation7], %s663
        %p665 = pneg %p126
        %p666 = pneg %p123
        %p667 = pneg %p147
        %p668 = pneg %p144
        %p669 = pneg %p168
        %p670 = pneg %p165
        %p671 = pneg %p189
        %p672 = pneg %p186
        %p673 = pneg %p210
        %p674 = pneg %p207
        %p675 = pneg %p231
        %p676 = pneg %p228
        %p677 = pneg %p252
        %p678 = pneg %p249
        %p679 = pneg %p273
        %p680 = pneg %p270
        %p681 = pneg %p294
        %p682 = pneg %p291
        %p683 = pneg %p315
        %p684 = pneg %p312
        %p685 = pneg %p336
        %p686 = pneg %p333
        %p687 = pneg %p357
        %p688 = pneg %p354
        %p689 = pneg %p378
        %p690 = pneg %p375
        %p691 = pneg %p399
        %p692 = pneg %p396
        %p693 = pneg %p420
        %p694 = pneg %p417
        %p695 = pneg %p441
        %p696 = pneg %p438
        %p697 = pneg %p462
        %p698 = pneg %p459
        %p699 = pneg %p490
        %p700 = pneg %p487
        %s701 = sand.u32 %s477, 1
        %s702 = scalar_lea.sflag [#allocation6], %s701
        %s703 = sand.u32 %s477, 1
        %s704 = smul.addr %s703, 8
        %s705 = scalar_lea.vmem [#allocation10], %s704
        %p706 = scmp.lt.s32.totalorder %s43, 1
        %s707 = scalar_select %p706, %s43, 1
        %p708 = scmp.lt.s32.totalorder %s44, 0
        %s709 = scalar_select %p708, %s44, 0
        %s710 = sadd.s32 %s709, %s707
        %s711 = smul.addr %s710, 8
        %s712 = scalar_lea.vmem %s1, %s711
        %p714 = scmp.eq.s32.totalorder %s44, 0
        // Predicated region
        $region109: #{tpu_custom_call.1} parent=95 // pred_check
          %p715 = pneg %p714
        $region110: #{tpu_custom_call.1} parent=95 // pred_check_branch
          %717 = sbr.rel (%p715) target = $region112
        $region111: #{tpu_custom_call.1} parent=95 // pred_region
          %v718 = vld [vmem:[%s625] sm:$0xf]
          %v719 = vld [vmem:[%s5] sm:$0xf]
          %v720 = vld [vmem:[%s5 + $0x4] sm:$0xf]
          %v721 = vld [vmem:[%s5 + $0x8] sm:$0xf]
          %v722 = vld [vmem:[%s5 + $0xc] sm:$0xf]
          %v723 = vld [vmem:[%s6] sm:$0x1]
          %v725 = vperm.slane %v723, 0
          %v731 = vunpack.c.l.b16 %v719
          %v732 = vunpack.c.l.b16 %v720
          %v733 = vunpack.c.l.b16 %v721
          %v734 = vunpack.c.l.b16 %v722
          %v735 = vpack.c.b16 %v732, %v731
          %v736 = vpack.c.b16 %v734, %v733
          %vm739 = vcmask 261120
          %v741 = vsel %vm739, %v718, 0
          %743 = vmatpush.bf16.msra.mxu0 0
          %744 = vmatpush.bf16.msra.mxu0 0
          %745 = vmatpush.bf16.msra.mxu0 0
          %746 = vmatpush.bf16.msra.mxu0 0
          %747 = vmatpush.bf16.msra.mxu0 0
          %748 = vmatpush.bf16.msra.mxu0 0
          %749 = vmatpush.bf16.msra.mxu0 %v736
          %750 = vmatpush.bf16.msra.mxu0 %v735
          %751 = vmatmul.bf16.gmra.mxu0 %v741
          %v752 = vpop.f32.mrf.mxu0
          %v753 = vadd.f32 %v725, %v752
          %v754 = vpop.f32.mrf.mxu0
          %755 = vdwg.mxu0
          %v756 = vld [vmem:[%s7] sm:$0xf]
          %v757 = vld [vmem:[%s7 + $0x4] sm:$0xf]
          %v758 = vld [vmem:[%s7 + $0x8] sm:$0xf]
          %v759 = vld [vmem:[%s7 + $0xc] sm:$0xf]
          %v760 = vld [vmem:[%s8] sm:$0x1]
          %v762 = vperm.slane %v760, 0
          %v768 = vunpack.c.l.b16 %v756
          %v769 = vunpack.c.l.b16 %v757
          %v770 = vunpack.c.l.b16 %v758
          %v771 = vunpack.c.l.b16 %v759
          %v772 = vpack.c.b16 %v769, %v768
          %v773 = vpack.c.b16 %v771, %v770
          %776 = vmatpush.bf16.msra.mxu0 0
          %777 = vmatpush.bf16.msra.mxu0 0
          %778 = vmatpush.bf16.msra.mxu0 0
          %779 = vmatpush.bf16.msra.mxu0 0
          %780 = vmatpush.bf16.msra.mxu0 0
          %781 = vmatpush.bf16.msra.mxu0 0
          %782 = vmatpush.bf16.msra.mxu0 %v773
          %783 = vmatpush.bf16.msra.mxu0 %v772
          %784 = vmatmul.bf16.gmra.mxu0 %v741
          %v785 = vpop.f32.mrf.mxu0
          %v786 = vadd.f32 %v762, %v785
          %v787 = vpop.f32.mrf.mxu0
          %788 = vdwg.mxu0
          %v789 = vpack.c.bf16 %v753, %v753
          %vm790 = vcmask 257024
          %791 = vst.msk [vmem:[#allocation2] sm:$0xf] %vm790, %v789
          %v792 = vpack.c.bf16 %v786, %v786
          %793 = vst.msk [vmem:[#allocation3] sm:$0xf] %vm790, %v792
        $region112: #{tpu_custom_call.1} parent=95 // pred_fallthru
          _
        %v794 = vld [vmem:[%s712] sm:$0xff]
        %v795 = vld [vmem:[%s634] sm:$0x1]
        %v796 = vpack.c.bf16 %v794, %v794
        %v797 = vld [vmem:[%s3] sm:$0xf]
        %v798 = vld [vmem:[%s3 + $0x4] sm:$0xf]
        %v799 = vld [vmem:[%s3 + $0x8] sm:$0xf]
        %v800 = vld [vmem:[%s3 + $0xc] sm:$0xf]
        %v801 = vld [vmem:[%s4] sm:$0x1]
        %v803 = vperm.slane %v801, 0
        %v809 = vunpack.c.l.b16 %v797
        %v810 = vunpack.c.l.b16 %v798
        %v811 = vunpack.c.l.b16 %v799
        %v812 = vunpack.c.l.b16 %v800
        %v813 = vpack.c.b16 %v810, %v809
        %v814 = vpack.c.b16 %v812, %v811
        %vm817 = vcmask 261120
        %v819 = vsel %vm817, %v796, 0
        %821 = vmatpush.bf16.msra.mxu0 0
        %822 = vmatpush.bf16.msra.mxu0 0
        %823 = vmatpush.bf16.msra.mxu0 0
        %824 = vmatpush.bf16.msra.mxu0 0
        %825 = vmatpush.bf16.msra.mxu0 0
        %826 = vmatpush.bf16.msra.mxu0 0
        %827 = vmatpush.bf16.msra.mxu0 %v814
        %828 = vmatpush.bf16.msra.mxu0 %v813
        %829 = vmatmul.bf16.gmra.mxu0 %v819
        %v830 = vpop.f32.mrf.mxu0
        %v831 = vadd.f32 %v803, %v830
        %v832 = vpop.f32.mrf.mxu0
        %833 = vdwg.mxu0
        %v834 = vmul.f32 %v831, 0.17677669
        %v835 = vpack.c.bf16 %v834, %v834
        %v836 = vld [vmem:[#allocation2] sm:$0xf]
        %v838 = vsel %vm817, %v835, 0
        %v841 = vsel %vm817, %v836, 0
        %843 = vmatpush.bf16.xpose.msra.mxu0 0
        %844 = vmatpush.bf16.xpose.msra.mxu0 0
        %845 = vmatpush.bf16.xpose.msra.mxu0 0
        %846 = vmatpush.bf16.xpose.msra.mxu0 0
        %847 = vmatpush.bf16.xpose.msra.mxu0 0
        %848 = vmatpush.bf16.xpose.msra.mxu0 0
        %849 = vmatpush.bf16.xpose.msra.mxu0 0
        %850 = vmatpush.bf16.xpose.msra.mxu0 %v841
        %851 = vmatmul.bf16.gmra.mxu0 %v838
        %v852 = vpop.f32.mrf.mxu0
        %v853 = vadd.f32 0.0, %v852
        %v854 = vpop.f32.mrf.mxu0
        %855 = vdwg.mxu0
        %v857 = vperm.slane %v795, 0
        %v859 = vmul.f32 %v853, %v857
        %vm860 = vcmask 64512
        %v861 = vsel %vm860, %v859, -inf
        %862 = vmax.xlane.f32.xlu0 %v861
        %v863 = vpop.xlane.xlu0 %862
        %v864 = vsub.f32 %v859, %v863
        %v865 = vmul.f32 %v864, 1.442695
        %v866 = vpow.pop %v865
        %v867 = vsel %vm860, %v866, 0.0
        %868 = vadd.xlane.f32.xlu0 %v867
        %v869 = vpop.xlane.xlu0 %868
        %v870 = vrcp.pop %v869
        %v871 = vmul.f32 %v866, %v870
        %v872 = vpack.c.bf16 %v871, %v871
        %v873 = vld [vmem:[#allocation3] sm:$0xf]
        %v875 = vsel %vm860, %v872, 0
        %vm877 = vcmask 1043456
        %v879 = vsel %vm877, %v873, 0
        %881 = vmatpush.bf16.msra.mxu0 0
        %882 = vmatpush.bf16.msra.mxu0 0
        %883 = vmatpush.bf16.msra.mxu0 0
        %884 = vmatpush.bf16.msra.mxu0 0
        %885 = vmatpush.bf16.msra.mxu0 0
        %886 = vmatpush.bf16.msra.mxu0 0
        %887 = vmatpush.bf16.msra.mxu0 0
        %888 = vmatpush.bf16.msra.mxu0 %v879
        %889 = vmatmul.bf16.gmra.mxu0 %v875
        %v890 = vpop.f32.mrf.mxu0
        %v891 = vadd.f32 0.0, %v890
        %v892 = vpop.f32.mrf.mxu0
        %893 = vdwg.mxu0
        %v894 = vpack.c.bf16 %v891, %v891
        %v895 = vld [vmem:[%s9] sm:$0xf]
        %v896 = vld [vmem:[%s9 + $0x4] sm:$0xf]
        %v897 = vld [vmem:[%s9 + $0x8] sm:$0xf]
        %v898 = vld [vmem:[%s9 + $0xc] sm:$0xf]
        %v899 = vld [vmem:[%s10] sm:$0x1]
        %v901 = vperm.slane %v899, 0
        %v907 = vunpack.c.l.b16 %v895
        %v908 = vunpack.c.l.b16 %v896
        %v909 = vunpack.c.l.b16 %v897
        %v910 = vunpack.c.l.b16 %v898
        %v911 = vpack.c.b16 %v908, %v907
        %v912 = vpack.c.b16 %v910, %v909
        %v916 = vsel %vm817, %v894, 0
        %918 = vmatpush.bf16.msra.mxu0 0
        %919 = vmatpush.bf16.msra.mxu0 0
        %920 = vmatpush.bf16.msra.mxu0 0
        %921 = vmatpush.bf16.msra.mxu0 0
        %922 = vmatpush.bf16.msra.mxu0 0
        %923 = vmatpush.bf16.msra.mxu0 0
        %924 = vmatpush.bf16.msra.mxu0 %v912
        %925 = vmatpush.bf16.msra.mxu0 %v911
        %926 = vmatmul.bf16.gmra.mxu0 %v916
        %v927 = vpop.f32.mrf.mxu0
        %v928 = vadd.f32 %v901, %v927
        %v929 = vpop.f32.mrf.mxu0
        %930 = vdwg.mxu0
        %v931 = vadd.f32 %v928, %v794
        %v932 = vld [vmem:[%s11] sm:$0x1]
        %v933 = vld [vmem:[%s12] sm:$0x1]
        %v934 = vsel %vm817, %v931, 0.0
        %935 = vadd.xlane.f32.xlu0 %v934
        %v936 = vpop.xlane.xlu0 %935
        %v937 = vrcp.pop 32.0
        %v938 = vmul.f32 32.0, %v937
        %v939 = vsub.f32 1.0, %v938
        %v940 = vmul.f32 %v937, %v939
        %v941 = vadd.f32 %v937, %v940
        %vm942 = vweird.f32 %v937
        %v943 = vsel %vm942, %v937, %v941
        %v944 = vmul.f32 %v936, %v943
        %v945 = vsub.f32 %v931, %v944
        %v946 = vmul.f32 %v945, %v945
        %v947 = vsel %vm817, %v946, 0.0
        %948 = vadd.xlane.f32.xlu0 %v947
        %v949 = vpop.xlane.xlu0 %948
        %v950 = vmul.f32 %v949, %v943
        %v951 = vadd.f32 %v950, 1e-12
        %v952 = vrsqrt.pop %v951
        %v953 = vmul.f32 %v952, %v951
        %v954 = vmul.f32 %v953, %v952
        %v955 = vmul.f32 0.5, %v954
        %v956 = vsub.f32 1.5, %v955
        %v957 = vmul.f32 %v952, %v956
        %vm958 = vweird.f32 %v951
        %vm959 = vweird.f32 %v952
        %vm960 = vmor %vm958, %vm959
        %v961 = vsel %vm960, %v952, %v957
        %v962 = vmul.f32 %v945, %v961
        %v964 = vperm.slane %v932, 0
        %v966 = vmul.f32 %v962, %v964
        %v968 = vperm.slane %v933, 0
        %v970 = vadd.f32 %v966, %v968
        %v971 = vpack.c.bf16 %v970, %v970
        %v972 = vld [vmem:[#allocation9] sm:$0xf]
        %v973 = vld [vmem:[#allocation9 + $0x4] sm:$0xf]
        %v974 = vld [vmem:[#allocation9 + $0x8] sm:$0xf]
        %v975 = vld [vmem:[#allocation9 + $0xc] sm:$0xf]
        %v976 = vld [vmem:[%s14] sm:$0x1]
        %v978 = vperm.slane %v976, 0
        %v984 = vunpack.c.l.b16 %v972
        %v985 = vunpack.c.l.b16 %v973
        %v986 = vunpack.c.l.b16 %v974
        %v987 = vunpack.c.l.b16 %v975
        %v988 = vpack.c.b16 %v985, %v984
        %v989 = vpack.c.b16 %v987, %v986
        %v993 = vsel %vm817, %v971, 0
        %995 = vmatpush.bf16.msra.mxu0 0
        %996 = vmatpush.bf16.msra.mxu0 0
        %997 = vmatpush.bf16.msra.mxu0 0
        %998 = vmatpush.bf16.msra.mxu0 0
        %999 = vmatpush.bf16.msra.mxu0 0
        %1000 = vmatpush.bf16.msra.mxu0 0
        %1001 = vmatpush.bf16.msra.mxu0 %v989
        %1002 = vmatpush.bf16.msra.mxu0 %v988
        %1003 = vmatmul.bf16.gmra.mxu0 %v993
        %v1004 = vpop.f32.mrf.mxu0
        %v1005 = vadd.f32 %v978, %v1004
        %v1006 = vpop.f32.mrf.mxu0
        %1007 = vdwg.mxu0
        %v1008 = vmul.f32 %v1005, 0.5
        %v1009 = vmul.f32 %v1005, 0.70710677
        %v1010 = vmul.f32 %v1009, %v1009
        %v1011 = vmin.f32 16.0, %v1010
        %v1012 = vmul.f32 %v1011, 2.1237322e-06
        %v1013 = vadd.f32 %v1012, 0.00028619796
        %v1014 = vmul.f32 %v1011, %v1013
        %v1015 = vadd.f32 %v1014, 0.0036580483
        %v1016 = vmul.f32 %v1011, %v1015
        %v1017 = vadd.f32 %v1016, 0.05243302
        %v1018 = vmul.f32 %v1011, %v1017
        %v1019 = vadd.f32 %v1018, 0.18741608
        %v1020 = vmul.f32 %v1011, %v1019
        %v1021 = vadd.f32 %v1020, 1.1283791
        %v1022 = vmul.f32 %v1009, %v1021
        %v1023 = vmul.f32 %v1011, 3.8918573e-05
        %v1024 = vadd.f32 %v1023, 0.001143296
        %v1025 = vmul.f32 %v1011, %v1024
        %v1026 = vadd.f32 %v1025, 0.014752088
        %v1027 = vmul.f32 %v1011, %v1026
        %v1028 = vadd.f32 %v1027, 0.112945676
        %v1029 = vmul.f32 %v1011, %v1028
        %v1030 = vadd.f32 %v1029, 0.4994258
        %v1031 = vmul.f32 %v1011, %v1030
        %v1032 = vadd.f32 %v1031, 1.0
        %v1033 = vrcp.pop %v1032
        %v1034 = vmul.f32 %v1032, %v1033
        %v1035 = vsub.f32 1.0, %v1034
        %v1036 = vmul.f32 %v1033, %v1035
        %v1037 = vadd.f32 %v1033, %v1036
        %vm1038 = vweird.f32 %v1032
        %vm1039 = vweird.f32 %v1033
        %vm1040 = vmor %vm1038, %vm1039
        %v1041 = vsel %vm1040, %v1033, %v1037
        %v1042 = vand.u32 2147483647, %v1032
        %vm1043 = vcmp.eq.f32.partialorder %v1042, 8.507059e+37
        %v1044 = vand.u32 %v1032, 2147483648
        %v1045 = vor.u32 1.1754944e-38, %v1044
        %v1046 = vsel %vm1043, %v1045, %v1041
        %v1047 = vmul.f32 %v1022, %v1046
        %v1048 = vmin.f32 %v1047, 1.0
        %v1049 = vmax.f32 %v1048, -1.0
        %v1050 = vadd.f32 %v1049, 1.0
        %v1051 = vmul.f32 %v1008, %v1050
        %v1052 = vpack.c.bf16 %v1051, %v1051
        %v1053 = vld [vmem:[%s15] sm:$0xf]
        %v1054 = vld [vmem:[%s15 + $0x4] sm:$0xf]
        %v1055 = vld [vmem:[%s15 + $0x8] sm:$0xf]
        %v1056 = vld [vmem:[%s15 + $0xc] sm:$0xf]
        %v1057 = vld [vmem:[%s15 + $0x10] sm:$0xf]
        %v1058 = vld [vmem:[%s15 + $0x14] sm:$0xf]
        %v1059 = vld [vmem:[%s15 + $0x18] sm:$0xf]
        %v1060 = vld [vmem:[%s15 + $0x1c] sm:$0xf]
        %v1061 = vld [vmem:[%s15 + $0x20] sm:$0xf]
        %v1062 = vld [vmem:[%s15 + $0x24] sm:$0xf]
        %v1063 = vld [vmem:[%s15 + $0x28] sm:$0xf]
        %v1064 = vld [vmem:[%s15 + $0x2c] sm:$0xf]
        %v1065 = vld [vmem:[%s15 + $0x30] sm:$0xf]
        %v1066 = vld [vmem:[%s15 + $0x34] sm:$0xf]
        %v1067 = vld [vmem:[%s15 + $0x38] sm:$0xf]
        %v1068 = vld [vmem:[%s15 + $0x3c] sm:$0xf]
        %v1069 = vld [vmem:[%s16] sm:$0x1]
        %v1071 = vperm.slane %v1069, 0
        %v1089 = vunpack.c.l.b16 %v1053
        %v1090 = vunpack.c.l.b16 %v1054
        %v1091 = vunpack.c.l.b16 %v1055
        %v1092 = vunpack.c.l.b16 %v1056
        %v1093 = vunpack.c.l.b16 %v1057
        %v1094 = vunpack.c.l.b16 %v1058
        %v1095 = vunpack.c.l.b16 %v1059
        %v1096 = vunpack.c.l.b16 %v1060
        %v1097 = vunpack.c.l.b16 %v1061
        %v1098 = vunpack.c.l.b16 %v1062
        %v1099 = vunpack.c.l.b16 %v1063
        %v1100 = vunpack.c.l.b16 %v1064
        %v1101 = vunpack.c.l.b16 %v1065
        %v1102 = vunpack.c.l.b16 %v1066
        %v1103 = vunpack.c.l.b16 %v1067
        %v1104 = vunpack.c.l.b16 %v1068
        %v1105 = vpack.c.b16 %v1090, %v1089
        %v1106 = vpack.c.b16 %v1092, %v1091
        %v1107 = vpack.c.b16 %v1094, %v1093
        %v1108 = vpack.c.b16 %v1096, %v1095
        %v1109 = vpack.c.b16 %v1098, %v1097
        %v1110 = vpack.c.b16 %v1100, %v1099
        %v1111 = vpack.c.b16 %v1102, %v1101
        %v1112 = vpack.c.b16 %v1104, %v1103
        %1121 = vmatpush.bf16.msra.mxu0 %v1112
        %1122 = vmatpush.bf16.msra.mxu0 %v1111
        %1123 = vmatpush.bf16.msra.mxu0 %v1110
        %1124 = vmatpush.bf16.msra.mxu0 %v1109
        %1125 = vmatpush.bf16.msra.mxu0 %v1108
        %1126 = vmatpush.bf16.msra.mxu0 %v1107
        %1127 = vmatpush.bf16.msra.mxu0 %v1106
        %1128 = vmatpush.bf16.msra.mxu0 %v1105
        %1129 = vmatmul.bf16.gmra.mxu0 %v1052
        %v1130 = vpop.f32.mrf.mxu0
        %v1131 = vadd.f32 %v1071, %v1130
        %v1132 = vpop.f32.mrf.mxu0
        %1133 = vdwg.mxu0
        %v1134 = vadd.f32 %v1131, %v970
        %v1135 = vld [vmem:[%s17] sm:$0x1]
        %v1136 = vld [vmem:[%s18] sm:$0x1]
        %v1137 = vsel %vm817, %v1134, 0.0
        %1138 = vadd.xlane.f32.xlu0 %v1137
        %v1139 = vpop.xlane.xlu0 %1138
        %v1140 = vmul.f32 %v1139, %v943
        %v1141 = vsub.f32 %v1134, %v1140
        %v1142 = vmul.f32 %v1141, %v1141
        %v1143 = vsel %vm817, %v1142, 0.0
        %1144 = vadd.xlane.f32.xlu0 %v1143
        %v1145 = vpop.xlane.xlu0 %1144
        %v1146 = vmul.f32 %v1145, %v943
        %v1147 = vadd.f32 %v1146, 1e-12
        %v1148 = vrsqrt.pop %v1147
        %v1149 = vmul.f32 %v1148, %v1147
        %v1150 = vmul.f32 %v1149, %v1148
        %v1151 = vmul.f32 0.5, %v1150
        %v1152 = vsub.f32 1.5, %v1151
        %v1153 = vmul.f32 %v1148, %v1152
        %vm1154 = vweird.f32 %v1147
        %vm1155 = vweird.f32 %v1148
        %vm1156 = vmor %vm1154, %vm1155
        %v1157 = vsel %vm1156, %v1148, %v1153
        %v1158 = vmul.f32 %v1141, %v1157
        %v1160 = vperm.slane %v1135, 0
        %v1162 = vmul.f32 %v1158, %v1160
        %v1164 = vperm.slane %v1136, 0
        %v1166 = vadd.f32 %v1162, %v1164
        %1167 = vst.msk [vmem:[%s705] sm:$0xff] %vm817, %v1166
        %s1168 = sand.u32 %s477, 1
        %s1169 = scalar_lea.sflag [#allocation6], %s1168
        %s1170 = sand.u32 %s477, 1
        %s1171 = smul.addr %s1170, 8
        %s1172 = scalar_lea.vmem [#allocation10], %s1171
        // Predicated region
        $region113: #{tpu_custom_call.1} parent=95 // pred_check
          %p1173 = pneg %p487
        $region114: #{tpu_custom_call.1} parent=95 // pred_check_branch
          %1175 = sbr.rel (%p1173) target = $region116
        $region115: #{tpu_custom_call.1} parent=95 // pred_region
          %1177 = vsyncadd %s1169, 0
          %s1178 = sadd.s32 %s44, %s43
          %s1179 = smul.addr %s1178, 8
          %s1180 = scalar_lea.hbm %s19, %s1179
          %s1182 = sshll.u32 %s1172, 4
          %s1183 = int_to_ptr.vmem [resolvable:$true] %s1182
          %s1184 = sshll.u32 %s1180, 4
          %s1185 = int_to_ptr.hbm [resolvable:$true] %s1184
          %1187 = dma.vmem_to_hbm [thread:$0]  %s1183, 128, %s1185, %s1169
        $region116: #{tpu_custom_call.1} parent=95 // pred_fallthru
          _
      $region96: #{tpu_custom_call.1} parent=5 // pred_fallthru
        _
      %p1188 = scmp.le.s32.totalorder 2, %s34
      // Predicated region
      $region117: #{tpu_custom_call.1} parent=5 // pred_check
        %p1189 = pneg %p1188
      $region118: #{tpu_custom_call.1} parent=5 // pred_check_branch
        %1191 = sbr.rel (%p1189) target = $region120
      $region119: #{tpu_custom_call.1} parent=5 // pred_region
        %s1192 = ssub.s32 %s34, 2
        // Predicated region
        $region121: #{tpu_custom_call.1} parent=119 // pred_check
          %p1193 = pneg %p493
        $region122: #{tpu_custom_call.1} parent=119 // pred_check_branch
          %1195 = sbr.rel (%p1193) target = $region124
        $region123: #{tpu_custom_call.1} parent=119 // pred_region
          %s1196 = sand.u32 %s478, 1
          %s1197 = scalar_lea.sflag [#allocation6], %s1196
          %s1198 = sand.u32 %s478, 1
          %s1199 = smul.addr %s1198, 8
          %s1200 = scalar_lea.vmem [#allocation10], %s1199
          %1202 = dma.done %s1197, 128
        $region124: #{tpu_custom_call.1} parent=119 // pred_fallthru
          _
      $region120: #{tpu_custom_call.1} parent=5 // pred_fallthru
        _
    $region6: #{tpu_custom_call.1} parent=1 // loop_footer
      %s38 = sadd.s32 1, %s34
    $region7: #{tpu_custom_call.1} parent=1 // loop_footer_branch
      %33 = sbr.rel target = $region3
    $region8: #{tpu_custom_call.1} parent=1 // loop_exit
      _
    %1203 = vsyncpa [#allocation5], 1
    %s1204 = scalar_lea.sflag [#allocation5], 1
    %1205 = vsyncpa %s1204, 1
    %1206 = vsyncpa [#allocation8], 1
    %s1207 = scalar_lea.sflag [#allocation8], 1
    %1208 = vsyncpa %s1207, 1
    %1209 = vsyncpa [#allocation6], 1
    %s1210 = scalar_lea.sflag [#allocation6], 1
    %1211 = vsyncpa %s1210, 1

// kernel: tpu_custom_call.1
$region0: #{tpu_custom_call.1}
  #allocation0 [shape = 'u32[]', space=smem, size = 0x4, offset = 0x4, fixed_abs, tag = 'smem constant byte address 0x4 - core index']
  #allocation1 [shape = 'u32[72,128]{1,0:T(1,128)}', space=vmem, size = 0x9000, scoped, tag = 'internal scratch']
  #allocation2 [shape = 'bf16[8,32]{1,0:T(8,128)(2,1)}', space=vmem, size = 0x800, scoped, tag = 'scratch operand']
  #allocation3 [shape = 'bf16[8,32]{1,0:T(8,128)(2,1)}', space=vmem, size = 0x800, scoped, tag = 'scratch operand']
  %s0 = inlined_call_operand.hbm [shape: bf16[2,8,32], index: 0, kind: input, shape index: {}]
  %s1 = inlined_call_operand.vmem [shape: f32[2,8,32], index: 1, kind: input, shape index: {}]
  %s2 = inlined_call_operand.hbm [shape: f32[2,1,8], index: 2, kind: input, shape index: {}]
  %s3 = inlined_call_operand.vmem [shape: bf16[32,32], index: 3, kind: input, shape index: {}]
  %s4 = inlined_call_operand.vmem [shape: f32[1,32], index: 4, kind: input, shape index: {}]
  %s5 = inlined_call_operand.vmem [shape: bf16[32,32], index: 5, kind: input, shape index: {}]
  %s6 = inlined_call_operand.vmem [shape: f32[1,32], index: 6, kind: input, shape index: {}]
  %s7 = inlined_call_operand.vmem [shape: bf16[32,32], index: 7, kind: input, shape index: {}]
  %s8 = inlined_call_operand.vmem [shape: f32[1,32], index: 8, kind: input, shape index: {}]
  %s9 = inlined_call_operand.vmem [shape: bf16[32,32], index: 9, kind: input, shape index: {}]
  %s10 = inlined_call_operand.vmem [shape: f32[1,32], index: 10, kind: input, shape index: {}]
  %s11 = inlined_call_operand.vmem [shape: f32[1,32], index: 11, kind: input, shape index: {}]
  %s12 = inlined_call_operand.vmem [shape: f32[1,32], index: 12, kind: input, shape index: {}]
  %s13 = inlined_call_operand.hbm [shape: bf16[32,128], index: 13, kind: input, shape index: {}]
  %s14 = inlined_call_operand.vmem [shape: f32[1,128], index: 14, kind: input, shape index: {}]
  %s15 = inlined_call_operand.vmem [shape: bf16[128,32], index: 15, kind: input, shape index: {}]
  %s16 = inlined_call_operand.vmem [shape: f32[1,32], index: 16, kind: input, shape index: {}]
  %s17 = inlined_call_operand.vmem [shape: f32[1,32], index: 17, kind: input, shape index: {}]
  %s18 = inlined_call_operand.vmem [shape: f32[1,32], index: 18, kind: input, shape index: {}]
  %s19 = inlined_call_operand.hbm [shape: f32[2,8,32], index: 19, kind: output, shape index: {}]
  %s20 = sld [smem:[#allocation0]]
  $region125: #{tpu_custom_call.1} parent=0
    _
  %s22 = ssub.s32 1, %s20
  %s23 = scalar_select 0, %s22, %s20
  $region1: #{tpu_custom_call.1} parent=0
    #allocation4 [shape = 'u8[4096]{0}', space=vmem, size = 0x1000, scoped, tag = 'input window, operand 0']
    #allocation5 [shape = 's32[2]{0}', space=sflag, size = 0x8, scoped, tag = 'scoped memory for tpu_custom_call.1']
    #allocation6 [shape = 's32[2]{0}', space=sflag, size = 0x8, scoped, tag = 'scoped memory for tpu_custom_call.1']
    #allocation7 [shape = 'u8[1024]{0}', space=vmem, size = 0x400, scoped, tag = 'input window, operand 2']
    #allocation8 [shape = 's32[2]{0}', space=sflag, size = 0x8, scoped, tag = 'scoped memory for tpu_custom_call.1']
    #allocation9 [shape = 'u8[8192]{0}', space=vmem, size = 0x2000, scoped, tag = 'input window, operand 13, single buffered']
    #allocation10 [shape = 'u8[8192]{0}', space=vmem, size = 0x2000, scoped, tag = 'output window, operand 0']
    %24 = vsyncpa [#allocation5], 0
    %s25 = scalar_lea.sflag [#allocation5], 1
    %26 = vsyncpa %s25, 0
    %27 = vsyncpa [#allocation8], 0
    %s28 = scalar_lea.sflag [#allocation8], 1
    %29 = vsyncpa %s28, 0
    %30 = vsyncpa [#allocation6], 0
    %s31 = scalar_lea.sflag [#allocation6], 1
    %32 = vsyncpa %s31, 0
    loop: start=0, step=1, limit=4
    $region2: #{tpu_custom_call.1} parent=1 // loop_pre_header
      _
    $region3: #{tpu_custom_call.1} parent=1 // loop_header
      %s34 = sphi 0, %s38
      %p35 = scmp.ge.s32.totalorder %s34, 4
      %s41 = sphi 0, %s53
      %s42 = sphi 0, %s49
      %s43 = sphi 0, %s41
      %s44 = sphi 0, %s42
      %s45 = sphi 0, %s43
      %s46 = sphi 0, %s44
      %s56 = sphi 0, %s58
      %s59 = sphi 0, %s56
      %s60 = sphi 0, %s59
      %s76 = sphi 0, %s60
      %s84 = sphi 0, %s86
      %s87 = sphi 0, %s84
      %s88 = sphi 0, %s87
      %s104 = sphi 0, %s88
      %s110 = sphi 0, %s112
      %s113 = sphi 0, %s110
      %s114 = sphi 0, %s113
      %s130 = sphi 0, %s114
      %s134 = sphi 0, %s134
      %s136 = sphi 0, %s134
      %s137 = sphi 0, %s136
      %s151 = sphi 0, %s137
      %s155 = sphi 0, %s155
      %s157 = sphi 0, %s155
      %s158 = sphi 0, %s157
      %s172 = sphi 0, %s158
      %s176 = sphi 0, %s176
      %s178 = sphi 0, %s176
      %s179 = sphi 0, %s178
      %s193 = sphi 0, %s179
      %s197 = sphi 0, %s197
      %s199 = sphi 0, %s197
      %s200 = sphi 0, %s199
      %s214 = sphi 0, %s200
      %s218 = sphi 0, %s218
      %s220 = sphi 0, %s218
      %s221 = sphi 0, %s220
      %s235 = sphi 0, %s221
      %s239 = sphi 0, %s239
      %s241 = sphi 0, %s239
      %s242 = sphi 0, %s241
      %s256 = sphi 0, %s242
      %s260 = sphi 0, %s260
      %s262 = sphi 0, %s260
      %s263 = sphi 0, %s262
      %s277 = sphi 0, %s263
      %s281 = sphi 0, %s281
      %s283 = sphi 0, %s281
      %s284 = sphi 0, %s283
      %s298 = sphi 0, %s284
      %s302 = sphi 0, %s302
      %s304 = sphi 0, %s302
      %s305 = sphi 0, %s304
      %s319 = sphi 0, %s305
      %s323 = sphi 0, %s323
      %s325 = sphi 0, %s323
      %s326 = sphi 0, %s325
      %s340 = sphi 0, %s326
      %s344 = sphi 0, %s344
      %s346 = sphi 0, %s344
      %s347 = sphi 0, %s346
      %s361 = sphi 0, %s347
      %s365 = sphi 0, %s365
      %s367 = sphi 0, %s365
      %s368 = sphi 0, %s367
      %s382 = sphi 0, %s368
      %s386 = sphi 0, %s386
      %s388 = sphi 0, %s386
      %s389 = sphi 0, %s388
      %s403 = sphi 0, %s389
      %s407 = sphi 0, %s407
      %s409 = sphi 0, %s407
      %s410 = sphi 0, %s409
      %s424 = sphi 0, %s410
      %s428 = sphi 0, %s428
      %s430 = sphi 0, %s428
      %s431 = sphi 0, %s430
      %s445 = sphi 0, %s431
      %s449 = sphi 0, %s449
      %s451 = sphi 0, %s449
      %s452 = sphi 0, %s451
      %s466 = sphi 0, %s452
      %s474 = sphi 0, %s476
      %s477 = sphi 0, %s474
      %s478 = sphi 0, %s477
      %s494 = sphi 0, %s478
    $region4: #{tpu_custom_call.1} parent=1 // loop_header_branch
      %37 = sbr.rel (%p35) target = $region8
    $region5: #{tpu_custom_call.1} parent=1 // loop_body
      %s39 = ssub.s32 %s34, 1
      %s40 = ssub.s32 %s34, 2
      %s47 = sadd.s32 1, %s42
      %p48 = scmp.ge.s32.totalorder %s47, 1
      %s49 = scalar_select %p48, 0, %s47
      %s50 = sadd.s32 1, %s41
      %s51 = scalar_select %p48, %s50, %s41
      %p52 = scmp.ge.s32.totalorder %s51, 2
      %s53 = scalar_select %p52, 0, %s51
      %s54 = ssub.s32 %s41, %s53
      %p55 = scmp.eq.s32.totalorder %s54, 0
      %s57 = sadd.s32 %s56, 1
      %s58 = scalar_select %p55, %s56, %s57
      %p61 = pneg %p55
      %p62 = scmp.eq.s32.totalorder %s34, 1
      %p63 = por %p61, %p62
      %p64 = scmp.ne.s32.totalorder %s56, %s59
      %p65 = scmp.eq.s32.totalorder %s34, 0
      %p66 = por %p64, %p65
      %p67 = scmp.ne.s32.totalorder %s56, %s59
      %p68 = scmp.eq.s32.totalorder %s39, 1
      %p69 = por %p67, %p68
      %p70 = scmp.ne.s32.totalorder %s59, %s60
      %p71 = scmp.eq.s32.totalorder %s39, 0
      %p72 = por %p70, %p71
      %p73 = scmp.ne.s32.totalorder %s59, %s60
      %p74 = scmp.eq.s32.totalorder %s40, 1
      %p75 = por %p73, %p74
      %p77 = scmp.ne.s32.totalorder %s60, %s76
      %p78 = scmp.eq.s32.totalorder %s40, 0
      %p79 = por %p77, %p78
      %s80 = ssub.s32 %s41, %s53
      %s81 = ssub.s32 %s42, %s49
      %s82 = sor.u32 %s80, %s81
      %p83 = scmp.eq.s32.totalorder %s82, 0
      %s85 = sadd.s32 %s84, 1
      %s86 = scalar_select %p83, %s84, %s85
      %p89 = pneg %p83
      %p90 = scmp.eq.s32.totalorder %s34, 1
      %p91 = por %p89, %p90
      %p92 = scmp.ne.s32.totalorder %s84, %s87
      %p93 = scmp.eq.s32.totalorder %s34, 0
      %p94 = por %p92, %p93
      %p95 = scmp.ne.s32.totalorder %s84, %s87
      %p96 = scmp.eq.s32.totalorder %s39, 1
      %p97 = por %p95, %p96
      %p98 = scmp.ne.s32.totalorder %s87, %s88
      %p99 = scmp.eq.s32.totalorder %s39, 0
      %p100 = por %p98, %p99
      %p101 = scmp.ne.s32.totalorder %s87, %s88
      %p102 = scmp.eq.s32.totalorder %s40, 1
      %p103 = por %p101, %p102
      %p105 = scmp.ne.s32.totalorder %s88, %s104
      %p106 = scmp.eq.s32.totalorder %s40, 0
      %p107 = por %p105, %p106
      %s108 = ssub.s32 %s41, %s53
      %p109 = scmp.eq.s32.totalorder %s108, 0
      %s111 = sadd.s32 %s110, 1
      %s112 = scalar_select %p109, %s110, %s111
      %p115 = pneg %p109
      %p116 = scmp.eq.s32.totalorder %s34, 1
      %p117 = por %p115, %p116
      %p118 = scmp.ne.s32.totalorder %s110, %s113
      %p119 = scmp.eq.s32.totalorder %s34, 0
      %p120 = por %p118, %p119
      %p121 = scmp.ne.s32.totalorder %s110, %s113
      %p122 = scmp.eq.s32.totalorder %s39, 1
      %p123 = por %p121, %p122
      %p124 = scmp.ne.s32.totalorder %s113, %s114
      %p125 = scmp.eq.s32.totalorder %s39, 0
      %p126 = por %p124, %p125
      %p127 = scmp.ne.s32.totalorder %s113, %s114
      %p128 = scmp.eq.s32.totalorder %s40, 1
      %p129 = por %p127, %p128
      %p131 = scmp.ne.s32.totalorder %s114, %s130
      %p132 = scmp.eq.s32.totalorder %s40, 0
      %p133 = por %p131, %p132
      %s135 = sadd.s32 %s134, 1
      %p138 = scmp.eq.s32.totalorder %s34, 1
      %p139 = scmp.ne.s32.totalorder %s134, %s136
      %p140 = scmp.eq.s32.totalorder %s34, 0
      %p141 = por %p139, %p140
      %p142 = scmp.ne.s32.totalorder %s134, %s136
      %p143 = scmp.eq.s32.totalorder %s39, 1
      %p144 = por %p142, %p143
      %p145 = scmp.ne.s32.totalorder %s136, %s137
      %p146 = scmp.eq.s32.totalorder %s39, 0
      %p147 = por %p145, %p146
      %p148 = scmp.ne.s32.totalorder %s136, %s137
      %p149 = scmp.eq.s32.totalorder %s40, 1
      %p150 = por %p148, %p149
      %p152 = scmp.ne.s32.totalorder %s137, %s151
      %p153 = scmp.eq.s32.totalorder %s40, 0
      %p154 = por %p152, %p153
      %s156 = sadd.s32 %s155, 1
      %p159 = scmp.eq.s32.totalorder %s34, 1
      %p160 = scmp.ne.s32.totalorder %s155, %s157
      %p161 = scmp.eq.s32.totalorder %s34, 0
      %p162 = por %p160, %p161
      %p163 = scmp.ne.s32.totalorder %s155, %s157
      %p164 = scmp.eq.s32.totalorder %s39, 1
      %p165 = por %p163, %p164
      %p166 = scmp.ne.s32.totalorder %s157, %s158
      %p167 = scmp.eq.s32.totalorder %s39, 0
      %p168 = por %p166, %p167
      %p169 = scmp.ne.s32.totalorder %s157, %s158
      %p170 = scmp.eq.s32.totalorder %s40, 1
      %p171 = por %p169, %p170
      %p173 = scmp.ne.s32.totalorder %s158, %s172
      %p174 = scmp.eq.s32.totalorder %s40, 0
      %p175 = por %p173, %p174
      %s177 = sadd.s32 %s176, 1
      %p180 = scmp.eq.s32.totalorder %s34, 1
      %p181 = scmp.ne.s32.totalorder %s176, %s178
      %p182 = scmp.eq.s32.totalorder %s34, 0
      %p183 = por %p181, %p182
      %p184 = scmp.ne.s32.totalorder %s176, %s178
      %p185 = scmp.eq.s32.totalorder %s39, 1
      %p186 = por %p184, %p185
      %p187 = scmp.ne.s32.totalorder %s178, %s179
      %p188 = scmp.eq.s32.totalorder %s39, 0
      %p189 = por %p187, %p188
      %p190 = scmp.ne.s32.totalorder %s178, %s179
      %p191 = scmp.eq.s32.totalorder %s40, 1
      %p192 = por %p190, %p191
      %p194 = scmp.ne.s32.totalorder %s179, %s193
      %p195 = scmp.eq.s32.totalorder %s40, 0
      %p196 = por %p194, %p195
      %s198 = sadd.s32 %s197, 1
      %p201 = scmp.eq.s32.totalorder %s34, 1
      %p202 = scmp.ne.s32.totalorder %s197, %s199
      %p203 = scmp.eq.s32.totalorder %s34, 0
      %p204 = por %p202, %p203
      %p205 = scmp.ne.s32.totalorder %s197, %s199
      %p206 = scmp.eq.s32.totalorder %s39, 1
      %p207 = por %p205, %p206
      %p208 = scmp.ne.s32.totalorder %s199, %s200
      %p209 = scmp.eq.s32.totalorder %s39, 0
      %p210 = por %p208, %p209
      %p211 = scmp.ne.s32.totalorder %s199, %s200
      %p212 = scmp.eq.s32.totalorder %s40, 1
      %p213 = por %p211, %p212
      %p215 = scmp.ne.s32.totalorder %s200, %s214
      %p216 = scmp.eq.s32.totalorder %s40, 0
      %p217 = por %p215, %p216
      %s219 = sadd.s32 %s218, 1
      %p222 = scmp.eq.s32.totalorder %s34, 1
      %p223 = scmp.ne.s32.totalorder %s218, %s220
      %p224 = scmp.eq.s32.totalorder %s34, 0
      %p225 = por %p223, %p224
      %p226 = scmp.ne.s32.totalorder %s218, %s220
      %p227 = scmp.eq.s32.totalorder %s39, 1
      %p228 = por %p226, %p227
      %p229 = scmp.ne.s32.totalorder %s220, %s221
      %p230 = scmp.eq.s32.totalorder %s39, 0
      %p231 = por %p229, %p230
      %p232 = scmp.ne.s32.totalorder %s220, %s221
      %p233 = scmp.eq.s32.totalorder %s40, 1
      %p234 = por %p232, %p233
      %p236 = scmp.ne.s32.totalorder %s221, %s235
      %p237 = scmp.eq.s32.totalorder %s40, 0
      %p238 = por %p236, %p237
      %s240 = sadd.s32 %s239, 1
      %p243 = scmp.eq.s32.totalorder %s34, 1
      %p244 = scmp.ne.s32.totalorder %s239, %s241
      %p245 = scmp.eq.s32.totalorder %s34, 0
      %p246 = por %p244, %p245
      %p247 = scmp.ne.s32.totalorder %s239, %s241
      %p248 = scmp.eq.s32.totalorder %s39, 1
      %p249 = por %p247, %p248
      %p250 = scmp.ne.s32.totalorder %s241, %s242
      %p251 = scmp.eq.s32.totalorder %s39, 0
      %p252 = por %p250, %p251
      %p253 = scmp.ne.s32.totalorder %s241, %s242
      %p254 = scmp.eq.s32.totalorder %s40, 1
      %p255 = por %p253, %p254
      %p257 = scmp.ne.s32.totalorder %s242, %s256
      %p258 = scmp.eq.s32.totalorder %s40, 0
      %p259 = por %p257, %p258
      %s261 = sadd.s32 %s260, 1
      %p264 = scmp.eq.s32.totalorder %s34, 1
      %p265 = scmp.ne.s32.totalorder %s260, %s262
      %p266 = scmp.eq.s32.totalorder %s34, 0
      %p267 = por %p265, %p266
      %p268 = scmp.ne.s32.totalorder %s260, %s262
      %p269 = scmp.eq.s32.totalorder %s39, 1
      %p270 = por %p268, %p269
      %p271 = scmp.ne.s32.totalorder %s262, %s263
      %p272 = scmp.eq.s32.totalorder %s39, 0
      %p273 = por %p271, %p272
      %p274 = scmp.ne.s32.totalorder %s262, %s263
      %p275 = scmp.eq.s32.totalorder %s40, 1
      %p276 = por %p274, %p275
      %p278 = scmp.ne.s32.totalorder %s263, %s277
      %p279 = scmp.eq.s32.totalorder %s40, 0
      %p280 = por %p278, %p279
      %s282 = sadd.s32 %s281, 1
      %p285 = scmp.eq.s32.totalorder %s34, 1
      %p286 = scmp.ne.s32.totalorder %s281, %s283
      %p287 = scmp.eq.s32.totalorder %s34, 0
      %p288 = por %p286, %p287
      %p289 = scmp.ne.s32.totalorder %s281, %s283
      %p290 = scmp.eq.s32.totalorder %s39, 1
      %p291 = por %p289, %p290
      %p292 = scmp.ne.s32.totalorder %s283, %s284
      %p293 = scmp.eq.s32.totalorder %s39, 0
      %p294 = por %p292, %p293
      %p295 = scmp.ne.s32.totalorder %s283, %s284
      %p296 = scmp.eq.s32.totalorder %s40, 1
      %p297 = por %p295, %p296
      %p299 = scmp.ne.s32.totalorder %s284, %s298
      %p300 = scmp.eq.s32.totalorder %s40, 0
      %p301 = por %p299, %p300
      %s303 = sadd.s32 %s302, 1
      %p306 = scmp.eq.s32.totalorder %s34, 1
      %p307 = scmp.ne.s32.totalorder %s302, %s304
      %p308 = scmp.eq.s32.totalorder %s34, 0
      %p309 = por %p307, %p308
      %p310 = scmp.ne.s32.totalorder %s302, %s304
      %p311 = scmp.eq.s32.totalorder %s39, 1
      %p312 = por %p310, %p311
      %p313 = scmp.ne.s32.totalorder %s304, %s305
      %p314 = scmp.eq.s32.totalorder %s39, 0
      %p315 = por %p313, %p314
      %p316 = scmp.ne.s32.totalorder %s304, %s305
      %p317 = scmp.eq.s32.totalorder %s40, 1
      %p318 = por %p316, %p317
      %p320 = scmp.ne.s32.totalorder %s305, %s319
      %p321 = scmp.eq.s32.totalorder %s40, 0
      %p322 = por %p320, %p321
      %s324 = sadd.s32 %s323, 1
      %p327 = scmp.eq.s32.totalorder %s34, 1
      %p328 = scmp.ne.s32.totalorder %s323, %s325
      %p329 = scmp.eq.s32.totalorder %s34, 0
      %p330 = por %p328, %p329
      %p331 = scmp.ne.s32.totalorder %s323, %s325
      %p332 = scmp.eq.s32.totalorder %s39, 1
      %p333 = por %p331, %p332
      %p334 = scmp.ne.s32.totalorder %s325, %s326
      %p335 = scmp.eq.s32.totalorder %s39, 0
      %p336 = por %p334, %p335
      %p337 = scmp.ne.s32.totalorder %s325, %s326
      %p338 = scmp.eq.s32.totalorder %s40, 1
      %p339 = por %p337, %p338
      %p341 = scmp.ne.s32.totalorder %s326, %s340
      %p342 = scmp.eq.s32.totalorder %s40, 0
      %p343 = por %p341, %p342
      %s345 = sadd.s32 %s344, 1
      %p348 = scmp.eq.s32.totalorder %s34, 1
      %p349 = scmp.ne.s32.totalorder %s344, %s346
      %p350 = scmp.eq.s32.totalorder %s34, 0
      %p351 = por %p349, %p350
      %p352 = scmp.ne.s32.totalorder %s344, %s346
      %p353 = scmp.eq.s32.totalorder %s39, 1
      %p354 = por %p352, %p353
      %p355 = scmp.ne.s32.totalorder %s346, %s347
      %p356 = scmp.eq.s32.totalorder %s39, 0
      %p357 = por %p355, %p356
      %p358 = scmp.ne.s32.totalorder %s346, %s347
      %p359 = scmp.eq.s32.totalorder %s40, 1
      %p360 = por %p358, %p359
      %p362 = scmp.ne.s32.totalorder %s347, %s361
      %p363 = scmp.eq.s32.totalorder %s40, 0
      %p364 = por %p362, %p363
      %s366 = sadd.s32 %s365, 1
      %p369 = scmp.eq.s32.totalorder %s34, 1
      %p370 = scmp.ne.s32.totalorder %s365, %s367
      %p371 = scmp.eq.s32.totalorder %s34, 0
      %p372 = por %p370, %p371
      %p373 = scmp.ne.s32.totalorder %s365, %s367
      %p374 = scmp.eq.s32.totalorder %s39, 1
      %p375 = por %p373, %p374
      %p376 = scmp.ne.s32.totalorder %s367, %s368
      %p377 = scmp.eq.s32.totalorder %s39, 0
      %p378 = por %p376, %p377
      %p379 = scmp.ne.s32.totalorder %s367, %s368
      %p380 = scmp.eq.s32.totalorder %s40, 1
      %p381 = por %p379, %p380
      %p383 = scmp.ne.s32.totalorder %s368, %s382
      %p384 = scmp.eq.s32.totalorder %s40, 0
      %p385 = por %p383, %p384
      %s387 = sadd.s32 %s386, 1
      %p390 = scmp.eq.s32.totalorder %s34, 1
      %p391 = scmp.ne.s32.totalorder %s386, %s388
      %p392 = scmp.eq.s32.totalorder %s34, 0
      %p393 = por %p391, %p392
      %p394 = scmp.ne.s32.totalorder %s386, %s388
      %p395 = scmp.eq.s32.totalorder %s39, 1
      %p396 = por %p394, %p395
      %p397 = scmp.ne.s32.totalorder %s388, %s389
      %p398 = scmp.eq.s32.totalorder %s39, 0
      %p399 = por %p397, %p398
      %p400 = scmp.ne.s32.totalorder %s388, %s389
      %p401 = scmp.eq.s32.totalorder %s40, 1
      %p402 = por %p400, %p401
      %p404 = scmp.ne.s32.totalorder %s389, %s403
      %p405 = scmp.eq.s32.totalorder %s40, 0
      %p406 = por %p404, %p405
      %s408 = sadd.s32 %s407, 1
      %p411 = scmp.eq.s32.totalorder %s34, 1
      %p412 = scmp.ne.s32.totalorder %s407, %s409
      %p413 = scmp.eq.s32.totalorder %s34, 0
      %p414 = por %p412, %p413
      %p415 = scmp.ne.s32.totalorder %s407, %s409
      %p416 = scmp.eq.s32.totalorder %s39, 1
      %p417 = por %p415, %p416
      %p418 = scmp.ne.s32.totalorder %s409, %s410
      %p419 = scmp.eq.s32.totalorder %s39, 0
      %p420 = por %p418, %p419
      %p421 = scmp.ne.s32.totalorder %s409, %s410
      %p422 = scmp.eq.s32.totalorder %s40, 1
      %p423 = por %p421, %p422
      %p425 = scmp.ne.s32.totalorder %s410, %s424
      %p426 = scmp.eq.s32.totalorder %s40, 0
      %p427 = por %p425, %p426
      %s429 = sadd.s32 %s428, 1
      %p432 = scmp.eq.s32.totalorder %s34, 1
      %p433 = scmp.ne.s32.totalorder %s428, %s430
      %p434 = scmp.eq.s32.totalorder %s34, 0
      %p435 = por %p433, %p434
      %p436 = scmp.ne.s32.totalorder %s428, %s430
      %p437 = scmp.eq.s32.totalorder %s39, 1
      %p438 = por %p436, %p437
      %p439 = scmp.ne.s32.totalorder %s430, %s431
      %p440 = scmp.eq.s32.totalorder %s39, 0
      %p441 = por %p439, %p440
      %p442 = scmp.ne.s32.totalorder %s430, %s431
      %p443 = scmp.eq.s32.totalorder %s40, 1
      %p444 = por %p442, %p443
      %p446 = scmp.ne.s32.totalorder %s431, %s445
      %p447 = scmp.eq.s32.totalorder %s40, 0
      %p448 = por %p446, %p447
      %s450 = sadd.s32 %s449, 1
      %p453 = scmp.eq.s32.totalorder %s34, 1
      %p454 = scmp.ne.s32.totalorder %s449, %s451
      %p455 = scmp.eq.s32.totalorder %s34, 0
      %p456 = por %p454, %p455
      %p457 = scmp.ne.s32.totalorder %s449, %s451
      %p458 = scmp.eq.s32.totalorder %s39, 1
      %p459 = por %p457, %p458
      %p460 = scmp.ne.s32.totalorder %s451, %s452
      %p461 = scmp.eq.s32.totalorder %s39, 0
      %p462 = por %p460, %p461
      %p463 = scmp.ne.s32.totalorder %s451, %s452
      %p464 = scmp.eq.s32.totalorder %s40, 1
      %p465 = por %p463, %p464
      %p467 = scmp.ne.s32.totalorder %s452, %s466
      %p468 = scmp.eq.s32.totalorder %s40, 0
      %p469 = por %p467, %p468
      %s470 = ssub.s32 %s41, %s53
      %s471 = ssub.s32 %s42, %s49
      %s472 = sor.u32 %s470, %s471
      %p473 = scmp.eq.s32.totalorder %s472, 0
      %s475 = sadd.s32 %s474, 1
      %s476 = scalar_select %p473, %s474, %s475
      %p479 = pneg %p473
      %p480 = scmp.eq.s32.totalorder %s34, 1
      %p481 = por %p479, %p480
      %p482 = scmp.ne.s32.totalorder %s474, %s477
      %p483 = scmp.eq.s32.totalorder %s34, 0
      %p484 = por %p482, %p483
      %p485 = scmp.ne.s32.totalorder %s474, %s477
      %p486 = scmp.eq.s32.totalorder %s39, 1
      %p487 = por %p485, %p486
      %p488 = scmp.ne.s32.totalorder %s477, %s478
      %p489 = scmp.eq.s32.totalorder %s39, 0
      %p490 = por %p488, %p489
      %p491 = scmp.ne.s32.totalorder %s477, %s478
      %p492 = scmp.eq.s32.totalorder %s40, 1
      %p493 = por %p491, %p492
      %p495 = scmp.ne.s32.totalorder %s478, %s494
      %p496 = scmp.eq.s32.totalorder %s40, 0
      %p497 = por %p495, %p496
      %p498 = scmp.le.s32.totalorder 1, %s34
      %p499 = scmp.lt.s32.totalorder %s34, 3
      %p500 = pnand %p498, %p499
      %p501 = pneg %p500
      // Predicated region
      $region9: #{tpu_custom_call.1} parent=5 // pred_check
        _
      $region10: #{tpu_custom_call.1} parent=5 // pred_check_branch
        %503 = sbr.rel (%p500) target = $region12
      $region11: #{tpu_custom_call.1} parent=5 // pred_region
        %s504 = ssub.s32 %s34, 1
        // Predicated region
        $region13: #{tpu_custom_call.1} parent=11 // pred_check
          %p505 = pneg %p147
        $region14: #{tpu_custom_call.1} parent=11 // pred_check_branch
          %507 = sbr.rel (%p505) target = $region16
        $region15: #{tpu_custom_call.1} parent=11 // pred_region
          _
        $region16: #{tpu_custom_call.1} parent=11 // pred_fallthru
          _
        // Predicated region
        $region17: #{tpu_custom_call.1} parent=11 // pred_check
          %p508 = pneg %p168
        $region18: #{tpu_custom_call.1} parent=11 // pred_check_branch
          %510 = sbr.rel (%p508) target = $region20
        $region19: #{tpu_custom_call.1} parent=11 // pred_region
          _
        $region20: #{tpu_custom_call.1} parent=11 // pred_fallthru
          _
        // Predicated region
        $region21: #{tpu_custom_call.1} parent=11 // pred_check
          %p511 = pneg %p189
        $region22: #{tpu_custom_call.1} parent=11 // pred_check_branch
          %513 = sbr.rel (%p511) target = $region24
        $region23: #{tpu_custom_call.1} parent=11 // pred_region
          _
        $region24: #{tpu_custom_call.1} parent=11 // pred_fallthru
          _
        // Predicated region
        $region25: #{tpu_custom_call.1} parent=11 // pred_check
          %p514 = pneg %p210
        $region26: #{tpu_custom_call.1} parent=11 // pred_check_branch
          %516 = sbr.rel (%p514) target = $region28
        $region27: #{tpu_custom_call.1} parent=11 // pred_region
          _
        $region28: #{tpu_custom_call.1} parent=11 // pred_fallthru
          _
        // Predicated region
        $region29: #{tpu_custom_call.1} parent=11 // pred_check
          %p517 = pneg %p231
        $region30: #{tpu_custom_call.1} parent=11 // pred_check_branch
          %519 = sbr.rel (%p517) target = $region32
        $region31: #{tpu_custom_call.1} parent=11 // pred_region
          _
        $region32: #{tpu_custom_call.1} parent=11 // pred_fallthru
          _
        // Predicated region
        $region33: #{tpu_custom_call.1} parent=11 // pred_check
          %p520 = pneg %p252
        $region34: #{tpu_custom_call.1} parent=11 // pred_check_branch
          %522 = sbr.rel (%p520) target = $region36
        $region35: #{tpu_custom_call.1} parent=11 // pred_region
          _
        $region36: #{tpu_custom_call.1} parent=11 // pred_fallthru
          _
        // Predicated region
        $region37: #{tpu_custom_call.1} parent=11 // pred_check
          %p523 = pneg %p273
        $region38: #{tpu_custom_call.1} parent=11 // pred_check_branch
          %525 = sbr.rel (%p523) target = $region40
        $region39: #{tpu_custom_call.1} parent=11 // pred_region
          _
        $region40: #{tpu_custom_call.1} parent=11 // pred_fallthru
          _
        // Predicated region
        $region41: #{tpu_custom_call.1} parent=11 // pred_check
          %p526 = pneg %p294
        $region42: #{tpu_custom_call.1} parent=11 // pred_check_branch
          %528 = sbr.rel (%p526) target = $region44
        $region43: #{tpu_custom_call.1} parent=11 // pred_region
          _
        $region44: #{tpu_custom_call.1} parent=11 // pred_fallthru
          _
        // Predicated region
        $region45: #{tpu_custom_call.1} parent=11 // pred_check
          %p529 = pneg %p315
        $region46: #{tpu_custom_call.1} parent=11 // pred_check_branch
          %531 = sbr.rel (%p529) target = $region48
        $region47: #{tpu_custom_call.1} parent=11 // pred_region
          _
        $region48: #{tpu_custom_call.1} parent=11 // pred_fallthru
          _
        // Predicated region
        $region49: #{tpu_custom_call.1} parent=11 // pred_check
          %p532 = pneg %p336
        $region50: #{tpu_custom_call.1} parent=11 // pred_check_branch
          %534 = sbr.rel (%p532) target = $region52
        $region51: #{tpu_custom_call.1} parent=11 // pred_region
          _
        $region52: #{tpu_custom_call.1} parent=11 // pred_fallthru
          _
        // Predicated region
        $region53: #{tpu_custom_call.1} parent=11 // pred_check
          %p535 = pneg %p357
        $region54: #{tpu_custom_call.1} parent=11 // pred_check_branch
          %537 = sbr.rel (%p535) target = $region56
        $region55: #{tpu_custom_call.1} parent=11 // pred_region
          %539 = vsyncadd [#allocation8], 0
          %s540 = sshll.u32 %s13, 4
          %s541 = int_to_ptr.hbm [resolvable:$true] %s540
          %s542 = sshll.u32 [#allocation9], 4
          %s543 = int_to_ptr.vmem [resolvable:$true] %s542
          %548 = dma.hbm_to_vmem [thread:$0]  %s541, 256, %s543, [#allocation8], 64, 64, 4
        $region56: #{tpu_custom_call.1} parent=11 // pred_fallthru
          _
        // Predicated region
        $region57: #{tpu_custom_call.1} parent=11 // pred_check
          %p549 = pneg %p378
        $region58: #{tpu_custom_call.1} parent=11 // pred_check_branch
          %551 = sbr.rel (%p549) target = $region60
        $region59: #{tpu_custom_call.1} parent=11 // pred_region
          _
        $region60: #{tpu_custom_call.1} parent=11 // pred_fallthru
          _
        // Predicated region
        $region61: #{tpu_custom_call.1} parent=11 // pred_check
          %p552 = pneg %p399
        $region62: #{tpu_custom_call.1} parent=11 // pred_check_branch
          %554 = sbr.rel (%p552) target = $region64
        $region63: #{tpu_custom_call.1} parent=11 // pred_region
          _
        $region64: #{tpu_custom_call.1} parent=11 // pred_fallthru
          _
        // Predicated region
        $region65: #{tpu_custom_call.1} parent=11 // pred_check
          %p555 = pneg %p420
        $region66: #{tpu_custom_call.1} parent=11 // pred_check_branch
          %557 = sbr.rel (%p555) target = $region68
        $region67: #{tpu_custom_call.1} parent=11 // pred_region
          _
        $region68: #{tpu_custom_call.1} parent=11 // pred_fallthru
          _
        // Predicated region
        $region69: #{tpu_custom_call.1} parent=11 // pred_check
          %p558 = pneg %p441
        $region70: #{tpu_custom_call.1} parent=11 // pred_check_branch
          %560 = sbr.rel (%p558) target = $region72
        $region71: #{tpu_custom_call.1} parent=11 // pred_region
          _
        $region72: #{tpu_custom_call.1} parent=11 // pred_fallthru
          _
        // Predicated region
        $region73: #{tpu_custom_call.1} parent=11 // pred_check
          %p561 = pneg %p462
        $region74: #{tpu_custom_call.1} parent=11 // pred_check_branch
          %563 = sbr.rel (%p561) target = $region76
        $region75: #{tpu_custom_call.1} parent=11 // pred_region
          _
        $region76: #{tpu_custom_call.1} parent=11 // pred_fallthru
          _
      $region12: #{tpu_custom_call.1} parent=5 // pred_fallthru
        _
      %p564 = scmp.lt.s32.totalorder %s34, 2
      // Predicated region
      $region77: #{tpu_custom_call.1} parent=5 // pred_check
        %p565 = pneg %p564
      $region78: #{tpu_custom_call.1} parent=5 // pred_check_branch
        %567 = sbr.rel (%p565) target = $region80
      $region79: #{tpu_custom_call.1} parent=5 // pred_region
        // Predicated region
        $region81: #{tpu_custom_call.1} parent=79 // pred_check
          %p568 = pneg %p66
        $region82: #{tpu_custom_call.1} parent=79 // pred_check_branch
          %570 = sbr.rel (%p568) target = $region84
        $region83: #{tpu_custom_call.1} parent=79 // pred_region
          %s571 = sand.u32 %s56, 1
          %s572 = scalar_lea.sflag [#allocation5], %s571
          %s573 = sand.u32 %s56, 1
          %s574 = smul.addr %s573, 4
          %s575 = scalar_lea.vmem [#allocation4], %s574
          %577 = vsyncadd %s572, 0
          %s578 = smul.addr %s41, 4
          %s579 = scalar_lea.hbm %s0, %s578
          %s581 = sshll.u32 %s579, 4
          %s582 = int_to_ptr.hbm [resolvable:$true] %s581
          %s583 = sshll.u32 %s575, 4
          %s584 = int_to_ptr.vmem [resolvable:$true] %s583
          %586 = dma.hbm_to_vmem [thread:$0]  %s582, 64, %s584, %s572
        $region84: #{tpu_custom_call.1} parent=79 // pred_fallthru
          _
        // Predicated region
        $region85: #{tpu_custom_call.1} parent=79 // pred_check
          %p587 = pneg %p94
        $region86: #{tpu_custom_call.1} parent=79 // pred_check_branch
          %589 = sbr.rel (%p587) target = $region88
        $region87: #{tpu_custom_call.1} parent=79 // pred_region
          %p590 = scmp.lt.s32.totalorder %s41, 1
          %s591 = scalar_select %p590, %s41, 1
          %p592 = scmp.lt.s32.totalorder %s42, 0
          %s593 = scalar_select %p592, %s42, 0
          %s594 = sadd.s32 %s593, %s591
          %s595 = smul.addr %s594, 8
          %s596 = scalar_lea.vmem %s1, %s595
        $region88: #{tpu_custom_call.1} parent=79 // pred_fallthru
          _
        // Predicated region
        $region89: #{tpu_custom_call.1} parent=79 // pred_check
          %p597 = pneg %p120
        $region90: #{tpu_custom_call.1} parent=79 // pred_check_branch
          %599 = sbr.rel (%p597) target = $region92
        $region91: #{tpu_custom_call.1} parent=79 // pred_region
          %s600 = sand.u32 %s34, 1
          %s601 = scalar_lea.sflag [#allocation8], %s600
          %s602 = sand.u32 %s110, 1
          %s603 = scalar_lea.vmem [#allocation7], %s602
          %605 = vsyncadd %s601, 0
          %s606 = scalar_lea.hbm %s2, %s41
          %s608 = sshll.u32 %s606, 4
          %s609 = int_to_ptr.hbm [resolvable:$true] %s608
          %s610 = sshll.u32 %s603, 4
          %s611 = int_to_ptr.vmem [resolvable:$true] %s610
          %613 = dma.hbm_to_vmem [thread:$0]  %s609, 16, %s611, %s601
        $region92: #{tpu_custom_call.1} parent=79 // pred_fallthru
          _
      $region80: #{tpu_custom_call.1} parent=5 // pred_fallthru
        _
      %p614 = scmp.le.s32.totalorder 1, %s34
      %p615 = scmp.lt.s32.totalorder %s34, 3
      %p616 = pnand %p614, %p615
      %p617 = pneg %p616
      // Predicated region
      $region93: #{tpu_custom_call.1} parent=5 // pred_check
        _
      $region94: #{tpu_custom_call.1} parent=5 // pred_check_branch
        %619 = sbr.rel (%p616) target = $region96
      $region95: #{tpu_custom_call.1} parent=5 // pred_region
        %s620 = ssub.s32 %s34, 1
        %s621 = sand.u32 %s59, 1
        %s622 = scalar_lea.sflag [#allocation5], %s621
        %s623 = sand.u32 %s59, 1
        %s624 = smul.addr %s623, 4
        %s625 = scalar_lea.vmem [#allocation4], %s624
        // Predicated region
        $region97: #{tpu_custom_call.1} parent=95 // pred_check
          %p626 = pneg %p72
        $region98: #{tpu_custom_call.1} parent=95 // pred_check_branch
          %628 = sbr.rel (%p626) target = $region100
        $region99: #{tpu_custom_call.1} parent=95 // pred_region
          %630 = dma.done %s622, 64
        $region100: #{tpu_custom_call.1} parent=95 // pred_fallthru
          _
        %s631 = sand.u32 %s39, 1
        %s632 = scalar_lea.sflag [#allocation8], %s631
        %s633 = sand.u32 %s113, 1
        %s634 = scalar_lea.vmem [#allocation7], %s633
        // Predicated region
        $region101: #{tpu_custom_call.1} parent=95 // pred_check
          %p635 = pneg %p126
        $region102: #{tpu_custom_call.1} parent=95 // pred_check_branch
          %637 = sbr.rel (%p635) target = $region104
        $region103: #{tpu_custom_call.1} parent=95 // pred_region
          %639 = dma.done %s632, 16
        $region104: #{tpu_custom_call.1} parent=95 // pred_fallthru
          _
        // Predicated region
        $region105: #{tpu_custom_call.1} parent=95 // pred_check
          %p640 = pneg %p357
        $region106: #{tpu_custom_call.1} parent=95 // pred_check_branch
          %642 = sbr.rel (%p640) target = $region108
        $region107: #{tpu_custom_call.1} parent=95 // pred_region
          %644 = dma.done [#allocation8], 256
        $region108: #{tpu_custom_call.1} parent=95 // pred_fallthru
          _
        %s645 = sand.u32 %s59, 1
        %s646 = scalar_lea.sflag [#allocation5], %s645
        %s647 = sand.u32 %s59, 1
        %s648 = smul.addr %s647, 4
        %s649 = scalar_lea.vmem [#allocation4], %s648
        %p650 = pneg %p72
        %p651 = pneg %p69
        %p652 = scmp.lt.s32.totalorder %s43, 1
        %s653 = scalar_select %p652, %s43, 1
        %p654 = scmp.lt.s32.totalorder %s44, 0
        %s655 = scalar_select %p654, %s44, 0
        %s656 = sadd.s32 %s655, %s653
        %s657 = smul.addr %s656, 8
        %s658 = scalar_lea.vmem %s1, %s657
        %p659 = pneg %p100
        %p660 = pneg %p97
        %s661 = sand.u32 %s39, 1
        %s662 = scalar_lea.sflag [#allocation8], %s661
        %s663 = sand.u32 %s113, 1
        %s664 = scalar_lea.vmem [#allocation7], %s663
        %p665 = pneg %p126
        %p666 = pneg %p123
        %p667 = pneg %p147
        %p668 = pneg %p144
        %p669 = pneg %p168
        %p670 = pneg %p165
        %p671 = pneg %p189
        %p672 = pneg %p186
        %p673 = pneg %p210
        %p674 = pneg %p207
        %p675 = pneg %p231
        %p676 = pneg %p228
        %p677 = pneg %p252
        %p678 = pneg %p249
        %p679 = pneg %p273
        %p680 = pneg %p270
        %p681 = pneg %p294
        %p682 = pneg %p291
        %p683 = pneg %p315
        %p684 = pneg %p312
        %p685 = pneg %p336
        %p686 = pneg %p333
        %p687 = pneg %p357
        %p688 = pneg %p354
        %p689 = pneg %p378
        %p690 = pneg %p375
        %p691 = pneg %p399
        %p692 = pneg %p396
        %p693 = pneg %p420
        %p694 = pneg %p417
        %p695 = pneg %p441
        %p696 = pneg %p438
        %p697 = pneg %p462
        %p698 = pneg %p459
        %p699 = pneg %p490
        %p700 = pneg %p487
        %s701 = sand.u32 %s477, 1
        %s702 = scalar_lea.sflag [#allocation6], %s701
        %s703 = sand.u32 %s477, 1
        %s704 = smul.addr %s703, 8
        %s705 = scalar_lea.vmem [#allocation10], %s704
        %p706 = scmp.lt.s32.totalorder %s43, 1
        %s707 = scalar_select %p706, %s43, 1
        %p708 = scmp.lt.s32.totalorder %s44, 0
        %s709 = scalar_select %p708, %s44, 0
        %s710 = sadd.s32 %s709, %s707
        %s711 = smul.addr %s710, 8
        %s712 = scalar_lea.vmem %s1, %s711
        %p714 = scmp.eq.s32.totalorder %s44, 0
        // Predicated region
        $region109: #{tpu_custom_call.1} parent=95 // pred_check
          %p715 = pneg %p714
        $region110: #{tpu_custom_call.1} parent=95 // pred_check_branch
          %717 = sbr.rel (%p715) target = $region112
        $region111: #{tpu_custom_call.1} parent=95 // pred_region
          %v718 = vld [vmem:[%s625] sm:$0xf]
          %v719 = vld [vmem:[%s5] sm:$0xf]
          %v720 = vld [vmem:[%s5 + $0x4] sm:$0xf]
          %v721 = vld [vmem:[%s5 + $0x8] sm:$0xf]
          %v722 = vld [vmem:[%s5 + $0xc] sm:$0xf]
          %v723 = vld [vmem:[%s6] sm:$0x1]
          %v725 = vperm.slane %v723, 0
          %v731 = vunpack.c.l.b16 %v719
          %v732 = vunpack.c.l.b16 %v720
          %v733 = vunpack.c.l.b16 %v721
          %v734 = vunpack.c.l.b16 %v722
          %v735 = vpack.c.b16 %v732, %v731
          %v736 = vpack.c.b16 %v734, %v733
          %vm739 = vcmask 261120
          %v741 = vsel %vm739, %v718, 0
          %743 = vmatpush.bf16.msra.mxu0 0
          %744 = vmatpush.bf16.msra.mxu0 0
          %745 = vmatpush.bf16.msra.mxu0 0
          %746 = vmatpush.bf16.msra.mxu0 0
          %747 = vmatpush.bf16.msra.mxu0 0
          %748 = vmatpush.bf16.msra.mxu0 0
          %749 = vmatpush.bf16.msra.mxu0 %v736
          %750 = vmatpush.bf16.msra.mxu0 %v735
          %751 = vmatmul.bf16.gmra.mxu0 %v741
          %v752 = vpop.f32.mrf.mxu0
          %v753 = vadd.f32 %v725, %v752
          %v754 = vpop.f32.mrf.mxu0
          %755 = vdwg.mxu0
          %v756 = vld [vmem:[%s7] sm:$0xf]
          %v757 = vld [vmem:[%s7 + $0x4] sm:$0xf]
          %v758 = vld [vmem:[%s7 + $0x8] sm:$0xf]
          %v759 = vld [vmem:[%s7 + $0xc] sm:$0xf]
          %v760 = vld [vmem:[%s8] sm:$0x1]
          %v762 = vperm.slane %v760, 0
          %v768 = vunpack.c.l.b16 %v756
          %v769 = vunpack.c.l.b16 %v757
          %v770 = vunpack.c.l.b16 %v758
          %v771 = vunpack.c.l.b16 %v759
          %v772 = vpack.c.b16 %v769, %v768
          %v773 = vpack.c.b16 %v771, %v770
          %776 = vmatpush.bf16.msra.mxu0 0
          %777 = vmatpush.bf16.msra.mxu0 0
          %778 = vmatpush.bf16.msra.mxu0 0
          %779 = vmatpush.bf16.msra.mxu0 0
          %780 = vmatpush.bf16.msra.mxu0 0
          %781 = vmatpush.bf16.msra.mxu0 0
          %782 = vmatpush.bf16.msra.mxu0 %v773
          %783 = vmatpush.bf16.msra.mxu0 %v772
          %784 = vmatmul.bf16.gmra.mxu0 %v741
          %v785 = vpop.f32.mrf.mxu0
          %v786 = vadd.f32 %v762, %v785
          %v787 = vpop.f32.mrf.mxu0
          %788 = vdwg.mxu0
          %v789 = vpack.c.bf16 %v753, %v753
          %vm790 = vcmask 257024
          %791 = vst.msk [vmem:[#allocation2] sm:$0xf] %vm790, %v789
          %v792 = vpack.c.bf16 %v786, %v786
          %793 = vst.msk [vmem:[#allocation3] sm:$0xf] %vm790, %v792
        $region112: #{tpu_custom_call.1} parent=95 // pred_fallthru
          _
        %v794 = vld [vmem:[%s712] sm:$0xff]
        %v795 = vld [vmem:[%s634] sm:$0x1]
        %v796 = vpack.c.bf16 %v794, %v794
        %v797 = vld [vmem:[%s3] sm:$0xf]
        %v798 = vld [vmem:[%s3 + $0x4] sm:$0xf]
        %v799 = vld [vmem:[%s3 + $0x8] sm:$0xf]
        %v800 = vld [vmem:[%s3 + $0xc] sm:$0xf]
        %v801 = vld [vmem:[%s4] sm:$0x1]
        %v803 = vperm.slane %v801, 0
        %v809 = vunpack.c.l.b16 %v797
        %v810 = vunpack.c.l.b16 %v798
        %v811 = vunpack.c.l.b16 %v799
        %v812 = vunpack.c.l.b16 %v800
        %v813 = vpack.c.b16 %v810, %v809
        %v814 = vpack.c.b16 %v812, %v811
        %vm817 = vcmask 261120
        %v819 = vsel %vm817, %v796, 0
        %821 = vmatpush.bf16.msra.mxu0 0
        %822 = vmatpush.bf16.msra.mxu0 0
        %823 = vmatpush.bf16.msra.mxu0 0
        %824 = vmatpush.bf16.msra.mxu0 0
        %825 = vmatpush.bf16.msra.mxu0 0
        %826 = vmatpush.bf16.msra.mxu0 0
        %827 = vmatpush.bf16.msra.mxu0 %v814
        %828 = vmatpush.bf16.msra.mxu0 %v813
        %829 = vmatmul.bf16.gmra.mxu0 %v819
        %v830 = vpop.f32.mrf.mxu0
        %v831 = vadd.f32 %v803, %v830
        %v832 = vpop.f32.mrf.mxu0
        %833 = vdwg.mxu0
        %v834 = vmul.f32 %v831, 0.17677669
        %v835 = vpack.c.bf16 %v834, %v834
        %v836 = vld [vmem:[#allocation2] sm:$0xf]
        %v838 = vsel %vm817, %v835, 0
        %v841 = vsel %vm817, %v836, 0
        %843 = vmatpush.bf16.xpose.msra.mxu0 0
        %844 = vmatpush.bf16.xpose.msra.mxu0 0
        %845 = vmatpush.bf16.xpose.msra.mxu0 0
        %846 = vmatpush.bf16.xpose.msra.mxu0 0
        %847 = vmatpush.bf16.xpose.msra.mxu0 0
        %848 = vmatpush.bf16.xpose.msra.mxu0 0
        %849 = vmatpush.bf16.xpose.msra.mxu0 0
        %850 = vmatpush.bf16.xpose.msra.mxu0 %v841
        %851 = vmatmul.bf16.gmra.mxu0 %v838
        %v852 = vpop.f32.mrf.mxu0
        %v853 = vadd.f32 0.0, %v852
        %v854 = vpop.f32.mrf.mxu0
        %855 = vdwg.mxu0
        %v857 = vperm.slane %v795, 0
        %v859 = vmul.f32 %v853, %v857
        %vm860 = vcmask 64512
        %v861 = vsel %vm860, %v859, -inf
        %862 = vmax.xlane.f32.xlu0 %v861
        %v863 = vpop.xlane.xlu0 %862
        %v864 = vsub.f32 %v859, %v863
        %v865 = vmul.f32 %v864, 1.442695
        %v866 = vpow.pop %v865
        %v867 = vsel %vm860, %v866, 0.0
        %868 = vadd.xlane.f32.xlu0 %v867
        %v869 = vpop.xlane.xlu0 %868
        %v870 = vrcp.pop %v869
        %v871 = vmul.f32 %v866, %v870
        %v872 = vpack.c.bf16 %v871, %v871
        %v873 = vld [vmem:[#allocation3] sm:$0xf]
        %v875 = vsel %vm860, %v872, 0
        %vm877 = vcmask 1043456
        %v879 = vsel %vm877, %v873, 0
        %881 = vmatpush.bf16.msra.mxu0 0
        %882 = vmatpush.bf16.msra.mxu0 0
        %883 = vmatpush.bf16.msra.mxu0 0
        %884 = vmatpush.bf16.msra.mxu0 0
        %885 = vmatpush.bf16.msra.mxu0 0
        %886 = vmatpush.bf16.msra.mxu0 0
        %887 = vmatpush.bf16.msra.mxu0 0
        %888 = vmatpush.bf16.msra.mxu0 %v879
        %889 = vmatmul.bf16.gmra.mxu0 %v875
        %v890 = vpop.f32.mrf.mxu0
        %v891 = vadd.f32 0.0, %v890
        %v892 = vpop.f32.mrf.mxu0
        %893 = vdwg.mxu0
        %v894 = vpack.c.bf16 %v891, %v891
        %v895 = vld [vmem:[%s9] sm:$0xf]
        %v896 = vld [vmem:[%s9 + $0x4] sm:$0xf]
        %v897 = vld [vmem:[%s9 + $0x8] sm:$0xf]
        %v898 = vld [vmem:[%s9 + $0xc] sm:$0xf]
        %v899 = vld [vmem:[%s10] sm:$0x1]
        %v901 = vperm.slane %v899, 0
        %v907 = vunpack.c.l.b16 %v895
        %v908 = vunpack.c.l.b16 %v896
        %v909 = vunpack.c.l.b16 %v897
        %v910 = vunpack.c.l.b16 %v898
        %v911 = vpack.c.b16 %v908, %v907
        %v912 = vpack.c.b16 %v910, %v909
        %v916 = vsel %vm817, %v894, 0
        %918 = vmatpush.bf16.msra.mxu0 0
        %919 = vmatpush.bf16.msra.mxu0 0
        %920 = vmatpush.bf16.msra.mxu0 0
        %921 = vmatpush.bf16.msra.mxu0 0
        %922 = vmatpush.bf16.msra.mxu0 0
        %923 = vmatpush.bf16.msra.mxu0 0
        %924 = vmatpush.bf16.msra.mxu0 %v912
        %925 = vmatpush.bf16.msra.mxu0 %v911
        %926 = vmatmul.bf16.gmra.mxu0 %v916
        %v927 = vpop.f32.mrf.mxu0
        %v928 = vadd.f32 %v901, %v927
        %v929 = vpop.f32.mrf.mxu0
        %930 = vdwg.mxu0
        %v931 = vadd.f32 %v928, %v794
        %v932 = vld [vmem:[%s11] sm:$0x1]
        %v933 = vld [vmem:[%s12] sm:$0x1]
        %v934 = vsel %vm817, %v931, 0.0
        %935 = vadd.xlane.f32.xlu0 %v934
        %v936 = vpop.xlane.xlu0 %935
        %v937 = vrcp.pop 32.0
        %v938 = vmul.f32 32.0, %v937
        %v939 = vsub.f32 1.0, %v938
        %v940 = vmul.f32 %v937, %v939
        %v941 = vadd.f32 %v937, %v940
        %vm942 = vweird.f32 %v937
        %v943 = vsel %vm942, %v937, %v941
        %v944 = vmul.f32 %v936, %v943
        %v945 = vsub.f32 %v931, %v944
        %v946 = vmul.f32 %v945, %v945
        %v947 = vsel %vm817, %v946, 0.0
        %948 = vadd.xlane.f32.xlu0 %v947
        %v949 = vpop.xlane.xlu0 %948
        %v950 = vmul.f32 %v949, %v943
        %v951 = vadd.f32 %v950, 1e-12
        %v952 = vrsqrt.pop %v951
        %v953 = vmul.f32 %v952, %v951
        %v954 = vmul.f32 %v953, %v952
        %v955 = vmul.f32 0.5, %v954
        %v956 = vsub.f32 1.5, %v955
        %v957 = vmul.f32 %v952, %v956
        %vm958 = vweird.f32 %v951
        %vm959 = vweird.f32 %v952
        %vm960 = vmor %vm958, %vm959
        %v961 = vsel %vm960, %v952, %v957
        %v962 = vmul.f32 %v945, %v961
        %v964 = vperm.slane %v932, 0
        %v966 = vmul.f32 %v962, %v964
        %v968 = vperm.slane %v933, 0
        %v970 = vadd.f32 %v966, %v968
        %v971 = vpack.c.bf16 %v970, %v970
        %v972 = vld [vmem:[#allocation9] sm:$0xf]
        %v973 = vld [vmem:[#allocation9 + $0x4] sm:$0xf]
        %v974 = vld [vmem:[#allocation9 + $0x8] sm:$0xf]
        %v975 = vld [vmem:[#allocation9 + $0xc] sm:$0xf]
        %v976 = vld [vmem:[%s14] sm:$0x1]
        %v978 = vperm.slane %v976, 0
        %v984 = vunpack.c.l.b16 %v972
        %v985 = vunpack.c.l.b16 %v973
        %v986 = vunpack.c.l.b16 %v974
        %v987 = vunpack.c.l.b16 %v975
        %v988 = vpack.c.b16 %v985, %v984
        %v989 = vpack.c.b16 %v987, %v986
        %v993 = vsel %vm817, %v971, 0
        %995 = vmatpush.bf16.msra.mxu0 0
        %996 = vmatpush.bf16.msra.mxu0 0
        %997 = vmatpush.bf16.msra.mxu0 0
        %998 = vmatpush.bf16.msra.mxu0 0
        %999 = vmatpush.bf16.msra.mxu0 0
        %1000 = vmatpush.bf16.msra.mxu0 0
        %1001 = vmatpush.bf16.msra.mxu0 %v989
        %1002 = vmatpush.bf16.msra.mxu0 %v988
        %1003 = vmatmul.bf16.gmra.mxu0 %v993
        %v1004 = vpop.f32.mrf.mxu0
        %v1005 = vadd.f32 %v978, %v1004
        %v1006 = vpop.f32.mrf.mxu0
        %1007 = vdwg.mxu0
        %v1008 = vmul.f32 %v1005, 0.5
        %v1009 = vmul.f32 %v1005, 0.70710677
        %v1010 = vmul.f32 %v1009, %v1009
        %v1011 = vmin.f32 16.0, %v1010
        %v1012 = vmul.f32 %v1011, 2.1237322e-06
        %v1013 = vadd.f32 %v1012, 0.00028619796
        %v1014 = vmul.f32 %v1011, %v1013
        %v1015 = vadd.f32 %v1014, 0.0036580483
        %v1016 = vmul.f32 %v1011, %v1015
        %v1017 = vadd.f32 %v1016, 0.05243302
        %v1018 = vmul.f32 %v1011, %v1017
        %v1019 = vadd.f32 %v1018, 0.18741608
        %v1020 = vmul.f32 %v1011, %v1019
        %v1021 = vadd.f32 %v1020, 1.1283791
        %v1022 = vmul.f32 %v1009, %v1021
        %v1023 = vmul.f32 %v1011, 3.8918573e-05
        %v1024 = vadd.f32 %v1023, 0.001143296
        %v1025 = vmul.f32 %v1011, %v1024
        %v1026 = vadd.f32 %v1025, 0.014752088
        %v1027 = vmul.f32 %v1011, %v1026
        %v1028 = vadd.f32 %v1027, 0.112945676
        %v1029 = vmul.f32 %v1011, %v1028
        %v1030 = vadd.f32 %v1029, 0.4994258
        %v1031 = vmul.f32 %v1011, %v1030
        %v1032 = vadd.f32 %v1031, 1.0
        %v1033 = vrcp.pop %v1032
        %v1034 = vmul.f32 %v1032, %v1033
        %v1035 = vsub.f32 1.0, %v1034
        %v1036 = vmul.f32 %v1033, %v1035
        %v1037 = vadd.f32 %v1033, %v1036
        %vm1038 = vweird.f32 %v1032
        %vm1039 = vweird.f32 %v1033
        %vm1040 = vmor %vm1038, %vm1039
        %v1041 = vsel %vm1040, %v1033, %v1037
        %v1042 = vand.u32 2147483647, %v1032
        %vm1043 = vcmp.eq.f32.partialorder %v1042, 8.507059e+37
        %v1044 = vand.u32 %v1032, 2147483648
        %v1045 = vor.u32 1.1754944e-38, %v1044
        %v1046 = vsel %vm1043, %v1045, %v1041
        %v1047 = vmul.f32 %v1022, %v1046
        %v1048 = vmin.f32 %v1047, 1.0
        %v1049 = vmax.f32 %v1048, -1.0
        %v1050 = vadd.f32 %v1049, 1.0
        %v1051 = vmul.f32 %v1008, %v1050
        %v1052 = vpack.c.bf16 %v1051, %v1051
        %v1053 = vld [vmem:[%s15] sm:$0xf]
        %v1054 = vld [vmem:[%s15 + $0x4] sm:$0xf]
        %v1055 = vld [vmem:[%s15 + $0x8] sm:$0xf]
        %v1056 = vld [vmem:[%s15 + $0xc] sm:$0xf]
        %v1057 = vld [vmem:[%s15 + $0x10] sm:$0xf]
        %v1058 = vld [vmem:[%s15 + $0x14] sm:$0xf]
        %v1059 = vld [vmem:[%s15 + $0x18] sm:$0xf]
        %v1060 = vld [vmem:[%s15 + $0x1c] sm:$0xf]
        %v1061 = vld [vmem:[%s15 + $0x20] sm:$0xf]
        %v1062 = vld [vmem:[%s15 + $0x24] sm:$0xf]
        %v1063 = vld [vmem:[%s15 + $0x28] sm:$0xf]
        %v1064 = vld [vmem:[%s15 + $0x2c] sm:$0xf]
        %v1065 = vld [vmem:[%s15 + $0x30] sm:$0xf]
        %v1066 = vld [vmem:[%s15 + $0x34] sm:$0xf]
        %v1067 = vld [vmem:[%s15 + $0x38] sm:$0xf]
        %v1068 = vld [vmem:[%s15 + $0x3c] sm:$0xf]
        %v1069 = vld [vmem:[%s16] sm:$0x1]
        %v1071 = vperm.slane %v1069, 0
        %v1089 = vunpack.c.l.b16 %v1053
        %v1090 = vunpack.c.l.b16 %v1054
        %v1091 = vunpack.c.l.b16 %v1055
        %v1092 = vunpack.c.l.b16 %v1056
        %v1093 = vunpack.c.l.b16 %v1057
        %v1094 = vunpack.c.l.b16 %v1058
        %v1095 = vunpack.c.l.b16 %v1059
        %v1096 = vunpack.c.l.b16 %v1060
        %v1097 = vunpack.c.l.b16 %v1061
        %v1098 = vunpack.c.l.b16 %v1062
        %v1099 = vunpack.c.l.b16 %v1063
        %v1100 = vunpack.c.l.b16 %v1064
        %v1101 = vunpack.c.l.b16 %v1065
        %v1102 = vunpack.c.l.b16 %v1066
        %v1103 = vunpack.c.l.b16 %v1067
        %v1104 = vunpack.c.l.b16 %v1068
        %v1105 = vpack.c.b16 %v1090, %v1089
        %v1106 = vpack.c.b16 %v1092, %v1091
        %v1107 = vpack.c.b16 %v1094, %v1093
        %v1108 = vpack.c.b16 %v1096, %v1095
        %v1109 = vpack.c.b16 %v1098, %v1097
        %v1110 = vpack.c.b16 %v1100, %v1099
        %v1111 = vpack.c.b16 %v1102, %v1101
        %v1112 = vpack.c.b16 %v1104, %v1103
        %1121 = vmatpush.bf16.msra.mxu0 %v1112
        %1122 = vmatpush.bf16.msra.mxu0 %v1111
        %1123 = vmatpush.bf16.msra.mxu0 %v1110
        %1124 = vmatpush.bf16.msra.mxu0 %v1109
        %1125 = vmatpush.bf16.msra.mxu0 %v1108
        %1126 = vmatpush.bf16.msra.mxu0 %v1107
        %1127 = vmatpush.bf16.msra.mxu0 %v1106
        %1128 = vmatpush.bf16.msra.mxu0 %v1105
        %1129 = vmatmul.bf16.gmra.mxu0 %v1052
        %v1130 = vpop.f32.mrf.mxu0
        %v1131 = vadd.f32 %v1071, %v1130
        %v1132 = vpop.f32.mrf.mxu0
        %1133 = vdwg.mxu0
        %v1134 = vadd.f32 %v1131, %v970
        %v1135 = vld [vmem:[%s17] sm:$0x1]
        %v1136 = vld [vmem:[%s18] sm:$0x1]
        %v1137 = vsel %vm817, %v1134, 0.0
        %1138 = vadd.xlane.f32.xlu0 %v1137
        %v1139 = vpop.xlane.xlu0 %1138
        %v1140 = vmul.f32 %v1139, %v943
        %v1141 = vsub.f32 %v1134, %v1140
        %v1142 = vmul.f32 %v1141, %v1141
        %v1143 = vsel %vm817, %v1142, 0.0
        %1144 = vadd.xlane.f32.xlu0 %v1143
        %v1145 = vpop.xlane.xlu0 %1144
        %v1146 = vmul.f32 %v1145, %v943
        %v1147 = vadd.f32 %v1146, 1e-12
        %v1148 = vrsqrt.pop %v1147
        %v1149 = vmul.f32 %v1148, %v1147
        %v1150 = vmul.f32 %v1149, %v1148
        %v1151 = vmul.f32 0.5, %v1150
        %v1152 = vsub.f32 1.5, %v1151
        %v1153 = vmul.f32 %v1148, %v1152
        %vm1154 = vweird.f32 %v1147
        %vm1155 = vweird.f32 %v1148
        %vm1156 = vmor %vm1154, %vm1155
        %v1157 = vsel %vm1156, %v1148, %v1153
        %v1158 = vmul.f32 %v1141, %v1157
        %v1160 = vperm.slane %v1135, 0
        %v1162 = vmul.f32 %v1158, %v1160
        %v1164 = vperm.slane %v1136, 0
        %v1166 = vadd.f32 %v1162, %v1164
        %1167 = vst.msk [vmem:[%s705] sm:$0xff] %vm817, %v1166
        %s1168 = sand.u32 %s477, 1
        %s1169 = scalar_lea.sflag [#allocation6], %s1168
        %s1170 = sand.u32 %s477, 1
        %s1171 = smul.addr %s1170, 8
        %s1172 = scalar_lea.vmem [#allocation10], %s1171
        // Predicated region
        $region113: #{tpu_custom_call.1} parent=95 // pred_check
          %p1173 = pneg %p487
        $region114: #{tpu_custom_call.1} parent=95 // pred_check_branch
          %1175 = sbr.rel (%p1173) target = $region116
        $region115: #{tpu_custom_call.1} parent=95 // pred_region
          %1177 = vsyncadd %s1169, 0
          %s1178 = sadd.s32 %s44, %s43
          %s1179 = smul.addr %s1178, 8
          %s1180 = scalar_lea.hbm %s19, %s1179
          %s1182 = sshll.u32 %s1172, 4
          %s1183 = int_to_ptr.vmem [resolvable:$true] %s1182
          %s1184 = sshll.u32 %s1180, 4
          %s1185 = int_to_ptr.hbm [resolvable:$true] %s1184
          %1187 = dma.vmem_to_hbm [thread:$0]  %s1183, 128, %s1185, %s1169
        $region116: #{tpu_custom_call.1} parent=95 // pred_fallthru
          _
      $region96: #{tpu_custom_call.1} parent=5 // pred_fallthru
        _
      %p1188 = scmp.le.s32.totalorder 2, %s34
      // Predicated region
      $region117: #{tpu_custom_call.1} parent=5 // pred_check
        %p1189 = pneg %p1188
      $region118: #{tpu_custom_call.1} parent=5 // pred_check_branch
        %1191 = sbr.rel (%p1189) target = $region120
      $region119: #{tpu_custom_call.1} parent=5 // pred_region
        %s1192 = ssub.s32 %s34, 2
        // Predicated region
        $region121: #{tpu_custom_call.1} parent=119 // pred_check
          %p1193 = pneg %p493
        $region122: #{tpu_custom_call.1} parent=119 // pred_check_branch
          %1195 = sbr.rel (%p1193) target = $region124
        $region123: #{tpu_custom_call.1} parent=119 // pred_region
          %s1196 = sand.u32 %s478, 1
          %s1197 = scalar_lea.sflag [#allocation6], %s1196
          %s1198 = sand.u32 %s478, 1
          %s1199 = smul.addr %s1198, 8
          %s1200 = scalar_lea.vmem [#allocation10], %s1199
          %1202 = dma.done %s1197, 128
        $region124: #{tpu_custom_call.1} parent=119 // pred_fallthru
          _
      $region120: #{tpu_custom_call.1} parent=5 // pred_fallthru
        _
    $region6: #{tpu_custom_call.1} parent=1 // loop_footer
      %s38 = sadd.s32 1, %s34
    $region7: #{tpu_custom_call.1} parent=1 // loop_footer_branch
      %33 = sbr.rel target = $region3
    $region8: #{tpu_custom_call.1} parent=1 // loop_exit
      _
    %1203 = vsyncpa [#allocation5], 1
    %s1204 = scalar_lea.sflag [#allocation5], 1
    %1205 = vsyncpa %s1204, 1
    %1206 = vsyncpa [#allocation8], 1
    %s1207 = scalar_lea.sflag [#allocation8], 1
    %1208 = vsyncpa %s1207, 1
    %1209 = vsyncpa [#allocation6], 1
    %s1210 = scalar_lea.sflag [#allocation6], 1
    %1211 = vsyncpa %s1210, 1

</llo_original>
